<compile_context>
chip_gen: v5e
topology: v5e:2x2
jax: 0.10.0
libtpu: 0.0.40
codegen_flags: <defaults>
</compile_context>

<pallas_src>
import jax
import jax.numpy as jnp
from jax.experimental import pallas as pl
from jax.experimental.pallas import tpu as pltpu

HIDDEN = 512
LANE = 128


def sampler_kernel(x_ref, scale_ref,
                   w1_ref, b1_ref, w2_ref, b2_ref, w3_ref, b3_ref,
                   w4_ref, b4_ref, w5_ref, b5_ref, out_ref):
    # ---- 5-layer MLP: bf16 MXU operands, f32 accumulation, f32 elementwise ----
    x = x_ref[...]                                     # already bf16
    h = jnp.dot(x, w1_ref[...], preferred_element_type=jnp.float32) + b1_ref[...]
    h = jnp.maximum(h, 0.0)
    h = jnp.maximum(
        jnp.dot(h.astype(jnp.bfloat16), w2_ref[...],
                preferred_element_type=jnp.float32) + b2_ref[...], 0.0)
    h = jnp.maximum(
        jnp.dot(h.astype(jnp.bfloat16), w3_ref[...],
                preferred_element_type=jnp.float32) + b3_ref[...], 0.0)
    h = jnp.maximum(
        jnp.dot(h.astype(jnp.bfloat16), w4_ref[...],
                preferred_element_type=jnp.float32) + b4_ref[...], 0.0)
    o = jnp.dot(h.astype(jnp.bfloat16), w5_ref[...],
                preferred_element_type=jnp.float32) + b5_ref[...]

    # ---- softplus (beta=1, threshold=20, matches F.softplus). Padded lanes
    # carry a -1e30 bias so exp underflows to 0 and softplus is exactly 0. ----
    o = jnp.where(o > 20.0, o, jnp.log1p(jnp.exp(jnp.minimum(o, 20.0))))

    # ---- per-row max normalization (real lanes' softplus > 0, padded lanes == 0,
    # so the max is always taken from a real lane) ----
    row_max = jnp.max(o, axis=-1, keepdims=True)
    o = o * pl.reciprocal(row_max, approx=True)

    # ---- line-constraint scaling (scale = 1 - vertical/horizontal mask;
    # padded lanes have scale == 0) ----
    out_ref[...] = (o * scale_ref[...]).astype(out_ref.dtype)


def init_params(key, in_chans, out_chans):
    """Deterministic init matching the nn.Linear shapes of the module."""
    flatten_size = in_chans * in_chans * 5
    dims = [flatten_size, HIDDEN, HIDDEN, HIDDEN, HIDDEN, out_chans]
    params = []
    for i in range(5):
        key, kw, kb = jax.random.split(key, 3)
        bound = 1.0 / jnp.sqrt(jnp.float32(dims[i]))
        w = jax.random.uniform(kw, (dims[i], dims[i + 1]), jnp.float32, -bound, bound)
        b = jax.random.uniform(kb, (1, dims[i + 1]), jnp.float32, -bound, bound)
        params.append((w, b))
    return params


def _round_up(x, m):
    return ((x + m - 1) // m) * m


def kspace_line_constrained_sampler(kspace, mask, params):
    """Forward pass: returns (N, 1, 1, out_chans) like the PyTorch module."""
    N, _, H, W = kspace.shape
    out_chans = params[-1][0].shape[1]
    flatten_size = params[0][0].shape[0]
    out_p = _round_up(out_chans, LANE)          # lane-dense output width

    # feat_map = cat([kspace, mask], dim=1); flatten(start_dim=1)   (cheap glue)
    # Cast to bf16 here: the MXU operands are bf16 anyway, and this halves the
    # activation DMA into the kernel.
    feat = jnp.concatenate([kspace, mask], axis=1)
    x = feat.reshape(N, flatten_size).astype(jnp.bfloat16)

    # Line-constraint masks computed here (tiny (N,W)/(N,H) reductions) and
    # folded into one scale vector so the kernel epilogue is a single multiply.
    m = mask.reshape(N, H, W).astype(jnp.float32)
    vmask = (jnp.sum(m, axis=1) >= H - 0.5).astype(jnp.float32)        # (N, W)
    if out_chans == W:
        scale = 1.0 - vmask
    else:
        hmask = (jnp.sum(m, axis=2) >= W - 0.5).astype(jnp.float32)    # (N, H)
        scale = jnp.concatenate([1.0 - vmask, 1.0 - hmask], axis=1)    # (N, W+H)
    scale = jnp.pad(scale, ((0, 0), (0, out_p - out_chans)))           # (N, out_p)

    # bf16 weights halve the weight DMA; biases stay f32 (negligible bytes).
    # Last layer is padded up to out_p lanes (zeros in W, -1e30 in b).
    flat_args = [x, scale]
    for li, (w, b) in enumerate(params):
        if li == len(params) - 1 and out_p != out_chans:
            w = jnp.pad(w, ((0, 0), (0, out_p - out_chans)))
            b = jnp.pad(b, ((0, 0), (0, out_p - out_chans)), constant_values=-1e30)
        flat_args += [w.astype(jnp.bfloat16), b.astype(jnp.float32)]

    # Batch tile: multiple of 16 sublanes (bf16 packing), capped at 256.
    TM = min(256, _round_up(N, 16))
    grid = (pl.cdiv(N, TM),)

    row_specs = [
        pl.BlockSpec((TM, flatten_size), lambda i: (i, 0)),   # x
        pl.BlockSpec((TM, out_p), lambda i: (i, 0)),          # scale
    ]
    weight_specs = [
        pl.BlockSpec(tuple(a.shape), lambda i: (0, 0)) for a in flat_args[2:]
    ]

    cost = pl.CostEstimate(
        flops=int(2 * N * (flatten_size * HIDDEN + 3 * HIDDEN * HIDDEN
                           + HIDDEN * out_p)),
        transcendentals=int(N * out_p),
        bytes_accessed=int(sum(a.size * a.dtype.itemsize for a in flat_args)
                           + N * out_p * 4),
    )

    out = pl.pallas_call(
        sampler_kernel,
        out_shape=jax.ShapeDtypeStruct((N, out_p), jnp.float32),
        grid=grid,
        in_specs=row_specs + weight_specs,
        out_specs=pl.BlockSpec((TM, out_p), lambda i: (i, 0)),
        compiler_params=pltpu.CompilerParams(
            dimension_semantics=("parallel",)),
        cost_estimate=cost,
    )(*flat_args)
    return out[:, :out_chans].reshape(N, 1, 1, out_chans)


def _reference(kspace, mask, params):
    """Pure-JAX reference with the same bf16 operand rounding as the kernel."""
    N, _, H, W = kspace.shape
    out_chans = params[-1][0].shape[1]
    feat = jnp.concatenate([kspace, mask], axis=1).astype(jnp.float32)
    h = feat.reshape(N, -1)
    for i, (w, b) in enumerate(params):
        hb = h.astype(jnp.bfloat16).astype(jnp.float32)
        wb = w.astype(jnp.bfloat16).astype(jnp.float32)
        h = hb @ wb + b
        if i < 4:
            h = jnp.maximum(h, 0.0)
    o = jnp.where(h > 20.0, h, jnp.log1p(jnp.exp(jnp.minimum(h, 20.0))))
    o = o / jnp.max(o, axis=-1, keepdims=True)
    m = mask.reshape(N, H, W).astype(jnp.float32)
    vmask = (jnp.sum(m, axis=1) >= H - 0.5).astype(jnp.float32)
    if out_chans == W:
        o = o * (1.0 - vmask)
    else:
        hmask = (jnp.sum(m, axis=2) >= W - 0.5).astype(jnp.float32)
        length = out_chans // 2
        o = jnp.concatenate([o[:, :length] * (1.0 - vmask),
                             o[:, length:] * (1.0 - hmask)], axis=1)
    return o.reshape(N, 1, 1, -1)


if __name__ == "__main__":
    # Small shapes consistent with the module: in_chans == H == W == 16,
    # kspace has 4 channels + 1 mask channel -> flatten_size = 16*16*5 = 1280.
    N, H, W = 2, 16, 16
    in_chans = H

    key = jax.random.PRNGKey(0)
    k_ks, k_mask, k_p1, k_p2 = jax.random.split(key, 4)

    kspace = jax.random.normal(k_ks, (N, 4, H, W), jnp.float32)
    # Binary sampling mask; force a couple of fully-sampled columns so the
    # vertical-line constraint actually zeroes some outputs.
    mask = jax.random.bernoulli(k_mask, p=0.3, shape=(N, 1, H, W)).astype(jnp.float32)
    mask = mask.at[:, :, :, 0].set(1.0)
    mask = mask.at[:, :, :, 5].set(1.0)

    # Branch 1: out_chans == W (vertical-line constraint only).
    params_v = init_params(k_p1, in_chans, W)
    out_v = kspace_line_constrained_sampler(kspace, mask, params_v)
    jax.block_until_ready(out_v)
    assert out_v.shape == (N, 1, 1, W)
    ref_v = _reference(kspace, mask, params_v)
    assert jnp.allclose(out_v, ref_v, rtol=2e-2, atol=2e-2), "vertical branch mismatch"

    # Branch 2: out_chans == W + H (vertical + horizontal line constraints).
    params_vh = init_params(k_p2, in_chans, W + H)
    out_vh = kspace_line_constrained_sampler(kspace, mask, params_vh)
    jax.block_until_ready(out_vh)
    assert out_vh.shape == (N, 1, 1, W + H)
    ref_vh = _reference(kspace, mask, params_vh)
    assert jnp.allclose(out_vh, ref_vh, rtol=2e-2, atol=2e-2), "v+h branch mismatch"

    # TODO(synk): fixed_input / with_uncertainty paths are not exercised (defaults False/None).
    print("KERNEL_OK")
</pallas_src>

<mosaic_0001>
module attributes {stable_mosaic.version = 11 : i64} {
  func.func @sampler_kernel(%arg0: i32, %arg1: memref<16x1280xbf16, #tpu.memory_space<vmem>>, %arg2: memref<16x128xf32, #tpu.memory_space<vmem>>, %arg3: memref<1280x512xbf16, #tpu.memory_space<vmem>>, %arg4: memref<1x512xf32, #tpu.memory_space<vmem>>, %arg5: memref<512x512xbf16, #tpu.memory_space<vmem>>, %arg6: memref<1x512xf32, #tpu.memory_space<vmem>>, %arg7: memref<512x512xbf16, #tpu.memory_space<vmem>>, %arg8: memref<1x512xf32, #tpu.memory_space<vmem>>, %arg9: memref<512x512xbf16, #tpu.memory_space<vmem>>, %arg10: memref<1x512xf32, #tpu.memory_space<vmem>>, %arg11: memref<512x128xbf16, #tpu.memory_space<vmem>>, %arg12: memref<1x128xf32, #tpu.memory_space<vmem>>, %arg13: memref<16x128xf32, #tpu.memory_space<vmem>>) attributes {dimension_semantics = [#tpu.dimension_semantics<parallel>], iteration_bounds = array<i64: 1>, scalar_prefetch = 0 : i64, scratch_operands = 0 : i64, tpu.core_type = #tpu.core_type<tc>, window_params = [{transform_indices = @transform_0, window_bounds = array<i64: 16, 1280>}, {transform_indices = @transform_1, window_bounds = array<i64: 16, 128>}, {pipeline_mode = #tpu.pipeline_mode<synchronous>, transform_indices = @transform_2, window_bounds = array<i64: 1280, 512>}, {pipeline_mode = #tpu.pipeline_mode<synchronous>, transform_indices = @transform_3, window_bounds = array<i64: 1, 512>}, {pipeline_mode = #tpu.pipeline_mode<synchronous>, transform_indices = @transform_4, window_bounds = array<i64: 512, 512>}, {pipeline_mode = #tpu.pipeline_mode<synchronous>, transform_indices = @transform_5, window_bounds = array<i64: 1, 512>}, {pipeline_mode = #tpu.pipeline_mode<synchronous>, transform_indices = @transform_6, window_bounds = array<i64: 512, 512>}, {pipeline_mode = #tpu.pipeline_mode<synchronous>, transform_indices = @transform_7, window_bounds = array<i64: 1, 512>}, {pipeline_mode = #tpu.pipeline_mode<synchronous>, transform_indices = @transform_8, window_bounds = array<i64: 512, 512>}, {pipeline_mode = #tpu.pipeline_mode<synchronous>, transform_indices = @transform_9, window_bounds = array<i64: 1, 512>}, {pipeline_mode = #tpu.pipeline_mode<synchronous>, transform_indices = @transform_10, window_bounds = array<i64: 512, 128>}, {pipeline_mode = #tpu.pipeline_mode<synchronous>, transform_indices = @transform_11, window_bounds = array<i64: 1, 128>}, {transform_indices = @transform_12, window_bounds = array<i64: 16, 128>}]} {
    %c0 = arith.constant 0 : index
    %c0_0 = arith.constant 0 : index
    %0 = vector.load %arg1[%c0, %c0_0] : memref<16x1280xbf16, #tpu.memory_space<vmem>>, vector<16x1280xbf16>
    %c0_1 = arith.constant 0 : index
    %c0_2 = arith.constant 0 : index
    %1 = vector.load %arg3[%c0_1, %c0_2] : memref<1280x512xbf16, #tpu.memory_space<vmem>>, vector<1280x512xbf16>
    %cst = arith.constant dense<0.000000e+00> : vector<16x512xf32>
    %2 = tpu.matmul %0, %1, %cst {dimension_numbers = #tpu.dot_dimension_numbers<[1], [0], [0], [1], [0, 0, 1, 1], [], []>} : vector<16x1280xbf16>, vector<1280x512xbf16>, vector<16x512xf32> -> vector<16x512xf32>
    %c0_3 = arith.constant 0 : index
    %c0_4 = arith.constant 0 : index
    %3 = vector.load %arg4[%c0_3, %c0_4] : memref<1x512xf32, #tpu.memory_space<vmem>>, vector<1x512xf32>
    %4 = vector.broadcast %3 : vector<1x512xf32> to vector<16x512xf32>
    %5 = arith.addf %2, %4 : vector<16x512xf32>
    %cst_5 = arith.constant 0.000000e+00 : f32
    %6 = vector.broadcast %cst_5 : f32 to vector<16x512xf32>
    %7 = arith.maximumf %5, %6 : vector<16x512xf32>
    %8 = arith.truncf %7 : vector<16x512xf32> to vector<16x512xbf16>
    %c0_6 = arith.constant 0 : index
    %c0_7 = arith.constant 0 : index
    %9 = vector.load %arg5[%c0_6, %c0_7] : memref<512x512xbf16, #tpu.memory_space<vmem>>, vector<512x512xbf16>
    %cst_8 = arith.constant dense<0.000000e+00> : vector<16x512xf32>
    %10 = tpu.matmul %8, %9, %cst_8 {dimension_numbers = #tpu.dot_dimension_numbers<[1], [0], [0], [1], [0, 0, 1, 1], [], []>} : vector<16x512xbf16>, vector<512x512xbf16>, vector<16x512xf32> -> vector<16x512xf32>
    %c0_9 = arith.constant 0 : index
    %c0_10 = arith.constant 0 : index
    %11 = vector.load %arg6[%c0_9, %c0_10] : memref<1x512xf32, #tpu.memory_space<vmem>>, vector<1x512xf32>
    %12 = vector.broadcast %11 : vector<1x512xf32> to vector<16x512xf32>
    %13 = arith.addf %10, %12 : vector<16x512xf32>
    %cst_11 = arith.constant 0.000000e+00 : f32
    %14 = vector.broadcast %cst_11 : f32 to vector<16x512xf32>
    %15 = arith.maximumf %13, %14 : vector<16x512xf32>
    %16 = arith.truncf %15 : vector<16x512xf32> to vector<16x512xbf16>
    %c0_12 = arith.constant 0 : index
    %c0_13 = arith.constant 0 : index
    %17 = vector.load %arg7[%c0_12, %c0_13] : memref<512x512xbf16, #tpu.memory_space<vmem>>, vector<512x512xbf16>
    %cst_14 = arith.constant dense<0.000000e+00> : vector<16x512xf32>
    %18 = tpu.matmul %16, %17, %cst_14 {dimension_numbers = #tpu.dot_dimension_numbers<[1], [0], [0], [1], [0, 0, 1, 1], [], []>} : vector<16x512xbf16>, vector<512x512xbf16>, vector<16x512xf32> -> vector<16x512xf32>
    %c0_15 = arith.constant 0 : index
    %c0_16 = arith.constant 0 : index
    %19 = vector.load %arg8[%c0_15, %c0_16] : memref<1x512xf32, #tpu.memory_space<vmem>>, vector<1x512xf32>
    %20 = vector.broadcast %19 : vector<1x512xf32> to vector<16x512xf32>
    %21 = arith.addf %18, %20 : vector<16x512xf32>
    %cst_17 = arith.constant 0.000000e+00 : f32
    %22 = vector.broadcast %cst_17 : f32 to vector<16x512xf32>
    %23 = arith.maximumf %21, %22 : vector<16x512xf32>
    %24 = arith.truncf %23 : vector<16x512xf32> to vector<16x512xbf16>
    %c0_18 = arith.constant 0 : index
    %c0_19 = arith.constant 0 : index
    %25 = vector.load %arg9[%c0_18, %c0_19] : memref<512x512xbf16, #tpu.memory_space<vmem>>, vector<512x512xbf16>
    %cst_20 = arith.constant dense<0.000000e+00> : vector<16x512xf32>
    %26 = tpu.matmul %24, %25, %cst_20 {dimension_numbers = #tpu.dot_dimension_numbers<[1], [0], [0], [1], [0, 0, 1, 1], [], []>} : vector<16x512xbf16>, vector<512x512xbf16>, vector<16x512xf32> -> vector<16x512xf32>
    %c0_21 = arith.constant 0 : index
    %c0_22 = arith.constant 0 : index
    %27 = vector.load %arg10[%c0_21, %c0_22] : memref<1x512xf32, #tpu.memory_space<vmem>>, vector<1x512xf32>
    %28 = vector.broadcast %27 : vector<1x512xf32> to vector<16x512xf32>
    %29 = arith.addf %26, %28 : vector<16x512xf32>
    %cst_23 = arith.constant 0.000000e+00 : f32
    %30 = vector.broadcast %cst_23 : f32 to vector<16x512xf32>
    %31 = arith.maximumf %29, %30 : vector<16x512xf32>
    %32 = arith.truncf %31 : vector<16x512xf32> to vector<16x512xbf16>
    %c0_24 = arith.constant 0 : index
    %c0_25 = arith.constant 0 : index
    %33 = vector.load %arg11[%c0_24, %c0_25] : memref<512x128xbf16, #tpu.memory_space<vmem>>, vector<512x128xbf16>
    %cst_26 = arith.constant dense<0.000000e+00> : vector<16x128xf32>
    %34 = tpu.matmul %32, %33, %cst_26 {dimension_numbers = #tpu.dot_dimension_numbers<[1], [0], [0], [1], [0, 0, 1, 1], [], []>} : vector<16x512xbf16>, vector<512x128xbf16>, vector<16x128xf32> -> vector<16x128xf32>
    %c0_27 = arith.constant 0 : index
    %c0_28 = arith.constant 0 : index
    %35 = vector.load %arg12[%c0_27, %c0_28] : memref<1x128xf32, #tpu.memory_space<vmem>>, vector<1x128xf32>
    %36 = vector.broadcast %35 : vector<1x128xf32> to vector<16x128xf32>
    %37 = arith.addf %34, %36 : vector<16x128xf32>
    %cst_29 = arith.constant 2.000000e+01 : f32
    %38 = vector.broadcast %cst_29 : f32 to vector<16x128xf32>
    %39 = arith.cmpf ogt, %37, %38 : vector<16x128xf32>
    %cst_30 = arith.constant 2.000000e+01 : f32
    %40 = vector.broadcast %cst_30 : f32 to vector<16x128xf32>
    %41 = arith.minimumf %37, %40 : vector<16x128xf32>
    %42 = math.exp %41 : vector<16x128xf32>
    %43 = math.log1p %42 : vector<16x128xf32>
    %44 = arith.select %39, %37, %43 : vector<16x128xi1>, vector<16x128xf32>
    %cst_31 = arith.constant dense<0xFF800000> : vector<16xf32>
    %45 = vector.multi_reduction <maximumf>, %44, %cst_31 [1] : vector<16x128xf32> to vector<16xf32>
    %46 = vector.shape_cast %45 : vector<16xf32> to vector<16x1xf32>
    %47 = tpu.reciprocal %46 {approx = true} : vector<16x1xf32> -> vector<16x1xf32>
    %48 = vector.broadcast %47 : vector<16x1xf32> to vector<16x128xf32>
    %49 = arith.mulf %44, %48 : vector<16x128xf32>
    %c0_32 = arith.constant 0 : index
    %c0_33 = arith.constant 0 : index
    %50 = vector.load %arg2[%c0_32, %c0_33] : memref<16x128xf32, #tpu.memory_space<vmem>>, vector<16x128xf32>
    %51 = arith.mulf %49, %50 : vector<16x128xf32>
    %c0_34 = arith.constant 0 : index
    %c0_35 = arith.constant 0 : index
    %52 = vector.load %arg13[%c0_34, %c0_35] : memref<16x128xf32, #tpu.memory_space<vmem>>, vector<16x128xf32>
    tpu.vector_store %arg13[%c0_34, %c0_35], %51 {strides = array<i32>} : memref<16x128xf32, #tpu.memory_space<vmem>>, vector<16x128xf32>,
    return
  }
  func.func @transform_0(%arg0: i32) -> (i32, i32) {
    %c0_i32 = arith.constant 0 : i32
    %c0_i32_0 = arith.constant 0 : i32
    return %arg0, %c0_i32 : i32, i32
  }
  func.func @transform_1(%arg0: i32) -> (i32, i32) {
    %c0_i32 = arith.constant 0 : i32
    %c0_i32_0 = arith.constant 0 : i32
    return %arg0, %c0_i32 : i32, i32
  }
  func.func @transform_2(%arg0: i32) -> (i32, i32) {
    %c0_i32 = arith.constant 0 : i32
    %c0_i32_0 = arith.constant 0 : i32
    %c0_i32_1 = arith.constant 0 : i32
    return %c0_i32, %c0_i32_0 : i32, i32
  }
  func.func @transform_3(%arg0: i32) -> (i32, i32) {
    %c0_i32 = arith.constant 0 : i32
    %c0_i32_0 = arith.constant 0 : i32
    %c0_i32_1 = arith.constant 0 : i32
    return %c0_i32, %c0_i32_0 : i32, i32
  }
  func.func @transform_4(%arg0: i32) -> (i32, i32) {
    %c0_i32 = arith.constant 0 : i32
    %c0_i32_0 = arith.constant 0 : i32
    %c0_i32_1 = arith.constant 0 : i32
    return %c0_i32, %c0_i32_0 : i32, i32
  }
  func.func @transform_5(%arg0: i32) -> (i32, i32) {
    %c0_i32 = arith.constant 0 : i32
    %c0_i32_0 = arith.constant 0 : i32
    %c0_i32_1 = arith.constant 0 : i32
    return %c0_i32, %c0_i32_0 : i32, i32
  }
  func.func @transform_6(%arg0: i32) -> (i32, i32) {
    %c0_i32 = arith.constant 0 : i32
    %c0_i32_0 = arith.constant 0 : i32
    %c0_i32_1 = arith.constant 0 : i32
    return %c0_i32, %c0_i32_0 : i32, i32
  }
  func.func @transform_7(%arg0: i32) -> (i32, i32) {
    %c0_i32 = arith.constant 0 : i32
    %c0_i32_0 = arith.constant 0 : i32
    %c0_i32_1 = arith.constant 0 : i32
    return %c0_i32, %c0_i32_0 : i32, i32
  }
  func.func @transform_8(%arg0: i32) -> (i32, i32) {
    %c0_i32 = arith.constant 0 : i32
    %c0_i32_0 = arith.constant 0 : i32
    %c0_i32_1 = arith.constant 0 : i32
    return %c0_i32, %c0_i32_0 : i32, i32
  }
  func.func @transform_9(%arg0: i32) -> (i32, i32) {
    %c0_i32 = arith.constant 0 : i32
    %c0_i32_0 = arith.constant 0 : i32
    %c0_i32_1 = arith.constant 0 : i32
    return %c0_i32, %c0_i32_0 : i32, i32
  }
  func.func @transform_10(%arg0: i32) -> (i32, i32) {
    %c0_i32 = arith.constant 0 : i32
    %c0_i32_0 = arith.constant 0 : i32
    %c0_i32_1 = arith.constant 0 : i32
    return %c0_i32, %c0_i32_0 : i32, i32
  }
  func.func @transform_11(%arg0: i32) -> (i32, i32) {
    %c0_i32 = arith.constant 0 : i32
    %c0_i32_0 = arith.constant 0 : i32
    %c0_i32_1 = arith.constant 0 : i32
    return %c0_i32, %c0_i32_0 : i32, i32
  }
  func.func @transform_12(%arg0: i32) -> (i32, i32) {
    %c0_i32 = arith.constant 0 : i32
    %c0_i32_0 = arith.constant 0 : i32
    return %arg0, %c0_i32 : i32, i32
  }
}

</mosaic_0001>

<llo_original>
// kernel: tpu_custom_call.1
$region0: #{tpu_custom_call.1}
  #allocation0 [shape = 'u32[]', space=smem, size = 0x4, offset = 0x4, fixed_abs, tag = 'smem constant byte address 0x4 - core index']
  #allocation1 [shape = 'u32[72,128]{1,0:T(1,128)}', space=vmem, size = 0x9000, scoped, tag = 'internal scratch']
  %s0 = inlined_call_operand.hbm [shape: bf16[2,1280], index: 0, kind: input, shape index: {}]
  %s1 = inlined_call_operand.hbm [shape: f32[2,128], index: 1, kind: input, shape index: {}]
  %s2 = inlined_call_operand.hbm [shape: bf16[1280,512], index: 2, kind: input, shape index: {}]
  %s3 = inlined_call_operand.hbm [shape: f32[1,512], index: 3, kind: input, shape index: {}]
  %s4 = inlined_call_operand.hbm [shape: bf16[512,512], index: 4, kind: input, shape index: {}]
  %s5 = inlined_call_operand.hbm [shape: f32[1,512], index: 5, kind: input, shape index: {}]
  %s6 = inlined_call_operand.hbm [shape: bf16[512,512], index: 6, kind: input, shape index: {}]
  %s7 = inlined_call_operand.hbm [shape: f32[1,512], index: 7, kind: input, shape index: {}]
  %s8 = inlined_call_operand.hbm [shape: bf16[512,512], index: 8, kind: input, shape index: {}]
  %s9 = inlined_call_operand.hbm [shape: f32[1,512], index: 9, kind: input, shape index: {}]
  %s10 = inlined_call_operand.hbm [shape: bf16[512,128], index: 10, kind: input, shape index: {}]
  %s11 = inlined_call_operand.hbm [shape: f32[1,128], index: 11, kind: input, shape index: {}]
  %s12 = inlined_call_operand.hbm [shape: f32[2,128], index: 12, kind: output, shape index: {}]
  %s13 = sld [smem:[#allocation0]]
  $region106: #{tpu_custom_call.1} parent=0
    _
  %s15 = ssub.s32 1, %s13
  %s16 = scalar_select 0, %s15, %s13
  $region1: #{tpu_custom_call.1} parent=0
    #allocation2 [shape = 'u8[40960]{0}', space=vmem, size = 0xa000, scoped, tag = 'input window, operand 0, single buffered']
    #allocation3 [shape = 's32[1]{0}', space=sflag, size = 0x4, scoped, tag = 'scoped memory for tpu_custom_call.1']
    #allocation4 [shape = 's32[1]{0}', space=sflag, size = 0x4, scoped, tag = 'scoped memory for tpu_custom_call.1']
    #allocation5 [shape = 'u8[8192]{0}', space=vmem, size = 0x2000, scoped, tag = 'input window, operand 1, single buffered']
    #allocation6 [shape = 's32[1]{0}', space=sflag, size = 0x4, scoped, tag = 'scoped memory for tpu_custom_call.1']
    #allocation7 [shape = 'u8[1310720]{0}', space=vmem, size = 0x140000, scoped, tag = 'input window, operand 2, single buffered']
    #allocation8 [shape = 'u8[2048]{0}', space=vmem, size = 0x800, scoped, tag = 'input window, operand 3, single buffered']
    #allocation9 [shape = 's32[1]{0}', space=sflag, size = 0x4, scoped, tag = 'scoped memory for tpu_custom_call.1']
    #allocation10 [shape = 'u8[524288]{0}', space=vmem, size = 0x80000, scoped, tag = 'input window, operand 4, single buffered']
    #allocation11 [shape = 'u8[2048]{0}', space=vmem, size = 0x800, scoped, tag = 'input window, operand 5, single buffered']
    #allocation12 [shape = 's32[1]{0}', space=sflag, size = 0x4, scoped, tag = 'scoped memory for tpu_custom_call.1']
    #allocation13 [shape = 'u8[524288]{0}', space=vmem, size = 0x80000, scoped, tag = 'input window, operand 6, single buffered']
    #allocation14 [shape = 'u8[2048]{0}', space=vmem, size = 0x800, scoped, tag = 'input window, operand 7, single buffered']
    #allocation15 [shape = 's32[1]{0}', space=sflag, size = 0x4, scoped, tag = 'scoped memory for tpu_custom_call.1']
    #allocation16 [shape = 'u8[524288]{0}', space=vmem, size = 0x80000, scoped, tag = 'input window, operand 8, single buffered']
    #allocation17 [shape = 'u8[2048]{0}', space=vmem, size = 0x800, scoped, tag = 'input window, operand 9, single buffered']
    #allocation18 [shape = 's32[1]{0}', space=sflag, size = 0x4, scoped, tag = 'scoped memory for tpu_custom_call.1']
    #allocation19 [shape = 'u8[131072]{0}', space=vmem, size = 0x20000, scoped, tag = 'input window, operand 10, single buffered']
    #allocation20 [shape = 'u8[512]{0}', space=vmem, size = 0x400, scoped, tag = 'input window, operand 11, single buffered']
    #allocation21 [shape = 's32[1]{0}', space=sflag, size = 0x4, scoped, tag = 'scoped memory for tpu_custom_call.1']
    #allocation22 [shape = 'u8[8192]{0}', space=vmem, size = 0x2000, scoped, tag = 'output window, operand 0, single buffered']
    %17 = vsyncpa [#allocation3], 0
    %18 = vsyncpa [#allocation6], 0
    %19 = vsyncpa [#allocation9], 0
    %20 = vsyncpa [#allocation12], 0
    %21 = vsyncpa [#allocation15], 0
    %22 = vsyncpa [#allocation18], 0
    %23 = vsyncpa [#allocation21], 0
    %24 = vsyncpa [#allocation4], 0
    // Predicated region
    $region2: #{tpu_custom_call.1} parent=1 // pred_check
      _
    $region3: #{tpu_custom_call.1} parent=1 // pred_check_branch
      %26 = sbr.rel (0) target = $region5
    $region4: #{tpu_custom_call.1} parent=1 // pred_region
      %28 = vsyncadd [#allocation3], 1120
      %s29 = sshll.u32 %s0, 4
      %s30 = int_to_ptr.hbm [resolvable:$true] %s29
      %s31 = sshll.u32 [#allocation2], 4
      %s32 = int_to_ptr.vmem [resolvable:$true] %s31
      %37 = dma.hbm_to_vmem [thread:$0]  %s30, 160, %s32, [#allocation3], 160, 160, 10
    $region5: #{tpu_custom_call.1} parent=1 // pred_fallthru
      _
    // Predicated region
    $region6: #{tpu_custom_call.1} parent=1 // pred_check
      _
    $region7: #{tpu_custom_call.1} parent=1 // pred_check_branch
      %39 = sbr.rel (0) target = $region9
    $region8: #{tpu_custom_call.1} parent=1 // pred_region
      %41 = vsyncadd [#allocation6], 224
      %s42 = sshll.u32 %s1, 4
      %s43 = int_to_ptr.hbm [resolvable:$true] %s42
      %s44 = sshll.u32 [#allocation5], 4
      %s45 = int_to_ptr.vmem [resolvable:$true] %s44
      %50 = dma.hbm_to_vmem [thread:$0]  %s43, 32, %s45, [#allocation6], 32, 32, 2
    $region9: #{tpu_custom_call.1} parent=1 // pred_fallthru
      _
    // Predicated region
    $region10: #{tpu_custom_call.1} parent=1 // pred_check
      _
    $region11: #{tpu_custom_call.1} parent=1 // pred_check_branch
      %52 = sbr.rel (0) target = $region13
    $region12: #{tpu_custom_call.1} parent=1 // pred_region
      %54 = vsyncadd [#allocation6], 0
      %s55 = sshll.u32 %s2, 4
      %s56 = int_to_ptr.hbm [resolvable:$true] %s55
      %s57 = sshll.u32 [#allocation7], 4
      %s58 = int_to_ptr.vmem [resolvable:$true] %s57
      %63 = dma.hbm_to_vmem [thread:$0]  %s56, 40960, %s58, [#allocation6], 256, 256, 16
    $region13: #{tpu_custom_call.1} parent=1 // pred_fallthru
      _
    // Predicated region
    $region14: #{tpu_custom_call.1} parent=1 // pred_check
      _
    $region15: #{tpu_custom_call.1} parent=1 // pred_check_branch
      %65 = sbr.rel (0) target = $region17
    $region16: #{tpu_custom_call.1} parent=1 // pred_region
      %67 = vsyncadd [#allocation9], 0
      %s69 = sshll.u32 %s3, 4
      %s70 = int_to_ptr.hbm [resolvable:$true] %s69
      %s71 = sshll.u32 [#allocation8], 4
      %s72 = int_to_ptr.vmem [resolvable:$true] %s71
      %74 = dma.hbm_to_vmem [thread:$0]  %s70, 64, %s72, [#allocation9]
    $region17: #{tpu_custom_call.1} parent=1 // pred_fallthru
      _
    // Predicated region
    $region18: #{tpu_custom_call.1} parent=1 // pred_check
      _
    $region19: #{tpu_custom_call.1} parent=1 // pred_check_branch
      %76 = sbr.rel (0) target = $region21
    $region20: #{tpu_custom_call.1} parent=1 // pred_region
      %78 = vsyncadd [#allocation9], 0
      %s79 = sshll.u32 %s4, 4
      %s80 = int_to_ptr.hbm [resolvable:$true] %s79
      %s81 = sshll.u32 [#allocation10], 4
      %s82 = int_to_ptr.vmem [resolvable:$true] %s81
      %87 = dma.hbm_to_vmem [thread:$0]  %s80, 16384, %s82, [#allocation9], 256, 256, 16
    $region21: #{tpu_custom_call.1} parent=1 // pred_fallthru
      _
    // Predicated region
    $region22: #{tpu_custom_call.1} parent=1 // pred_check
      _
    $region23: #{tpu_custom_call.1} parent=1 // pred_check_branch
      %89 = sbr.rel (0) target = $region25
    $region24: #{tpu_custom_call.1} parent=1 // pred_region
      %91 = vsyncadd [#allocation12], 0
      %s93 = sshll.u32 %s5, 4
      %s94 = int_to_ptr.hbm [resolvable:$true] %s93
      %s95 = sshll.u32 [#allocation11], 4
      %s96 = int_to_ptr.vmem [resolvable:$true] %s95
      %98 = dma.hbm_to_vmem [thread:$0]  %s94, 64, %s96, [#allocation12]
    $region25: #{tpu_custom_call.1} parent=1 // pred_fallthru
      _
    // Predicated region
    $region26: #{tpu_custom_call.1} parent=1 // pred_check
      _
    $region27: #{tpu_custom_call.1} parent=1 // pred_check_branch
      %100 = sbr.rel (0) target = $region29
    $region28: #{tpu_custom_call.1} parent=1 // pred_region
      %102 = vsyncadd [#allocation12], 0
      %s103 = sshll.u32 %s6, 4
      %s104 = int_to_ptr.hbm [resolvable:$true] %s103
      %s105 = sshll.u32 [#allocation13], 4
      %s106 = int_to_ptr.vmem [resolvable:$true] %s105
      %111 = dma.hbm_to_vmem [thread:$0]  %s104, 16384, %s106, [#allocation12], 256, 256, 16
    $region29: #{tpu_custom_call.1} parent=1 // pred_fallthru
      _
    // Predicated region
    $region30: #{tpu_custom_call.1} parent=1 // pred_check
      _
    $region31: #{tpu_custom_call.1} parent=1 // pred_check_branch
      %113 = sbr.rel (0) target = $region33
    $region32: #{tpu_custom_call.1} parent=1 // pred_region
      %115 = vsyncadd [#allocation15], 0
      %s117 = sshll.u32 %s7, 4
      %s118 = int_to_ptr.hbm [resolvable:$true] %s117
      %s119 = sshll.u32 [#allocation14], 4
      %s120 = int_to_ptr.vmem [resolvable:$true] %s119
      %122 = dma.hbm_to_vmem [thread:$0]  %s118, 64, %s120, [#allocation15]
    $region33: #{tpu_custom_call.1} parent=1 // pred_fallthru
      _
    // Predicated region
    $region34: #{tpu_custom_call.1} parent=1 // pred_check
      _
    $region35: #{tpu_custom_call.1} parent=1 // pred_check_branch
      %124 = sbr.rel (0) target = $region37
    $region36: #{tpu_custom_call.1} parent=1 // pred_region
      %126 = vsyncadd [#allocation15], 0
      %s127 = sshll.u32 %s8, 4
      %s128 = int_to_ptr.hbm [resolvable:$true] %s127
      %s129 = sshll.u32 [#allocation16], 4
      %s130 = int_to_ptr.vmem [resolvable:$true] %s129
      %135 = dma.hbm_to_vmem [thread:$0]  %s128, 16384, %s130, [#allocation15], 256, 256, 16
    $region37: #{tpu_custom_call.1} parent=1 // pred_fallthru
      _
    // Predicated region
    $region38: #{tpu_custom_call.1} parent=1 // pred_check
      _
    $region39: #{tpu_custom_call.1} parent=1 // pred_check_branch
      %137 = sbr.rel (0) target = $region41
    $region40: #{tpu_custom_call.1} parent=1 // pred_region
      %139 = vsyncadd [#allocation18], 0
      %s141 = sshll.u32 %s9, 4
      %s142 = int_to_ptr.hbm [resolvable:$true] %s141
      %s143 = sshll.u32 [#allocation17], 4
      %s144 = int_to_ptr.vmem [resolvable:$true] %s143
      %146 = dma.hbm_to_vmem [thread:$0]  %s142, 64, %s144, [#allocation18]
    $region41: #{tpu_custom_call.1} parent=1 // pred_fallthru
      _
    // Predicated region
    $region42: #{tpu_custom_call.1} parent=1 // pred_check
      _
    $region43: #{tpu_custom_call.1} parent=1 // pred_check_branch
      %148 = sbr.rel (0) target = $region45
    $region44: #{tpu_custom_call.1} parent=1 // pred_region
      %150 = vsyncadd [#allocation18], 0
      %s151 = sshll.u32 %s10, 4
      %s152 = int_to_ptr.hbm [resolvable:$true] %s151
      %s153 = sshll.u32 [#allocation19], 4
      %s154 = int_to_ptr.vmem [resolvable:$true] %s153
      %159 = dma.hbm_to_vmem [thread:$0]  %s152, 4096, %s154, [#allocation18], 64, 64, 4
    $region45: #{tpu_custom_call.1} parent=1 // pred_fallthru
      _
    // Predicated region
    $region46: #{tpu_custom_call.1} parent=1 // pred_check
      _
    $region47: #{tpu_custom_call.1} parent=1 // pred_check_branch
      %161 = sbr.rel (0) target = $region49
    $region48: #{tpu_custom_call.1} parent=1 // pred_region
      %163 = vsyncadd [#allocation21], 0
      %s165 = sshll.u32 %s11, 4
      %s166 = int_to_ptr.hbm [resolvable:$true] %s165
      %s167 = sshll.u32 [#allocation20], 4
      %s168 = int_to_ptr.vmem [resolvable:$true] %s167
      %170 = dma.hbm_to_vmem [thread:$0]  %s166, 16, %s168, [#allocation21]
    $region49: #{tpu_custom_call.1} parent=1 // pred_fallthru
      _
    // Predicated region
    $region50: #{tpu_custom_call.1} parent=1 // pred_check
      _
    $region51: #{tpu_custom_call.1} parent=1 // pred_check_branch
      %172 = sbr.rel (0) target = $region53
    $region52: #{tpu_custom_call.1} parent=1 // pred_region
      %174 = dma.done [#allocation3], 1280
    $region53: #{tpu_custom_call.1} parent=1 // pred_fallthru
      _
    // Predicated region
    $region54: #{tpu_custom_call.1} parent=1 // pred_check
      _
    $region55: #{tpu_custom_call.1} parent=1 // pred_check_branch
      %176 = sbr.rel (0) target = $region57
    $region56: #{tpu_custom_call.1} parent=1 // pred_region
      %178 = dma.done [#allocation6], 256
    $region57: #{tpu_custom_call.1} parent=1 // pred_fallthru
      _
    // Predicated region
    $region58: #{tpu_custom_call.1} parent=1 // pred_check
      _
    $region59: #{tpu_custom_call.1} parent=1 // pred_check_branch
      %180 = sbr.rel (0) target = $region61
    $region60: #{tpu_custom_call.1} parent=1 // pred_region
      %182 = dma.done [#allocation6], 40960
    $region61: #{tpu_custom_call.1} parent=1 // pred_fallthru
      _
    // Predicated region
    $region62: #{tpu_custom_call.1} parent=1 // pred_check
      _
    $region63: #{tpu_custom_call.1} parent=1 // pred_check_branch
      %184 = sbr.rel (0) target = $region65
    $region64: #{tpu_custom_call.1} parent=1 // pred_region
      %186 = dma.done [#allocation9], 64
    $region65: #{tpu_custom_call.1} parent=1 // pred_fallthru
      _
    // Predicated region
    $region66: #{tpu_custom_call.1} parent=1 // pred_check
      _
    $region67: #{tpu_custom_call.1} parent=1 // pred_check_branch
      %188 = sbr.rel (0) target = $region69
    $region68: #{tpu_custom_call.1} parent=1 // pred_region
      %190 = dma.done [#allocation9], 16384
    $region69: #{tpu_custom_call.1} parent=1 // pred_fallthru
      _
    // Predicated region
    $region70: #{tpu_custom_call.1} parent=1 // pred_check
      _
    $region71: #{tpu_custom_call.1} parent=1 // pred_check_branch
      %192 = sbr.rel (0) target = $region73
    $region72: #{tpu_custom_call.1} parent=1 // pred_region
      %194 = dma.done [#allocation12], 64
    $region73: #{tpu_custom_call.1} parent=1 // pred_fallthru
      _
    // Predicated region
    $region74: #{tpu_custom_call.1} parent=1 // pred_check
      _
    $region75: #{tpu_custom_call.1} parent=1 // pred_check_branch
      %196 = sbr.rel (0) target = $region77
    $region76: #{tpu_custom_call.1} parent=1 // pred_region
      %198 = dma.done [#allocation12], 16384
    $region77: #{tpu_custom_call.1} parent=1 // pred_fallthru
      _
    // Predicated region
    $region78: #{tpu_custom_call.1} parent=1 // pred_check
      _
    $region79: #{tpu_custom_call.1} parent=1 // pred_check_branch
      %200 = sbr.rel (0) target = $region81
    $region80: #{tpu_custom_call.1} parent=1 // pred_region
      %202 = dma.done [#allocation15], 64
    $region81: #{tpu_custom_call.1} parent=1 // pred_fallthru
      _
    // Predicated region
    $region82: #{tpu_custom_call.1} parent=1 // pred_check
      _
    $region83: #{tpu_custom_call.1} parent=1 // pred_check_branch
      %204 = sbr.rel (0) target = $region85
    $region84: #{tpu_custom_call.1} parent=1 // pred_region
      %206 = dma.done [#allocation15], 16384
    $region85: #{tpu_custom_call.1} parent=1 // pred_fallthru
      _
    // Predicated region
    $region86: #{tpu_custom_call.1} parent=1 // pred_check
      _
    $region87: #{tpu_custom_call.1} parent=1 // pred_check_branch
      %208 = sbr.rel (0) target = $region89
    $region88: #{tpu_custom_call.1} parent=1 // pred_region
      %210 = dma.done [#allocation18], 64
    $region89: #{tpu_custom_call.1} parent=1 // pred_fallthru
      _
    // Predicated region
    $region90: #{tpu_custom_call.1} parent=1 // pred_check
      _
    $region91: #{tpu_custom_call.1} parent=1 // pred_check_branch
      %212 = sbr.rel (0) target = $region93
    $region92: #{tpu_custom_call.1} parent=1 // pred_region
      %214 = dma.done [#allocation18], 4096
    $region93: #{tpu_custom_call.1} parent=1 // pred_fallthru
      _
    // Predicated region
    $region94: #{tpu_custom_call.1} parent=1 // pred_check
      _
    $region95: #{tpu_custom_call.1} parent=1 // pred_check_branch
      %216 = sbr.rel (0) target = $region97
    $region96: #{tpu_custom_call.1} parent=1 // pred_region
      %218 = dma.done [#allocation21], 16
    $region97: #{tpu_custom_call.1} parent=1 // pred_fallthru
      _
    %v219 = vld [vmem:[#allocation2] sm:$0xff]
    %v220 = vld [vmem:[#allocation2 + $0x8] sm:$0x3]
    %v221 = vld [vmem:[#allocation2 + $0xa] sm:$0xff]
    %v222 = vld [vmem:[#allocation2 + $0x12] sm:$0x3]
    %v223 = vld [vmem:[#allocation2 + $0x14] sm:$0xff]
    %v224 = vld [vmem:[#allocation2 + $0x1c] sm:$0x3]
    %v225 = vld [vmem:[#allocation2 + $0x1e] sm:$0xff]
    %v226 = vld [vmem:[#allocation2 + $0x26] sm:$0x3]
    %v227 = vld [vmem:[#allocation2 + $0x28] sm:$0xff]
    %v228 = vld [vmem:[#allocation2 + $0x30] sm:$0x3]
    %v229 = vld [vmem:[#allocation2 + $0x32] sm:$0xff]
    %v230 = vld [vmem:[#allocation2 + $0x3a] sm:$0x3]
    %v231 = vld [vmem:[#allocation2 + $0x3c] sm:$0xff]
    %v232 = vld [vmem:[#allocation2 + $0x44] sm:$0x3]
    %v233 = vld [vmem:[#allocation2 + $0x46] sm:$0xff]
    %v234 = vld [vmem:[#allocation2 + $0x4e] sm:$0x3]
    %v235 = vld [vmem:[#allocation7] sm:$0xff]
    %v236 = vld [vmem:[#allocation7 + $0x8] sm:$0xff]
    %v237 = vld [vmem:[#allocation7 + $0x10] sm:$0xff]
    %v238 = vld [vmem:[#allocation7 + $0x18] sm:$0xff]
    %v239 = vld [vmem:[#allocation7 + $0x20] sm:$0xff]
    %v240 = vld [vmem:[#allocation7 + $0x28] sm:$0xff]
    %v241 = vld [vmem:[#allocation7 + $0x30] sm:$0xff]
    %v242 = vld [vmem:[#allocation7 + $0x38] sm:$0xff]
    %v243 = vld [vmem:[#allocation7 + $0x40] sm:$0xff]
    %v244 = vld [vmem:[#allocation7 + $0x48] sm:$0xff]
    %v245 = vld [vmem:[#allocation7 + $0x50] sm:$0xff]
    %v246 = vld [vmem:[#allocation7 + $0x58] sm:$0xff]
    %v247 = vld [vmem:[#allocation7 + $0x60] sm:$0xff]
    %v248 = vld [vmem:[#allocation7 + $0x68] sm:$0xff]
    %v249 = vld [vmem:[#allocation7 + $0x70] sm:$0xff]
    %v250 = vld [vmem:[#allocation7 + $0x78] sm:$0xff]
    %v251 = vld [vmem:[#allocation7 + $0x80] sm:$0xff]
    %v252 = vld [vmem:[#allocation7 + $0x88] sm:$0xff]
    %v253 = vld [vmem:[#allocation7 + $0x90] sm:$0xff]
    %v254 = vld [vmem:[#allocation7 + $0x98] sm:$0xff]
    %v255 = vld [vmem:[#allocation7 + $0xa0] sm:$0xff]
    %v256 = vld [vmem:[#allocation7 + $0xa8] sm:$0xff]
    %v257 = vld [vmem:[#allocation7 + $0xb0] sm:$0xff]
    %v258 = vld [vmem:[#allocation7 + $0xb8] sm:$0xff]
    %v259 = vld [vmem:[#allocation7 + $0xc0] sm:$0xff]
    %v260 = vld [vmem:[#allocation7 + $0xc8] sm:$0xff]
    %v261 = vld [vmem:[#allocation7 + $0xd0] sm:$0xff]
    %v262 = vld [vmem:[#allocation7 + $0xd8] sm:$0xff]
    %v263 = vld [vmem:[#allocation7 + $0xe0] sm:$0xff]
    %v264 = vld [vmem:[#allocation7 + $0xe8] sm:$0xff]
    %v265 = vld [vmem:[#allocation7 + $0xf0] sm:$0xff]
    %v266 = vld [vmem:[#allocation7 + $0xf8] sm:$0xff]
    %v267 = vld [vmem:[#allocation7 + $0x100] sm:$0xff]
    %v268 = vld [vmem:[#allocation7 + $0x108] sm:$0xff]
    %v269 = vld [vmem:[#allocation7 + $0x110] sm:$0xff]
    %v270 = vld [vmem:[#allocation7 + $0x118] sm:$0xff]
    %v271 = vld [vmem:[#allocation7 + $0x120] sm:$0xff]
    %v272 = vld [vmem:[#allocation7 + $0x128] sm:$0xff]
    %v273 = vld [vmem:[#allocation7 + $0x130] sm:$0xff]
    %v274 = vld [vmem:[#allocation7 + $0x138] sm:$0xff]
    %v275 = vld [vmem:[#allocation7 + $0x140] sm:$0xff]
    %v276 = vld [vmem:[#allocation7 + $0x148] sm:$0xff]
    %v277 = vld [vmem:[#allocation7 + $0x150] sm:$0xff]
    %v278 = vld [vmem:[#allocation7 + $0x158] sm:$0xff]
    %v279 = vld [vmem:[#allocation7 + $0x160] sm:$0xff]
    %v280 = vld [vmem:[#allocation7 + $0x168] sm:$0xff]
    %v281 = vld [vmem:[#allocation7 + $0x170] sm:$0xff]
    %v282 = vld [vmem:[#allocation7 + $0x178] sm:$0xff]
    %v283 = vld [vmem:[#allocation7 + $0x180] sm:$0xff]
    %v284 = vld [vmem:[#allocation7 + $0x188] sm:$0xff]
    %v285 = vld [vmem:[#allocation7 + $0x190] sm:$0xff]
    %v286 = vld [vmem:[#allocation7 + $0x198] sm:$0xff]
    %v287 = vld [vmem:[#allocation7 + $0x1a0] sm:$0xff]
    %v288 = vld [vmem:[#allocation7 + $0x1a8] sm:$0xff]
    %v289 = vld [vmem:[#allocation7 + $0x1b0] sm:$0xff]
    %v290 = vld [vmem:[#allocation7 + $0x1b8] sm:$0xff]
    %v291 = vld [vmem:[#allocation7 + $0x1c0] sm:$0xff]
    %v292 = vld [vmem:[#allocation7 + $0x1c8] sm:$0xff]
    %v293 = vld [vmem:[#allocation7 + $0x1d0] sm:$0xff]
    %v294 = vld [vmem:[#allocation7 + $0x1d8] sm:$0xff]
    %v295 = vld [vmem:[#allocation7 + $0x1e0] sm:$0xff]
    %v296 = vld [vmem:[#allocation7 + $0x1e8] sm:$0xff]
    %v297 = vld [vmem:[#allocation7 + $0x1f0] sm:$0xff]
    %v298 = vld [vmem:[#allocation7 + $0x1f8] sm:$0xff]
    %v299 = vld [vmem:[#allocation7 + $0x200] sm:$0xff]
    %v300 = vld [vmem:[#allocation7 + $0x208] sm:$0xff]
    %v301 = vld [vmem:[#allocation7 + $0x210] sm:$0xff]
    %v302 = vld [vmem:[#allocation7 + $0x218] sm:$0xff]
    %v303 = vld [vmem:[#allocation7 + $0x220] sm:$0xff]
    %v304 = vld [vmem:[#allocation7 + $0x228] sm:$0xff]
    %v305 = vld [vmem:[#allocation7 + $0x230] sm:$0xff]
    %v306 = vld [vmem:[#allocation7 + $0x238] sm:$0xff]
    %v307 = vld [vmem:[#allocation7 + $0x240] sm:$0xff]
    %v308 = vld [vmem:[#allocation7 + $0x248] sm:$0xff]
    %v309 = vld [vmem:[#allocation7 + $0x250] sm:$0xff]
    %v310 = vld [vmem:[#allocation7 + $0x258] sm:$0xff]
    %v311 = vld [vmem:[#allocation7 + $0x260] sm:$0xff]
    %v312 = vld [vmem:[#allocation7 + $0x268] sm:$0xff]
    %v313 = vld [vmem:[#allocation7 + $0x270] sm:$0xff]
    %v314 = vld [vmem:[#allocation7 + $0x278] sm:$0xff]
    %v315 = vld [vmem:[#allocation7 + $0x280] sm:$0xff]
    %v316 = vld [vmem:[#allocation7 + $0x288] sm:$0xff]
    %v317 = vld [vmem:[#allocation7 + $0x290] sm:$0xff]
    %v318 = vld [vmem:[#allocation7 + $0x298] sm:$0xff]
    %v319 = vld [vmem:[#allocation7 + $0x2a0] sm:$0xff]
    %v320 = vld [vmem:[#allocation7 + $0x2a8] sm:$0xff]
    %v321 = vld [vmem:[#allocation7 + $0x2b0] sm:$0xff]
    %v322 = vld [vmem:[#allocation7 + $0x2b8] sm:$0xff]
    %v323 = vld [vmem:[#allocation7 + $0x2c0] sm:$0xff]
    %v324 = vld [vmem:[#allocation7 + $0x2c8] sm:$0xff]
    %v325 = vld [vmem:[#allocation7 + $0x2d0] sm:$0xff]
    %v326 = vld [vmem:[#allocation7 + $0x2d8] sm:$0xff]
    %v327 = vld [vmem:[#allocation7 + $0x2e0] sm:$0xff]
    %v328 = vld [vmem:[#allocation7 + $0x2e8] sm:$0xff]
    %v329 = vld [vmem:[#allocation7 + $0x2f0] sm:$0xff]
    %v330 = vld [vmem:[#allocation7 + $0x2f8] sm:$0xff]
    %v331 = vld [vmem:[#allocation7 + $0x300] sm:$0xff]
    %v332 = vld [vmem:[#allocation7 + $0x308] sm:$0xff]
    %v333 = vld [vmem:[#allocation7 + $0x310] sm:$0xff]
    %v334 = vld [vmem:[#allocation7 + $0x318] sm:$0xff]
    %v335 = vld [vmem:[#allocation7 + $0x320] sm:$0xff]
    %v336 = vld [vmem:[#allocation7 + $0x328] sm:$0xff]
    %v337 = vld [vmem:[#allocation7 + $0x330] sm:$0xff]
    %v338 = vld [vmem:[#allocation7 + $0x338] sm:$0xff]
    %v339 = vld [vmem:[#allocation7 + $0x340] sm:$0xff]
    %v340 = vld [vmem:[#allocation7 + $0x348] sm:$0xff]
    %v341 = vld [vmem:[#allocation7 + $0x350] sm:$0xff]
    %v342 = vld [vmem:[#allocation7 + $0x358] sm:$0xff]
    %v343 = vld [vmem:[#allocation7 + $0x360] sm:$0xff]
    %v344 = vld [vmem:[#allocation7 + $0x368] sm:$0xff]
    %v345 = vld [vmem:[#allocation7 + $0x370] sm:$0xff]
    %v346 = vld [vmem:[#allocation7 + $0x378] sm:$0xff]
    %v347 = vld [vmem:[#allocation7 + $0x380] sm:$0xff]
    %v348 = vld [vmem:[#allocation7 + $0x388] sm:$0xff]
    %v349 = vld [vmem:[#allocation7 + $0x390] sm:$0xff]
    %v350 = vld [vmem:[#allocation7 + $0x398] sm:$0xff]
    %v351 = vld [vmem:[#allocation7 + $0x3a0] sm:$0xff]
    %v352 = vld [vmem:[#allocation7 + $0x3a8] sm:$0xff]
    %v353 = vld [vmem:[#allocation7 + $0x3b0] sm:$0xff]
    %v354 = vld [vmem:[#allocation7 + $0x3b8] sm:$0xff]
    %v355 = vld [vmem:[#allocation7 + $0x3c0] sm:$0xff]
    %v356 = vld [vmem:[#allocation7 + $0x3c8] sm:$0xff]
    %v357 = vld [vmem:[#allocation7 + $0x3d0] sm:$0xff]
    %v358 = vld [vmem:[#allocation7 + $0x3d8] sm:$0xff]
    %v359 = vld [vmem:[#allocation7 + $0x3e0] sm:$0xff]
    %v360 = vld [vmem:[#allocation7 + $0x3e8] sm:$0xff]
    %v361 = vld [vmem:[#allocation7 + $0x3f0] sm:$0xff]
    %v362 = vld [vmem:[#allocation7 + $0x3f8] sm:$0xff]
    %v363 = vld [vmem:[#allocation7 + $0x400] sm:$0xff]
    %v364 = vld [vmem:[#allocation7 + $0x408] sm:$0xff]
    %v365 = vld [vmem:[#allocation7 + $0x410] sm:$0xff]
    %v366 = vld [vmem:[#allocation7 + $0x418] sm:$0xff]
    %v367 = vld [vmem:[#allocation7 + $0x420] sm:$0xff]
    %v368 = vld [vmem:[#allocation7 + $0x428] sm:$0xff]
    %v369 = vld [vmem:[#allocation7 + $0x430] sm:$0xff]
    %v370 = vld [vmem:[#allocation7 + $0x438] sm:$0xff]
    %v371 = vld [vmem:[#allocation7 + $0x440] sm:$0xff]
    %v372 = vld [vmem:[#allocation7 + $0x448] sm:$0xff]
    %v373 = vld [vmem:[#allocation7 + $0x450] sm:$0xff]
    %v374 = vld [vmem:[#allocation7 + $0x458] sm:$0xff]
    %v375 = vld [vmem:[#allocation7 + $0x460] sm:$0xff]
    %v376 = vld [vmem:[#allocation7 + $0x468] sm:$0xff]
    %v377 = vld [vmem:[#allocation7 + $0x470] sm:$0xff]
    %v378 = vld [vmem:[#allocation7 + $0x478] sm:$0xff]
    %v379 = vld [vmem:[#allocation7 + $0x480] sm:$0xff]
    %v380 = vld [vmem:[#allocation7 + $0x488] sm:$0xff]
    %v381 = vld [vmem:[#allocation7 + $0x490] sm:$0xff]
    %v382 = vld [vmem:[#allocation7 + $0x498] sm:$0xff]
    %v383 = vld [vmem:[#allocation7 + $0x4a0] sm:$0xff]
    %v384 = vld [vmem:[#allocation7 + $0x4a8] sm:$0xff]
    %v385 = vld [vmem:[#allocation7 + $0x4b0] sm:$0xff]
    %v386 = vld [vmem:[#allocation7 + $0x4b8] sm:$0xff]
    %v387 = vld [vmem:[#allocation7 + $0x4c0] sm:$0xff]
    %v388 = vld [vmem:[#allocation7 + $0x4c8] sm:$0xff]
    %v389 = vld [vmem:[#allocation7 + $0x4d0] sm:$0xff]
    %v390 = vld [vmem:[#allocation7 + $0x4d8] sm:$0xff]
    %v391 = vld [vmem:[#allocation7 + $0x4e0] sm:$0xff]
    %v392 = vld [vmem:[#allocation7 + $0x4e8] sm:$0xff]
    %v393 = vld [vmem:[#allocation7 + $0x4f0] sm:$0xff]
    %v394 = vld [vmem:[#allocation7 + $0x4f8] sm:$0xff]
    %v395 = vld [vmem:[#allocation7 + $0x500] sm:$0xff]
    %v396 = vld [vmem:[#allocation7 + $0x508] sm:$0xff]
    %v397 = vld [vmem:[#allocation7 + $0x510] sm:$0xff]
    %v398 = vld [vmem:[#allocation7 + $0x518] sm:$0xff]
    %v399 = vld [vmem:[#allocation7 + $0x520] sm:$0xff]
    %v400 = vld [vmem:[#allocation7 + $0x528] sm:$0xff]
    %v401 = vld [vmem:[#allocation7 + $0x530] sm:$0xff]
    %v402 = vld [vmem:[#allocation7 + $0x538] sm:$0xff]
    %v403 = vld [vmem:[#allocation7 + $0x540] sm:$0xff]
    %v404 = vld [vmem:[#allocation7 + $0x548] sm:$0xff]
    %v405 = vld [vmem:[#allocation7 + $0x550] sm:$0xff]
    %v406 = vld [vmem:[#allocation7 + $0x558] sm:$0xff]
    %v407 = vld [vmem:[#allocation7 + $0x560] sm:$0xff]
    %v408 = vld [vmem:[#allocation7 + $0x568] sm:$0xff]
    %v409 = vld [vmem:[#allocation7 + $0x570] sm:$0xff]
    %v410 = vld [vmem:[#allocation7 + $0x578] sm:$0xff]
    %v411 = vld [vmem:[#allocation7 + $0x580] sm:$0xff]
    %v412 = vld [vmem:[#allocation7 + $0x588] sm:$0xff]
    %v413 = vld [vmem:[#allocation7 + $0x590] sm:$0xff]
    %v414 = vld [vmem:[#allocation7 + $0x598] sm:$0xff]
    %v415 = vld [vmem:[#allocation7 + $0x5a0] sm:$0xff]
    %v416 = vld [vmem:[#allocation7 + $0x5a8] sm:$0xff]
    %v417 = vld [vmem:[#allocation7 + $0x5b0] sm:$0xff]
    %v418 = vld [vmem:[#allocation7 + $0x5b8] sm:$0xff]
    %v419 = vld [vmem:[#allocation7 + $0x5c0] sm:$0xff]
    %v420 = vld [vmem:[#allocation7 + $0x5c8] sm:$0xff]
    %v421 = vld [vmem:[#allocation7 + $0x5d0] sm:$0xff]
    %v422 = vld [vmem:[#allocation7 + $0x5d8] sm:$0xff]
    %v423 = vld [vmem:[#allocation7 + $0x5e0] sm:$0xff]
    %v424 = vld [vmem:[#allocation7 + $0x5e8] sm:$0xff]
    %v425 = vld [vmem:[#allocation7 + $0x5f0] sm:$0xff]
    %v426 = vld [vmem:[#allocation7 + $0x5f8] sm:$0xff]
    %v427 = vld [vmem:[#allocation7 + $0x600] sm:$0xff]
    %v428 = vld [vmem:[#allocation7 + $0x608] sm:$0xff]
    %v429 = vld [vmem:[#allocation7 + $0x610] sm:$0xff]
    %v430 = vld [vmem:[#allocation7 + $0x618] sm:$0xff]
    %v431 = vld [vmem:[#allocation7 + $0x620] sm:$0xff]
    %v432 = vld [vmem:[#allocation7 + $0x628] sm:$0xff]
    %v433 = vld [vmem:[#allocation7 + $0x630] sm:$0xff]
    %v434 = vld [vmem:[#allocation7 + $0x638] sm:$0xff]
    %v435 = vld [vmem:[#allocation7 + $0x640] sm:$0xff]
    %v436 = vld [vmem:[#allocation7 + $0x648] sm:$0xff]
    %v437 = vld [vmem:[#allocation7 + $0x650] sm:$0xff]
    %v438 = vld [vmem:[#allocation7 + $0x658] sm:$0xff]
    %v439 = vld [vmem:[#allocation7 + $0x660] sm:$0xff]
    %v440 = vld [vmem:[#allocation7 + $0x668] sm:$0xff]
    %v441 = vld [vmem:[#allocation7 + $0x670] sm:$0xff]
    %v442 = vld [vmem:[#allocation7 + $0x678] sm:$0xff]
    %v443 = vld [vmem:[#allocation7 + $0x680] sm:$0xff]
    %v444 = vld [vmem:[#allocation7 + $0x688] sm:$0xff]
    %v445 = vld [vmem:[#allocation7 + $0x690] sm:$0xff]
    %v446 = vld [vmem:[#allocation7 + $0x698] sm:$0xff]
    %v447 = vld [vmem:[#allocation7 + $0x6a0] sm:$0xff]
    %v448 = vld [vmem:[#allocation7 + $0x6a8] sm:$0xff]
    %v449 = vld [vmem:[#allocation7 + $0x6b0] sm:$0xff]
    %v450 = vld [vmem:[#allocation7 + $0x6b8] sm:$0xff]
    %v451 = vld [vmem:[#allocation7 + $0x6c0] sm:$0xff]
    %v452 = vld [vmem:[#allocation7 + $0x6c8] sm:$0xff]
    %v453 = vld [vmem:[#allocation7 + $0x6d0] sm:$0xff]
    %v454 = vld [vmem:[#allocation7 + $0x6d8] sm:$0xff]
    %v455 = vld [vmem:[#allocation7 + $0x6e0] sm:$0xff]
    %v456 = vld [vmem:[#allocation7 + $0x6e8] sm:$0xff]
    %v457 = vld [vmem:[#allocation7 + $0x6f0] sm:$0xff]
    %v458 = vld [vmem:[#allocation7 + $0x6f8] sm:$0xff]
    %v459 = vld [vmem:[#allocation7 + $0x700] sm:$0xff]
    %v460 = vld [vmem:[#allocation7 + $0x708] sm:$0xff]
    %v461 = vld [vmem:[#allocation7 + $0x710] sm:$0xff]
    %v462 = vld [vmem:[#allocation7 + $0x718] sm:$0xff]
    %v463 = vld [vmem:[#allocation7 + $0x720] sm:$0xff]
    %v464 = vld [vmem:[#allocation7 + $0x728] sm:$0xff]
    %v465 = vld [vmem:[#allocation7 + $0x730] sm:$0xff]
    %v466 = vld [vmem:[#allocation7 + $0x738] sm:$0xff]
    %v467 = vld [vmem:[#allocation7 + $0x740] sm:$0xff]
    %v468 = vld [vmem:[#allocation7 + $0x748] sm:$0xff]
    %v469 = vld [vmem:[#allocation7 + $0x750] sm:$0xff]
    %v470 = vld [vmem:[#allocation7 + $0x758] sm:$0xff]
    %v471 = vld [vmem:[#allocation7 + $0x760] sm:$0xff]
    %v472 = vld [vmem:[#allocation7 + $0x768] sm:$0xff]
    %v473 = vld [vmem:[#allocation7 + $0x770] sm:$0xff]
    %v474 = vld [vmem:[#allocation7 + $0x778] sm:$0xff]
    %v475 = vld [vmem:[#allocation7 + $0x780] sm:$0xff]
    %v476 = vld [vmem:[#allocation7 + $0x788] sm:$0xff]
    %v477 = vld [vmem:[#allocation7 + $0x790] sm:$0xff]
    %v478 = vld [vmem:[#allocation7 + $0x798] sm:$0xff]
    %v479 = vld [vmem:[#allocation7 + $0x7a0] sm:$0xff]
    %v480 = vld [vmem:[#allocation7 + $0x7a8] sm:$0xff]
    %v481 = vld [vmem:[#allocation7 + $0x7b0] sm:$0xff]
    %v482 = vld [vmem:[#allocation7 + $0x7b8] sm:$0xff]
    %v483 = vld [vmem:[#allocation7 + $0x7c0] sm:$0xff]
    %v484 = vld [vmem:[#allocation7 + $0x7c8] sm:$0xff]
    %v485 = vld [vmem:[#allocation7 + $0x7d0] sm:$0xff]
    %v486 = vld [vmem:[#allocation7 + $0x7d8] sm:$0xff]
    %v487 = vld [vmem:[#allocation7 + $0x7e0] sm:$0xff]
    %v488 = vld [vmem:[#allocation7 + $0x7e8] sm:$0xff]
    %v489 = vld [vmem:[#allocation7 + $0x7f0] sm:$0xff]
    %v490 = vld [vmem:[#allocation7 + $0x7f8] sm:$0xff]
    %v491 = vld [vmem:[#allocation7 + $0x800] sm:$0xff]
    %v492 = vld [vmem:[#allocation7 + $0x808] sm:$0xff]
    %v493 = vld [vmem:[#allocation7 + $0x810] sm:$0xff]
    %v494 = vld [vmem:[#allocation7 + $0x818] sm:$0xff]
    %v495 = vld [vmem:[#allocation7 + $0x820] sm:$0xff]
    %v496 = vld [vmem:[#allocation7 + $0x828] sm:$0xff]
    %v497 = vld [vmem:[#allocation7 + $0x830] sm:$0xff]
    %v498 = vld [vmem:[#allocation7 + $0x838] sm:$0xff]
    %v499 = vld [vmem:[#allocation7 + $0x840] sm:$0xff]
    %v500 = vld [vmem:[#allocation7 + $0x848] sm:$0xff]
    %v501 = vld [vmem:[#allocation7 + $0x850] sm:$0xff]
    %v502 = vld [vmem:[#allocation7 + $0x858] sm:$0xff]
    %v503 = vld [vmem:[#allocation7 + $0x860] sm:$0xff]
    %v504 = vld [vmem:[#allocation7 + $0x868] sm:$0xff]
    %v505 = vld [vmem:[#allocation7 + $0x870] sm:$0xff]
    %v506 = vld [vmem:[#allocation7 + $0x878] sm:$0xff]
    %v507 = vld [vmem:[#allocation7 + $0x880] sm:$0xff]
    %v508 = vld [vmem:[#allocation7 + $0x888] sm:$0xff]
    %v509 = vld [vmem:[#allocation7 + $0x890] sm:$0xff]
    %v510 = vld [vmem:[#allocation7 + $0x898] sm:$0xff]
    %v511 = vld [vmem:[#allocation7 + $0x8a0] sm:$0xff]
    %v512 = vld [vmem:[#allocation7 + $0x8a8] sm:$0xff]
    %v513 = vld [vmem:[#allocation7 + $0x8b0] sm:$0xff]
    %v514 = vld [vmem:[#allocation7 + $0x8b8] sm:$0xff]
    %v515 = vld [vmem:[#allocation7 + $0x8c0] sm:$0xff]
    %v516 = vld [vmem:[#allocation7 + $0x8c8] sm:$0xff]
    %v517 = vld [vmem:[#allocation7 + $0x8d0] sm:$0xff]
    %v518 = vld [vmem:[#allocation7 + $0x8d8] sm:$0xff]
    %v519 = vld [vmem:[#allocation7 + $0x8e0] sm:$0xff]
    %v520 = vld [vmem:[#allocation7 + $0x8e8] sm:$0xff]
    %v521 = vld [vmem:[#allocation7 + $0x8f0] sm:$0xff]
    %v522 = vld [vmem:[#allocation7 + $0x8f8] sm:$0xff]
    %v523 = vld [vmem:[#allocation7 + $0x900] sm:$0xff]
    %v524 = vld [vmem:[#allocation7 + $0x908] sm:$0xff]
    %v525 = vld [vmem:[#allocation7 + $0x910] sm:$0xff]
    %v526 = vld [vmem:[#allocation7 + $0x918] sm:$0xff]
    %v527 = vld [vmem:[#allocation7 + $0x920] sm:$0xff]
    %v528 = vld [vmem:[#allocation7 + $0x928] sm:$0xff]
    %v529 = vld [vmem:[#allocation7 + $0x930] sm:$0xff]
    %v530 = vld [vmem:[#allocation7 + $0x938] sm:$0xff]
    %v531 = vld [vmem:[#allocation7 + $0x940] sm:$0xff]
    %v532 = vld [vmem:[#allocation7 + $0x948] sm:$0xff]
    %v533 = vld [vmem:[#allocation7 + $0x950] sm:$0xff]
    %v534 = vld [vmem:[#allocation7 + $0x958] sm:$0xff]
    %v535 = vld [vmem:[#allocation7 + $0x960] sm:$0xff]
    %v536 = vld [vmem:[#allocation7 + $0x968] sm:$0xff]
    %v537 = vld [vmem:[#allocation7 + $0x970] sm:$0xff]
    %v538 = vld [vmem:[#allocation7 + $0x978] sm:$0xff]
    %v539 = vld [vmem:[#allocation7 + $0x980] sm:$0xff]
    %v540 = vld [vmem:[#allocation7 + $0x988] sm:$0xff]
    %v541 = vld [vmem:[#allocation7 + $0x990] sm:$0xff]
    %v542 = vld [vmem:[#allocation7 + $0x998] sm:$0xff]
    %v543 = vld [vmem:[#allocation7 + $0x9a0] sm:$0xff]
    %v544 = vld [vmem:[#allocation7 + $0x9a8] sm:$0xff]
    %v545 = vld [vmem:[#allocation7 + $0x9b0] sm:$0xff]
    %v546 = vld [vmem:[#allocation7 + $0x9b8] sm:$0xff]
    %v547 = vld [vmem:[#allocation7 + $0x9c0] sm:$0xff]
    %v548 = vld [vmem:[#allocation7 + $0x9c8] sm:$0xff]
    %v549 = vld [vmem:[#allocation7 + $0x9d0] sm:$0xff]
    %v550 = vld [vmem:[#allocation7 + $0x9d8] sm:$0xff]
    %v551 = vld [vmem:[#allocation7 + $0x9e0] sm:$0xff]
    %v552 = vld [vmem:[#allocation7 + $0x9e8] sm:$0xff]
    %v553 = vld [vmem:[#allocation7 + $0x9f0] sm:$0xff]
    %v554 = vld [vmem:[#allocation7 + $0x9f8] sm:$0xff]
    %v555 = vld [vmem:[#allocation8] sm:$0xf]
    %v557 = vperm.slane %v555, 0
    %v558 = vperm.slane %v555, 1
    %v559 = vperm.slane %v555, 2
    %v560 = vperm.slane %v555, 3
    %566 = vst [vmem:[#allocation1] ss:$9 sm:$0xff] %v219
    %s568 = scalar_lea.vmem [#allocation1], 1
    %569 = vst [vmem:[%s568] ss:$9 sm:$0xff] %v221
    %s571 = scalar_lea.vmem [#allocation1], 2
    %572 = vst [vmem:[%s571] ss:$9 sm:$0xff] %v223
    %s574 = scalar_lea.vmem [#allocation1], 3
    %575 = vst [vmem:[%s574] ss:$9 sm:$0xff] %v225
    %s577 = scalar_lea.vmem [#allocation1], 4
    %578 = vst [vmem:[%s577] ss:$9 sm:$0xff] %v227
    %s580 = scalar_lea.vmem [#allocation1], 5
    %581 = vst [vmem:[%s580] ss:$9 sm:$0xff] %v229
    %s583 = scalar_lea.vmem [#allocation1], 6
    %584 = vst [vmem:[%s583] ss:$9 sm:$0xff] %v231
    %s586 = scalar_lea.vmem [#allocation1], 7
    %587 = vst [vmem:[%s586] ss:$9 sm:$0xff] %v233
    %v588 = vld [vmem:[#allocation1] sm:$0xff]
    %v589 = vld [vmem:[#allocation1 + $0x9] sm:$0xff]
    %v590 = vld [vmem:[#allocation1 + $0x12] sm:$0xff]
    %v591 = vld [vmem:[#allocation1 + $0x1b] sm:$0xff]
    %v592 = vld [vmem:[#allocation1 + $0x24] sm:$0xff]
    %v593 = vld [vmem:[#allocation1 + $0x2d] sm:$0xff]
    %v594 = vld [vmem:[#allocation1 + $0x36] sm:$0xff]
    %v595 = vld [vmem:[#allocation1 + $0x3f] sm:$0xff]
    %597 = vst [vmem:[#allocation1] ss:$9 sm:$0xff] %v220
    %599 = vst [vmem:[%s568] ss:$9 sm:$0xff] %v222
    %601 = vst [vmem:[%s571] ss:$9 sm:$0xff] %v224
    %603 = vst [vmem:[%s574] ss:$9 sm:$0xff] %v226
    %605 = vst [vmem:[%s577] ss:$9 sm:$0xff] %v228
    %607 = vst [vmem:[%s580] ss:$9 sm:$0xff] %v230
    %609 = vst [vmem:[%s583] ss:$9 sm:$0xff] %v232
    %611 = vst [vmem:[%s586] ss:$9 sm:$0xff] %v234
    %v612 = vld [vmem:[#allocation1] sm:$0xff]
    %v613 = vld [vmem:[#allocation1 + $0x9] sm:$0xff]
    %v944 = vunpack.c.l.b16 %v235
    %v945 = vunpack.c.h.b16 %v235
    %v946 = vunpack.c.l.b16 %v236
    %v947 = vunpack.c.h.b16 %v236
    %v948 = vunpack.c.l.b16 %v237
    %v949 = vunpack.c.h.b16 %v237
    %v950 = vunpack.c.l.b16 %v238
    %v951 = vunpack.c.h.b16 %v238
    %v952 = vunpack.c.l.b16 %v239
    %v953 = vunpack.c.h.b16 %v239
    %v954 = vunpack.c.l.b16 %v240
    %v955 = vunpack.c.h.b16 %v240
    %v956 = vunpack.c.l.b16 %v241
    %v957 = vunpack.c.h.b16 %v241
    %v958 = vunpack.c.l.b16 %v242
    %v959 = vunpack.c.h.b16 %v242
    %v960 = vunpack.c.l.b16 %v243
    %v961 = vunpack.c.h.b16 %v243
    %v962 = vunpack.c.l.b16 %v244
    %v963 = vunpack.c.h.b16 %v244
    %v964 = vunpack.c.l.b16 %v245
    %v965 = vunpack.c.h.b16 %v245
    %v966 = vunpack.c.l.b16 %v246
    %v967 = vunpack.c.h.b16 %v246
    %v968 = vunpack.c.l.b16 %v247
    %v969 = vunpack.c.h.b16 %v247
    %v970 = vunpack.c.l.b16 %v248
    %v971 = vunpack.c.h.b16 %v248
    %v972 = vunpack.c.l.b16 %v249
    %v973 = vunpack.c.h.b16 %v249
    %v974 = vunpack.c.l.b16 %v250
    %v975 = vunpack.c.h.b16 %v250
    %v976 = vunpack.c.l.b16 %v251
    %v977 = vunpack.c.h.b16 %v251
    %v978 = vunpack.c.l.b16 %v252
    %v979 = vunpack.c.h.b16 %v252
    %v980 = vunpack.c.l.b16 %v253
    %v981 = vunpack.c.h.b16 %v253
    %v982 = vunpack.c.l.b16 %v254
    %v983 = vunpack.c.h.b16 %v254
    %v984 = vunpack.c.l.b16 %v255
    %v985 = vunpack.c.h.b16 %v255
    %v986 = vunpack.c.l.b16 %v256
    %v987 = vunpack.c.h.b16 %v256
    %v988 = vunpack.c.l.b16 %v257
    %v989 = vunpack.c.h.b16 %v257
    %v990 = vunpack.c.l.b16 %v258
    %v991 = vunpack.c.h.b16 %v258
    %v992 = vunpack.c.l.b16 %v259
    %v993 = vunpack.c.h.b16 %v259
    %v994 = vunpack.c.l.b16 %v260
    %v995 = vunpack.c.h.b16 %v260
    %v996 = vunpack.c.l.b16 %v261
    %v997 = vunpack.c.h.b16 %v261
    %v998 = vunpack.c.l.b16 %v262
    %v999 = vunpack.c.h.b16 %v262
    %v1000 = vunpack.c.l.b16 %v263
    %v1001 = vunpack.c.h.b16 %v263
    %v1002 = vunpack.c.l.b16 %v264
    %v1003 = vunpack.c.h.b16 %v264
    %v1004 = vunpack.c.l.b16 %v265
    %v1005 = vunpack.c.h.b16 %v265
    %v1006 = vunpack.c.l.b16 %v266
    %v1007 = vunpack.c.h.b16 %v266
    %v1008 = vunpack.c.l.b16 %v267
    %v1009 = vunpack.c.h.b16 %v267
    %v1010 = vunpack.c.l.b16 %v268
    %v1011 = vunpack.c.h.b16 %v268
    %v1012 = vunpack.c.l.b16 %v269
    %v1013 = vunpack.c.h.b16 %v269
    %v1014 = vunpack.c.l.b16 %v270
    %v1015 = vunpack.c.h.b16 %v270
    %v1016 = vunpack.c.l.b16 %v271
    %v1017 = vunpack.c.h.b16 %v271
    %v1018 = vunpack.c.l.b16 %v272
    %v1019 = vunpack.c.h.b16 %v272
    %v1020 = vunpack.c.l.b16 %v273
    %v1021 = vunpack.c.h.b16 %v273
    %v1022 = vunpack.c.l.b16 %v274
    %v1023 = vunpack.c.h.b16 %v274
    %v1024 = vunpack.c.l.b16 %v275
    %v1025 = vunpack.c.h.b16 %v275
    %v1026 = vunpack.c.l.b16 %v276
    %v1027 = vunpack.c.h.b16 %v276
    %v1028 = vunpack.c.l.b16 %v277
    %v1029 = vunpack.c.h.b16 %v277
    %v1030 = vunpack.c.l.b16 %v278
    %v1031 = vunpack.c.h.b16 %v278
    %v1032 = vunpack.c.l.b16 %v279
    %v1033 = vunpack.c.h.b16 %v279
    %v1034 = vunpack.c.l.b16 %v280
    %v1035 = vunpack.c.h.b16 %v280
    %v1036 = vunpack.c.l.b16 %v281
    %v1037 = vunpack.c.h.b16 %v281
    %v1038 = vunpack.c.l.b16 %v282
    %v1039 = vunpack.c.h.b16 %v282
    %v1040 = vunpack.c.l.b16 %v283
    %v1041 = vunpack.c.h.b16 %v283
    %v1042 = vunpack.c.l.b16 %v284
    %v1043 = vunpack.c.h.b16 %v284
    %v1044 = vunpack.c.l.b16 %v285
    %v1045 = vunpack.c.h.b16 %v285
    %v1046 = vunpack.c.l.b16 %v286
    %v1047 = vunpack.c.h.b16 %v286
    %v1048 = vunpack.c.l.b16 %v287
    %v1049 = vunpack.c.h.b16 %v287
    %v1050 = vunpack.c.l.b16 %v288
    %v1051 = vunpack.c.h.b16 %v288
    %v1052 = vunpack.c.l.b16 %v289
    %v1053 = vunpack.c.h.b16 %v289
    %v1054 = vunpack.c.l.b16 %v290
    %v1055 = vunpack.c.h.b16 %v290
    %v1056 = vunpack.c.l.b16 %v291
    %v1057 = vunpack.c.h.b16 %v291
    %v1058 = vunpack.c.l.b16 %v292
    %v1059 = vunpack.c.h.b16 %v292
    %v1060 = vunpack.c.l.b16 %v293
    %v1061 = vunpack.c.h.b16 %v293
    %v1062 = vunpack.c.l.b16 %v294
    %v1063 = vunpack.c.h.b16 %v294
    %v1064 = vunpack.c.l.b16 %v295
    %v1065 = vunpack.c.h.b16 %v295
    %v1066 = vunpack.c.l.b16 %v296
    %v1067 = vunpack.c.h.b16 %v296
    %v1068 = vunpack.c.l.b16 %v297
    %v1069 = vunpack.c.h.b16 %v297
    %v1070 = vunpack.c.l.b16 %v298
    %v1071 = vunpack.c.h.b16 %v298
    %v1072 = vunpack.c.l.b16 %v299
    %v1073 = vunpack.c.h.b16 %v299
    %v1074 = vunpack.c.l.b16 %v300
    %v1075 = vunpack.c.h.b16 %v300
    %v1076 = vunpack.c.l.b16 %v301
    %v1077 = vunpack.c.h.b16 %v301
    %v1078 = vunpack.c.l.b16 %v302
    %v1079 = vunpack.c.h.b16 %v302
    %v1080 = vunpack.c.l.b16 %v303
    %v1081 = vunpack.c.h.b16 %v303
    %v1082 = vunpack.c.l.b16 %v304
    %v1083 = vunpack.c.h.b16 %v304
    %v1084 = vunpack.c.l.b16 %v305
    %v1085 = vunpack.c.h.b16 %v305
    %v1086 = vunpack.c.l.b16 %v306
    %v1087 = vunpack.c.h.b16 %v306
    %v1088 = vunpack.c.l.b16 %v307
    %v1089 = vunpack.c.h.b16 %v307
    %v1090 = vunpack.c.l.b16 %v308
    %v1091 = vunpack.c.h.b16 %v308
    %v1092 = vunpack.c.l.b16 %v309
    %v1093 = vunpack.c.h.b16 %v309
    %v1094 = vunpack.c.l.b16 %v310
    %v1095 = vunpack.c.h.b16 %v310
    %v1096 = vunpack.c.l.b16 %v311
    %v1097 = vunpack.c.h.b16 %v311
    %v1098 = vunpack.c.l.b16 %v312
    %v1099 = vunpack.c.h.b16 %v312
    %v1100 = vunpack.c.l.b16 %v313
    %v1101 = vunpack.c.h.b16 %v313
    %v1102 = vunpack.c.l.b16 %v314
    %v1103 = vunpack.c.h.b16 %v314
    %v1104 = vunpack.c.l.b16 %v315
    %v1105 = vunpack.c.h.b16 %v315
    %v1106 = vunpack.c.l.b16 %v316
    %v1107 = vunpack.c.h.b16 %v316
    %v1108 = vunpack.c.l.b16 %v317
    %v1109 = vunpack.c.h.b16 %v317
    %v1110 = vunpack.c.l.b16 %v318
    %v1111 = vunpack.c.h.b16 %v318
    %v1112 = vunpack.c.l.b16 %v319
    %v1113 = vunpack.c.h.b16 %v319
    %v1114 = vunpack.c.l.b16 %v320
    %v1115 = vunpack.c.h.b16 %v320
    %v1116 = vunpack.c.l.b16 %v321
    %v1117 = vunpack.c.h.b16 %v321
    %v1118 = vunpack.c.l.b16 %v322
    %v1119 = vunpack.c.h.b16 %v322
    %v1120 = vunpack.c.l.b16 %v323
    %v1121 = vunpack.c.h.b16 %v323
    %v1122 = vunpack.c.l.b16 %v324
    %v1123 = vunpack.c.h.b16 %v324
    %v1124 = vunpack.c.l.b16 %v325
    %v1125 = vunpack.c.h.b16 %v325
    %v1126 = vunpack.c.l.b16 %v326
    %v1127 = vunpack.c.h.b16 %v326
    %v1128 = vunpack.c.l.b16 %v327
    %v1129 = vunpack.c.h.b16 %v327
    %v1130 = vunpack.c.l.b16 %v328
    %v1131 = vunpack.c.h.b16 %v328
    %v1132 = vunpack.c.l.b16 %v329
    %v1133 = vunpack.c.h.b16 %v329
    %v1134 = vunpack.c.l.b16 %v330
    %v1135 = vunpack.c.h.b16 %v330
    %v1136 = vunpack.c.l.b16 %v331
    %v1137 = vunpack.c.h.b16 %v331
    %v1138 = vunpack.c.l.b16 %v332
    %v1139 = vunpack.c.h.b16 %v332
    %v1140 = vunpack.c.l.b16 %v333
    %v1141 = vunpack.c.h.b16 %v333
    %v1142 = vunpack.c.l.b16 %v334
    %v1143 = vunpack.c.h.b16 %v334
    %v1144 = vunpack.c.l.b16 %v335
    %v1145 = vunpack.c.h.b16 %v335
    %v1146 = vunpack.c.l.b16 %v336
    %v1147 = vunpack.c.h.b16 %v336
    %v1148 = vunpack.c.l.b16 %v337
    %v1149 = vunpack.c.h.b16 %v337
    %v1150 = vunpack.c.l.b16 %v338
    %v1151 = vunpack.c.h.b16 %v338
    %v1152 = vunpack.c.l.b16 %v339
    %v1153 = vunpack.c.h.b16 %v339
    %v1154 = vunpack.c.l.b16 %v340
    %v1155 = vunpack.c.h.b16 %v340
    %v1156 = vunpack.c.l.b16 %v341
    %v1157 = vunpack.c.h.b16 %v341
    %v1158 = vunpack.c.l.b16 %v342
    %v1159 = vunpack.c.h.b16 %v342
    %v1160 = vunpack.c.l.b16 %v343
    %v1161 = vunpack.c.h.b16 %v343
    %v1162 = vunpack.c.l.b16 %v344
    %v1163 = vunpack.c.h.b16 %v344
    %v1164 = vunpack.c.l.b16 %v345
    %v1165 = vunpack.c.h.b16 %v345
    %v1166 = vunpack.c.l.b16 %v346
    %v1167 = vunpack.c.h.b16 %v346
    %v1168 = vunpack.c.l.b16 %v347
    %v1169 = vunpack.c.h.b16 %v347
    %v1170 = vunpack.c.l.b16 %v348
    %v1171 = vunpack.c.h.b16 %v348
    %v1172 = vunpack.c.l.b16 %v349
    %v1173 = vunpack.c.h.b16 %v349
    %v1174 = vunpack.c.l.b16 %v350
    %v1175 = vunpack.c.h.b16 %v350
    %v1176 = vunpack.c.l.b16 %v351
    %v1177 = vunpack.c.h.b16 %v351
    %v1178 = vunpack.c.l.b16 %v352
    %v1179 = vunpack.c.h.b16 %v352
    %v1180 = vunpack.c.l.b16 %v353
    %v1181 = vunpack.c.h.b16 %v353
    %v1182 = vunpack.c.l.b16 %v354
    %v1183 = vunpack.c.h.b16 %v354
    %v1184 = vunpack.c.l.b16 %v355
    %v1185 = vunpack.c.h.b16 %v355
    %v1186 = vunpack.c.l.b16 %v356
    %v1187 = vunpack.c.h.b16 %v356
    %v1188 = vunpack.c.l.b16 %v357
    %v1189 = vunpack.c.h.b16 %v357
    %v1190 = vunpack.c.l.b16 %v358
    %v1191 = vunpack.c.h.b16 %v358
    %v1192 = vunpack.c.l.b16 %v359
    %v1193 = vunpack.c.h.b16 %v359
    %v1194 = vunpack.c.l.b16 %v360
    %v1195 = vunpack.c.h.b16 %v360
    %v1196 = vunpack.c.l.b16 %v361
    %v1197 = vunpack.c.h.b16 %v361
    %v1198 = vunpack.c.l.b16 %v362
    %v1199 = vunpack.c.h.b16 %v362
    %v1200 = vunpack.c.l.b16 %v363
    %v1201 = vunpack.c.h.b16 %v363
    %v1202 = vunpack.c.l.b16 %v364
    %v1203 = vunpack.c.h.b16 %v364
    %v1204 = vunpack.c.l.b16 %v365
    %v1205 = vunpack.c.h.b16 %v365
    %v1206 = vunpack.c.l.b16 %v366
    %v1207 = vunpack.c.h.b16 %v366
    %v1208 = vunpack.c.l.b16 %v367
    %v1209 = vunpack.c.h.b16 %v367
    %v1210 = vunpack.c.l.b16 %v368
    %v1211 = vunpack.c.h.b16 %v368
    %v1212 = vunpack.c.l.b16 %v369
    %v1213 = vunpack.c.h.b16 %v369
    %v1214 = vunpack.c.l.b16 %v370
    %v1215 = vunpack.c.h.b16 %v370
    %v1216 = vunpack.c.l.b16 %v371
    %v1217 = vunpack.c.h.b16 %v371
    %v1218 = vunpack.c.l.b16 %v372
    %v1219 = vunpack.c.h.b16 %v372
    %v1220 = vunpack.c.l.b16 %v373
    %v1221 = vunpack.c.h.b16 %v373
    %v1222 = vunpack.c.l.b16 %v374
    %v1223 = vunpack.c.h.b16 %v374
    %v1224 = vunpack.c.l.b16 %v375
    %v1225 = vunpack.c.h.b16 %v375
    %v1226 = vunpack.c.l.b16 %v376
    %v1227 = vunpack.c.h.b16 %v376
    %v1228 = vunpack.c.l.b16 %v377
    %v1229 = vunpack.c.h.b16 %v377
    %v1230 = vunpack.c.l.b16 %v378
    %v1231 = vunpack.c.h.b16 %v378
    %v1232 = vunpack.c.l.b16 %v379
    %v1233 = vunpack.c.h.b16 %v379
    %v1234 = vunpack.c.l.b16 %v380
    %v1235 = vunpack.c.h.b16 %v380
    %v1236 = vunpack.c.l.b16 %v381
    %v1237 = vunpack.c.h.b16 %v381
    %v1238 = vunpack.c.l.b16 %v382
    %v1239 = vunpack.c.h.b16 %v382
    %v1240 = vunpack.c.l.b16 %v383
    %v1241 = vunpack.c.h.b16 %v383
    %v1242 = vunpack.c.l.b16 %v384
    %v1243 = vunpack.c.h.b16 %v384
    %v1244 = vunpack.c.l.b16 %v385
    %v1245 = vunpack.c.h.b16 %v385
    %v1246 = vunpack.c.l.b16 %v386
    %v1247 = vunpack.c.h.b16 %v386
    %v1248 = vunpack.c.l.b16 %v387
    %v1249 = vunpack.c.h.b16 %v387
    %v1250 = vunpack.c.l.b16 %v388
    %v1251 = vunpack.c.h.b16 %v388
    %v1252 = vunpack.c.l.b16 %v389
    %v1253 = vunpack.c.h.b16 %v389
    %v1254 = vunpack.c.l.b16 %v390
    %v1255 = vunpack.c.h.b16 %v390
    %v1256 = vunpack.c.l.b16 %v391
    %v1257 = vunpack.c.h.b16 %v391
    %v1258 = vunpack.c.l.b16 %v392
    %v1259 = vunpack.c.h.b16 %v392
    %v1260 = vunpack.c.l.b16 %v393
    %v1261 = vunpack.c.h.b16 %v393
    %v1262 = vunpack.c.l.b16 %v394
    %v1263 = vunpack.c.h.b16 %v394
    %v1264 = vunpack.c.l.b16 %v395
    %v1265 = vunpack.c.h.b16 %v395
    %v1266 = vunpack.c.l.b16 %v396
    %v1267 = vunpack.c.h.b16 %v396
    %v1268 = vunpack.c.l.b16 %v397
    %v1269 = vunpack.c.h.b16 %v397
    %v1270 = vunpack.c.l.b16 %v398
    %v1271 = vunpack.c.h.b16 %v398
    %v1272 = vunpack.c.l.b16 %v399
    %v1273 = vunpack.c.h.b16 %v399
    %v1274 = vunpack.c.l.b16 %v400
    %v1275 = vunpack.c.h.b16 %v400
    %v1276 = vunpack.c.l.b16 %v401
    %v1277 = vunpack.c.h.b16 %v401
    %v1278 = vunpack.c.l.b16 %v402
    %v1279 = vunpack.c.h.b16 %v402
    %v1280 = vunpack.c.l.b16 %v403
    %v1281 = vunpack.c.h.b16 %v403
    %v1282 = vunpack.c.l.b16 %v404
    %v1283 = vunpack.c.h.b16 %v404
    %v1284 = vunpack.c.l.b16 %v405
    %v1285 = vunpack.c.h.b16 %v405
    %v1286 = vunpack.c.l.b16 %v406
    %v1287 = vunpack.c.h.b16 %v406
    %v1288 = vunpack.c.l.b16 %v407
    %v1289 = vunpack.c.h.b16 %v407
    %v1290 = vunpack.c.l.b16 %v408
    %v1291 = vunpack.c.h.b16 %v408
    %v1292 = vunpack.c.l.b16 %v409
    %v1293 = vunpack.c.h.b16 %v409
    %v1294 = vunpack.c.l.b16 %v410
    %v1295 = vunpack.c.h.b16 %v410
    %v1296 = vunpack.c.l.b16 %v411
    %v1297 = vunpack.c.h.b16 %v411
    %v1298 = vunpack.c.l.b16 %v412
    %v1299 = vunpack.c.h.b16 %v412
    %v1300 = vunpack.c.l.b16 %v413
    %v1301 = vunpack.c.h.b16 %v413
    %v1302 = vunpack.c.l.b16 %v414
    %v1303 = vunpack.c.h.b16 %v414
    %v1304 = vunpack.c.l.b16 %v415
    %v1305 = vunpack.c.h.b16 %v415
    %v1306 = vunpack.c.l.b16 %v416
    %v1307 = vunpack.c.h.b16 %v416
    %v1308 = vunpack.c.l.b16 %v417
    %v1309 = vunpack.c.h.b16 %v417
    %v1310 = vunpack.c.l.b16 %v418
    %v1311 = vunpack.c.h.b16 %v418
    %v1312 = vunpack.c.l.b16 %v419
    %v1313 = vunpack.c.h.b16 %v419
    %v1314 = vunpack.c.l.b16 %v420
    %v1315 = vunpack.c.h.b16 %v420
    %v1316 = vunpack.c.l.b16 %v421
    %v1317 = vunpack.c.h.b16 %v421
    %v1318 = vunpack.c.l.b16 %v422
    %v1319 = vunpack.c.h.b16 %v422
    %v1320 = vunpack.c.l.b16 %v423
    %v1321 = vunpack.c.h.b16 %v423
    %v1322 = vunpack.c.l.b16 %v424
    %v1323 = vunpack.c.h.b16 %v424
    %v1324 = vunpack.c.l.b16 %v425
    %v1325 = vunpack.c.h.b16 %v425
    %v1326 = vunpack.c.l.b16 %v426
    %v1327 = vunpack.c.h.b16 %v426
    %v1328 = vunpack.c.l.b16 %v427
    %v1329 = vunpack.c.h.b16 %v427
    %v1330 = vunpack.c.l.b16 %v428
    %v1331 = vunpack.c.h.b16 %v428
    %v1332 = vunpack.c.l.b16 %v429
    %v1333 = vunpack.c.h.b16 %v429
    %v1334 = vunpack.c.l.b16 %v430
    %v1335 = vunpack.c.h.b16 %v430
    %v1336 = vunpack.c.l.b16 %v431
    %v1337 = vunpack.c.h.b16 %v431
    %v1338 = vunpack.c.l.b16 %v432
    %v1339 = vunpack.c.h.b16 %v432
    %v1340 = vunpack.c.l.b16 %v433
    %v1341 = vunpack.c.h.b16 %v433
    %v1342 = vunpack.c.l.b16 %v434
    %v1343 = vunpack.c.h.b16 %v434
    %v1344 = vunpack.c.l.b16 %v435
    %v1345 = vunpack.c.h.b16 %v435
    %v1346 = vunpack.c.l.b16 %v436
    %v1347 = vunpack.c.h.b16 %v436
    %v1348 = vunpack.c.l.b16 %v437
    %v1349 = vunpack.c.h.b16 %v437
    %v1350 = vunpack.c.l.b16 %v438
    %v1351 = vunpack.c.h.b16 %v438
    %v1352 = vunpack.c.l.b16 %v439
    %v1353 = vunpack.c.h.b16 %v439
    %v1354 = vunpack.c.l.b16 %v440
    %v1355 = vunpack.c.h.b16 %v440
    %v1356 = vunpack.c.l.b16 %v441
    %v1357 = vunpack.c.h.b16 %v441
    %v1358 = vunpack.c.l.b16 %v442
    %v1359 = vunpack.c.h.b16 %v442
    %v1360 = vunpack.c.l.b16 %v443
    %v1361 = vunpack.c.h.b16 %v443
    %v1362 = vunpack.c.l.b16 %v444
    %v1363 = vunpack.c.h.b16 %v444
    %v1364 = vunpack.c.l.b16 %v445
    %v1365 = vunpack.c.h.b16 %v445
    %v1366 = vunpack.c.l.b16 %v446
    %v1367 = vunpack.c.h.b16 %v446
    %v1368 = vunpack.c.l.b16 %v447
    %v1369 = vunpack.c.h.b16 %v447
    %v1370 = vunpack.c.l.b16 %v448
    %v1371 = vunpack.c.h.b16 %v448
    %v1372 = vunpack.c.l.b16 %v449
    %v1373 = vunpack.c.h.b16 %v449
    %v1374 = vunpack.c.l.b16 %v450
    %v1375 = vunpack.c.h.b16 %v450
    %v1376 = vunpack.c.l.b16 %v451
    %v1377 = vunpack.c.h.b16 %v451
    %v1378 = vunpack.c.l.b16 %v452
    %v1379 = vunpack.c.h.b16 %v452
    %v1380 = vunpack.c.l.b16 %v453
    %v1381 = vunpack.c.h.b16 %v453
    %v1382 = vunpack.c.l.b16 %v454
    %v1383 = vunpack.c.h.b16 %v454
    %v1384 = vunpack.c.l.b16 %v455
    %v1385 = vunpack.c.h.b16 %v455
    %v1386 = vunpack.c.l.b16 %v456
    %v1387 = vunpack.c.h.b16 %v456
    %v1388 = vunpack.c.l.b16 %v457
    %v1389 = vunpack.c.h.b16 %v457
    %v1390 = vunpack.c.l.b16 %v458
    %v1391 = vunpack.c.h.b16 %v458
    %v1392 = vunpack.c.l.b16 %v459
    %v1393 = vunpack.c.h.b16 %v459
    %v1394 = vunpack.c.l.b16 %v460
    %v1395 = vunpack.c.h.b16 %v460
    %v1396 = vunpack.c.l.b16 %v461
    %v1397 = vunpack.c.h.b16 %v461
    %v1398 = vunpack.c.l.b16 %v462
    %v1399 = vunpack.c.h.b16 %v462
    %v1400 = vunpack.c.l.b16 %v463
    %v1401 = vunpack.c.h.b16 %v463
    %v1402 = vunpack.c.l.b16 %v464
    %v1403 = vunpack.c.h.b16 %v464
    %v1404 = vunpack.c.l.b16 %v465
    %v1405 = vunpack.c.h.b16 %v465
    %v1406 = vunpack.c.l.b16 %v466
    %v1407 = vunpack.c.h.b16 %v466
    %v1408 = vunpack.c.l.b16 %v467
    %v1409 = vunpack.c.h.b16 %v467
    %v1410 = vunpack.c.l.b16 %v468
    %v1411 = vunpack.c.h.b16 %v468
    %v1412 = vunpack.c.l.b16 %v469
    %v1413 = vunpack.c.h.b16 %v469
    %v1414 = vunpack.c.l.b16 %v470
    %v1415 = vunpack.c.h.b16 %v470
    %v1416 = vunpack.c.l.b16 %v471
    %v1417 = vunpack.c.h.b16 %v471
    %v1418 = vunpack.c.l.b16 %v472
    %v1419 = vunpack.c.h.b16 %v472
    %v1420 = vunpack.c.l.b16 %v473
    %v1421 = vunpack.c.h.b16 %v473
    %v1422 = vunpack.c.l.b16 %v474
    %v1423 = vunpack.c.h.b16 %v474
    %v1424 = vunpack.c.l.b16 %v475
    %v1425 = vunpack.c.h.b16 %v475
    %v1426 = vunpack.c.l.b16 %v476
    %v1427 = vunpack.c.h.b16 %v476
    %v1428 = vunpack.c.l.b16 %v477
    %v1429 = vunpack.c.h.b16 %v477
    %v1430 = vunpack.c.l.b16 %v478
    %v1431 = vunpack.c.h.b16 %v478
    %v1432 = vunpack.c.l.b16 %v479
    %v1433 = vunpack.c.h.b16 %v479
    %v1434 = vunpack.c.l.b16 %v480
    %v1435 = vunpack.c.h.b16 %v480
    %v1436 = vunpack.c.l.b16 %v481
    %v1437 = vunpack.c.h.b16 %v481
    %v1438 = vunpack.c.l.b16 %v482
    %v1439 = vunpack.c.h.b16 %v482
    %v1440 = vunpack.c.l.b16 %v483
    %v1441 = vunpack.c.h.b16 %v483
    %v1442 = vunpack.c.l.b16 %v484
    %v1443 = vunpack.c.h.b16 %v484
    %v1444 = vunpack.c.l.b16 %v485
    %v1445 = vunpack.c.h.b16 %v485
    %v1446 = vunpack.c.l.b16 %v486
    %v1447 = vunpack.c.h.b16 %v486
    %v1448 = vunpack.c.l.b16 %v487
    %v1449 = vunpack.c.h.b16 %v487
    %v1450 = vunpack.c.l.b16 %v488
    %v1451 = vunpack.c.h.b16 %v488
    %v1452 = vunpack.c.l.b16 %v489
    %v1453 = vunpack.c.h.b16 %v489
    %v1454 = vunpack.c.l.b16 %v490
    %v1455 = vunpack.c.h.b16 %v490
    %v1456 = vunpack.c.l.b16 %v491
    %v1457 = vunpack.c.h.b16 %v491
    %v1458 = vunpack.c.l.b16 %v492
    %v1459 = vunpack.c.h.b16 %v492
    %v1460 = vunpack.c.l.b16 %v493
    %v1461 = vunpack.c.h.b16 %v493
    %v1462 = vunpack.c.l.b16 %v494
    %v1463 = vunpack.c.h.b16 %v494
    %v1464 = vunpack.c.l.b16 %v495
    %v1465 = vunpack.c.h.b16 %v495
    %v1466 = vunpack.c.l.b16 %v496
    %v1467 = vunpack.c.h.b16 %v496
    %v1468 = vunpack.c.l.b16 %v497
    %v1469 = vunpack.c.h.b16 %v497
    %v1470 = vunpack.c.l.b16 %v498
    %v1471 = vunpack.c.h.b16 %v498
    %v1472 = vunpack.c.l.b16 %v499
    %v1473 = vunpack.c.h.b16 %v499
    %v1474 = vunpack.c.l.b16 %v500
    %v1475 = vunpack.c.h.b16 %v500
    %v1476 = vunpack.c.l.b16 %v501
    %v1477 = vunpack.c.h.b16 %v501
    %v1478 = vunpack.c.l.b16 %v502
    %v1479 = vunpack.c.h.b16 %v502
    %v1480 = vunpack.c.l.b16 %v503
    %v1481 = vunpack.c.h.b16 %v503
    %v1482 = vunpack.c.l.b16 %v504
    %v1483 = vunpack.c.h.b16 %v504
    %v1484 = vunpack.c.l.b16 %v505
    %v1485 = vunpack.c.h.b16 %v505
    %v1486 = vunpack.c.l.b16 %v506
    %v1487 = vunpack.c.h.b16 %v506
    %v1488 = vunpack.c.l.b16 %v507
    %v1489 = vunpack.c.h.b16 %v507
    %v1490 = vunpack.c.l.b16 %v508
    %v1491 = vunpack.c.h.b16 %v508
    %v1492 = vunpack.c.l.b16 %v509
    %v1493 = vunpack.c.h.b16 %v509
    %v1494 = vunpack.c.l.b16 %v510
    %v1495 = vunpack.c.h.b16 %v510
    %v1496 = vunpack.c.l.b16 %v511
    %v1497 = vunpack.c.h.b16 %v511
    %v1498 = vunpack.c.l.b16 %v512
    %v1499 = vunpack.c.h.b16 %v512
    %v1500 = vunpack.c.l.b16 %v513
    %v1501 = vunpack.c.h.b16 %v513
    %v1502 = vunpack.c.l.b16 %v514
    %v1503 = vunpack.c.h.b16 %v514
    %v1504 = vunpack.c.l.b16 %v515
    %v1505 = vunpack.c.h.b16 %v515
    %v1506 = vunpack.c.l.b16 %v516
    %v1507 = vunpack.c.h.b16 %v516
    %v1508 = vunpack.c.l.b16 %v517
    %v1509 = vunpack.c.h.b16 %v517
    %v1510 = vunpack.c.l.b16 %v518
    %v1511 = vunpack.c.h.b16 %v518
    %v1512 = vunpack.c.l.b16 %v519
    %v1513 = vunpack.c.h.b16 %v519
    %v1514 = vunpack.c.l.b16 %v520
    %v1515 = vunpack.c.h.b16 %v520
    %v1516 = vunpack.c.l.b16 %v521
    %v1517 = vunpack.c.h.b16 %v521
    %v1518 = vunpack.c.l.b16 %v522
    %v1519 = vunpack.c.h.b16 %v522
    %v1520 = vunpack.c.l.b16 %v523
    %v1521 = vunpack.c.h.b16 %v523
    %v1522 = vunpack.c.l.b16 %v524
    %v1523 = vunpack.c.h.b16 %v524
    %v1524 = vunpack.c.l.b16 %v525
    %v1525 = vunpack.c.h.b16 %v525
    %v1526 = vunpack.c.l.b16 %v526
    %v1527 = vunpack.c.h.b16 %v526
    %v1528 = vunpack.c.l.b16 %v527
    %v1529 = vunpack.c.h.b16 %v527
    %v1530 = vunpack.c.l.b16 %v528
    %v1531 = vunpack.c.h.b16 %v528
    %v1532 = vunpack.c.l.b16 %v529
    %v1533 = vunpack.c.h.b16 %v529
    %v1534 = vunpack.c.l.b16 %v530
    %v1535 = vunpack.c.h.b16 %v530
    %v1536 = vunpack.c.l.b16 %v531
    %v1537 = vunpack.c.h.b16 %v531
    %v1538 = vunpack.c.l.b16 %v532
    %v1539 = vunpack.c.h.b16 %v532
    %v1540 = vunpack.c.l.b16 %v533
    %v1541 = vunpack.c.h.b16 %v533
    %v1542 = vunpack.c.l.b16 %v534
    %v1543 = vunpack.c.h.b16 %v534
    %v1544 = vunpack.c.l.b16 %v535
    %v1545 = vunpack.c.h.b16 %v535
    %v1546 = vunpack.c.l.b16 %v536
    %v1547 = vunpack.c.h.b16 %v536
    %v1548 = vunpack.c.l.b16 %v537
    %v1549 = vunpack.c.h.b16 %v537
    %v1550 = vunpack.c.l.b16 %v538
    %v1551 = vunpack.c.h.b16 %v538
    %v1552 = vunpack.c.l.b16 %v539
    %v1553 = vunpack.c.h.b16 %v539
    %v1554 = vunpack.c.l.b16 %v540
    %v1555 = vunpack.c.h.b16 %v540
    %v1556 = vunpack.c.l.b16 %v541
    %v1557 = vunpack.c.h.b16 %v541
    %v1558 = vunpack.c.l.b16 %v542
    %v1559 = vunpack.c.h.b16 %v542
    %v1560 = vunpack.c.l.b16 %v543
    %v1561 = vunpack.c.h.b16 %v543
    %v1562 = vunpack.c.l.b16 %v544
    %v1563 = vunpack.c.h.b16 %v544
    %v1564 = vunpack.c.l.b16 %v545
    %v1565 = vunpack.c.h.b16 %v545
    %v1566 = vunpack.c.l.b16 %v546
    %v1567 = vunpack.c.h.b16 %v546
    %v1568 = vunpack.c.l.b16 %v547
    %v1569 = vunpack.c.h.b16 %v547
    %v1570 = vunpack.c.l.b16 %v548
    %v1571 = vunpack.c.h.b16 %v548
    %v1572 = vunpack.c.l.b16 %v549
    %v1573 = vunpack.c.h.b16 %v549
    %v1574 = vunpack.c.l.b16 %v550
    %v1575 = vunpack.c.h.b16 %v550
    %v1576 = vunpack.c.l.b16 %v551
    %v1577 = vunpack.c.h.b16 %v551
    %v1578 = vunpack.c.l.b16 %v552
    %v1579 = vunpack.c.h.b16 %v552
    %v1580 = vunpack.c.l.b16 %v553
    %v1581 = vunpack.c.h.b16 %v553
    %v1582 = vunpack.c.l.b16 %v554
    %v1583 = vunpack.c.h.b16 %v554
    %v1584 = vpack.c.b16 %v948, %v944
    %v1585 = vpack.c.b16 %v949, %v945
    %v1586 = vpack.c.b16 %v950, %v946
    %v1587 = vpack.c.b16 %v951, %v947
    %v1588 = vpack.c.b16 %v956, %v952
    %v1589 = vpack.c.b16 %v957, %v953
    %v1590 = vpack.c.b16 %v958, %v954
    %v1591 = vpack.c.b16 %v959, %v955
    %v1592 = vpack.c.b16 %v964, %v960
    %v1593 = vpack.c.b16 %v965, %v961
    %v1594 = vpack.c.b16 %v966, %v962
    %v1595 = vpack.c.b16 %v967, %v963
    %v1596 = vpack.c.b16 %v972, %v968
    %v1597 = vpack.c.b16 %v973, %v969
    %v1598 = vpack.c.b16 %v974, %v970
    %v1599 = vpack.c.b16 %v975, %v971
    %v1600 = vpack.c.b16 %v980, %v976
    %v1601 = vpack.c.b16 %v981, %v977
    %v1602 = vpack.c.b16 %v982, %v978
    %v1603 = vpack.c.b16 %v983, %v979
    %v1604 = vpack.c.b16 %v988, %v984
    %v1605 = vpack.c.b16 %v989, %v985
    %v1606 = vpack.c.b16 %v990, %v986
    %v1607 = vpack.c.b16 %v991, %v987
    %v1608 = vpack.c.b16 %v996, %v992
    %v1609 = vpack.c.b16 %v997, %v993
    %v1610 = vpack.c.b16 %v998, %v994
    %v1611 = vpack.c.b16 %v999, %v995
    %v1612 = vpack.c.b16 %v1004, %v1000
    %v1613 = vpack.c.b16 %v1005, %v1001
    %v1614 = vpack.c.b16 %v1006, %v1002
    %v1615 = vpack.c.b16 %v1007, %v1003
    %v1616 = vpack.c.b16 %v1012, %v1008
    %v1617 = vpack.c.b16 %v1013, %v1009
    %v1618 = vpack.c.b16 %v1014, %v1010
    %v1619 = vpack.c.b16 %v1015, %v1011
    %v1620 = vpack.c.b16 %v1020, %v1016
    %v1621 = vpack.c.b16 %v1021, %v1017
    %v1622 = vpack.c.b16 %v1022, %v1018
    %v1623 = vpack.c.b16 %v1023, %v1019
    %v1624 = vpack.c.b16 %v1028, %v1024
    %v1625 = vpack.c.b16 %v1029, %v1025
    %v1626 = vpack.c.b16 %v1030, %v1026
    %v1627 = vpack.c.b16 %v1031, %v1027
    %v1628 = vpack.c.b16 %v1036, %v1032
    %v1629 = vpack.c.b16 %v1037, %v1033
    %v1630 = vpack.c.b16 %v1038, %v1034
    %v1631 = vpack.c.b16 %v1039, %v1035
    %v1632 = vpack.c.b16 %v1044, %v1040
    %v1633 = vpack.c.b16 %v1045, %v1041
    %v1634 = vpack.c.b16 %v1046, %v1042
    %v1635 = vpack.c.b16 %v1047, %v1043
    %v1636 = vpack.c.b16 %v1052, %v1048
    %v1637 = vpack.c.b16 %v1053, %v1049
    %v1638 = vpack.c.b16 %v1054, %v1050
    %v1639 = vpack.c.b16 %v1055, %v1051
    %v1640 = vpack.c.b16 %v1060, %v1056
    %v1641 = vpack.c.b16 %v1061, %v1057
    %v1642 = vpack.c.b16 %v1062, %v1058
    %v1643 = vpack.c.b16 %v1063, %v1059
    %v1644 = vpack.c.b16 %v1068, %v1064
    %v1645 = vpack.c.b16 %v1069, %v1065
    %v1646 = vpack.c.b16 %v1070, %v1066
    %v1647 = vpack.c.b16 %v1071, %v1067
    %v1648 = vpack.c.b16 %v1076, %v1072
    %v1649 = vpack.c.b16 %v1077, %v1073
    %v1650 = vpack.c.b16 %v1078, %v1074
    %v1651 = vpack.c.b16 %v1079, %v1075
    %v1652 = vpack.c.b16 %v1084, %v1080
    %v1653 = vpack.c.b16 %v1085, %v1081
    %v1654 = vpack.c.b16 %v1086, %v1082
    %v1655 = vpack.c.b16 %v1087, %v1083
    %v1656 = vpack.c.b16 %v1092, %v1088
    %v1657 = vpack.c.b16 %v1093, %v1089
    %v1658 = vpack.c.b16 %v1094, %v1090
    %v1659 = vpack.c.b16 %v1095, %v1091
    %v1660 = vpack.c.b16 %v1100, %v1096
    %v1661 = vpack.c.b16 %v1101, %v1097
    %v1662 = vpack.c.b16 %v1102, %v1098
    %v1663 = vpack.c.b16 %v1103, %v1099
    %v1664 = vpack.c.b16 %v1108, %v1104
    %v1665 = vpack.c.b16 %v1109, %v1105
    %v1666 = vpack.c.b16 %v1110, %v1106
    %v1667 = vpack.c.b16 %v1111, %v1107
    %v1668 = vpack.c.b16 %v1116, %v1112
    %v1669 = vpack.c.b16 %v1117, %v1113
    %v1670 = vpack.c.b16 %v1118, %v1114
    %v1671 = vpack.c.b16 %v1119, %v1115
    %v1672 = vpack.c.b16 %v1124, %v1120
    %v1673 = vpack.c.b16 %v1125, %v1121
    %v1674 = vpack.c.b16 %v1126, %v1122
    %v1675 = vpack.c.b16 %v1127, %v1123
    %v1676 = vpack.c.b16 %v1132, %v1128
    %v1677 = vpack.c.b16 %v1133, %v1129
    %v1678 = vpack.c.b16 %v1134, %v1130
    %v1679 = vpack.c.b16 %v1135, %v1131
    %v1680 = vpack.c.b16 %v1140, %v1136
    %v1681 = vpack.c.b16 %v1141, %v1137
    %v1682 = vpack.c.b16 %v1142, %v1138
    %v1683 = vpack.c.b16 %v1143, %v1139
    %v1684 = vpack.c.b16 %v1148, %v1144
    %v1685 = vpack.c.b16 %v1149, %v1145
    %v1686 = vpack.c.b16 %v1150, %v1146
    %v1687 = vpack.c.b16 %v1151, %v1147
    %v1688 = vpack.c.b16 %v1156, %v1152
    %v1689 = vpack.c.b16 %v1157, %v1153
    %v1690 = vpack.c.b16 %v1158, %v1154
    %v1691 = vpack.c.b16 %v1159, %v1155
    %v1692 = vpack.c.b16 %v1164, %v1160
    %v1693 = vpack.c.b16 %v1165, %v1161
    %v1694 = vpack.c.b16 %v1166, %v1162
    %v1695 = vpack.c.b16 %v1167, %v1163
    %v1696 = vpack.c.b16 %v1172, %v1168
    %v1697 = vpack.c.b16 %v1173, %v1169
    %v1698 = vpack.c.b16 %v1174, %v1170
    %v1699 = vpack.c.b16 %v1175, %v1171
    %v1700 = vpack.c.b16 %v1180, %v1176
    %v1701 = vpack.c.b16 %v1181, %v1177
    %v1702 = vpack.c.b16 %v1182, %v1178
    %v1703 = vpack.c.b16 %v1183, %v1179
    %v1704 = vpack.c.b16 %v1188, %v1184
    %v1705 = vpack.c.b16 %v1189, %v1185
    %v1706 = vpack.c.b16 %v1190, %v1186
    %v1707 = vpack.c.b16 %v1191, %v1187
    %v1708 = vpack.c.b16 %v1196, %v1192
    %v1709 = vpack.c.b16 %v1197, %v1193
    %v1710 = vpack.c.b16 %v1198, %v1194
    %v1711 = vpack.c.b16 %v1199, %v1195
    %v1712 = vpack.c.b16 %v1204, %v1200
    %v1713 = vpack.c.b16 %v1205, %v1201
    %v1714 = vpack.c.b16 %v1206, %v1202
    %v1715 = vpack.c.b16 %v1207, %v1203
    %v1716 = vpack.c.b16 %v1212, %v1208
    %v1717 = vpack.c.b16 %v1213, %v1209
    %v1718 = vpack.c.b16 %v1214, %v1210
    %v1719 = vpack.c.b16 %v1215, %v1211
    %v1720 = vpack.c.b16 %v1220, %v1216
    %v1721 = vpack.c.b16 %v1221, %v1217
    %v1722 = vpack.c.b16 %v1222, %v1218
    %v1723 = vpack.c.b16 %v1223, %v1219
    %v1724 = vpack.c.b16 %v1228, %v1224
    %v1725 = vpack.c.b16 %v1229, %v1225
    %v1726 = vpack.c.b16 %v1230, %v1226
    %v1727 = vpack.c.b16 %v1231, %v1227
    %v1728 = vpack.c.b16 %v1236, %v1232
    %v1729 = vpack.c.b16 %v1237, %v1233
    %v1730 = vpack.c.b16 %v1238, %v1234
    %v1731 = vpack.c.b16 %v1239, %v1235
    %v1732 = vpack.c.b16 %v1244, %v1240
    %v1733 = vpack.c.b16 %v1245, %v1241
    %v1734 = vpack.c.b16 %v1246, %v1242
    %v1735 = vpack.c.b16 %v1247, %v1243
    %v1736 = vpack.c.b16 %v1252, %v1248
    %v1737 = vpack.c.b16 %v1253, %v1249
    %v1738 = vpack.c.b16 %v1254, %v1250
    %v1739 = vpack.c.b16 %v1255, %v1251
    %v1740 = vpack.c.b16 %v1260, %v1256
    %v1741 = vpack.c.b16 %v1261, %v1257
    %v1742 = vpack.c.b16 %v1262, %v1258
    %v1743 = vpack.c.b16 %v1263, %v1259
    %v1744 = vpack.c.b16 %v1268, %v1264
    %v1745 = vpack.c.b16 %v1269, %v1265
    %v1746 = vpack.c.b16 %v1270, %v1266
    %v1747 = vpack.c.b16 %v1271, %v1267
    %v1748 = vpack.c.b16 %v1276, %v1272
    %v1749 = vpack.c.b16 %v1277, %v1273
    %v1750 = vpack.c.b16 %v1278, %v1274
    %v1751 = vpack.c.b16 %v1279, %v1275
    %v1752 = vpack.c.b16 %v1284, %v1280
    %v1753 = vpack.c.b16 %v1285, %v1281
    %v1754 = vpack.c.b16 %v1286, %v1282
    %v1755 = vpack.c.b16 %v1287, %v1283
    %v1756 = vpack.c.b16 %v1292, %v1288
    %v1757 = vpack.c.b16 %v1293, %v1289
    %v1758 = vpack.c.b16 %v1294, %v1290
    %v1759 = vpack.c.b16 %v1295, %v1291
    %v1760 = vpack.c.b16 %v1300, %v1296
    %v1761 = vpack.c.b16 %v1301, %v1297
    %v1762 = vpack.c.b16 %v1302, %v1298
    %v1763 = vpack.c.b16 %v1303, %v1299
    %v1764 = vpack.c.b16 %v1308, %v1304
    %v1765 = vpack.c.b16 %v1309, %v1305
    %v1766 = vpack.c.b16 %v1310, %v1306
    %v1767 = vpack.c.b16 %v1311, %v1307
    %v1768 = vpack.c.b16 %v1316, %v1312
    %v1769 = vpack.c.b16 %v1317, %v1313
    %v1770 = vpack.c.b16 %v1318, %v1314
    %v1771 = vpack.c.b16 %v1319, %v1315
    %v1772 = vpack.c.b16 %v1324, %v1320
    %v1773 = vpack.c.b16 %v1325, %v1321
    %v1774 = vpack.c.b16 %v1326, %v1322
    %v1775 = vpack.c.b16 %v1327, %v1323
    %v1776 = vpack.c.b16 %v1332, %v1328
    %v1777 = vpack.c.b16 %v1333, %v1329
    %v1778 = vpack.c.b16 %v1334, %v1330
    %v1779 = vpack.c.b16 %v1335, %v1331
    %v1780 = vpack.c.b16 %v1340, %v1336
    %v1781 = vpack.c.b16 %v1341, %v1337
    %v1782 = vpack.c.b16 %v1342, %v1338
    %v1783 = vpack.c.b16 %v1343, %v1339
    %v1784 = vpack.c.b16 %v1348, %v1344
    %v1785 = vpack.c.b16 %v1349, %v1345
    %v1786 = vpack.c.b16 %v1350, %v1346
    %v1787 = vpack.c.b16 %v1351, %v1347
    %v1788 = vpack.c.b16 %v1356, %v1352
    %v1789 = vpack.c.b16 %v1357, %v1353
    %v1790 = vpack.c.b16 %v1358, %v1354
    %v1791 = vpack.c.b16 %v1359, %v1355
    %v1792 = vpack.c.b16 %v1364, %v1360
    %v1793 = vpack.c.b16 %v1365, %v1361
    %v1794 = vpack.c.b16 %v1366, %v1362
    %v1795 = vpack.c.b16 %v1367, %v1363
    %v1796 = vpack.c.b16 %v1372, %v1368
    %v1797 = vpack.c.b16 %v1373, %v1369
    %v1798 = vpack.c.b16 %v1374, %v1370
    %v1799 = vpack.c.b16 %v1375, %v1371
    %v1800 = vpack.c.b16 %v1380, %v1376
    %v1801 = vpack.c.b16 %v1381, %v1377
    %v1802 = vpack.c.b16 %v1382, %v1378
    %v1803 = vpack.c.b16 %v1383, %v1379
    %v1804 = vpack.c.b16 %v1388, %v1384
    %v1805 = vpack.c.b16 %v1389, %v1385
    %v1806 = vpack.c.b16 %v1390, %v1386
    %v1807 = vpack.c.b16 %v1391, %v1387
    %v1808 = vpack.c.b16 %v1396, %v1392
    %v1809 = vpack.c.b16 %v1397, %v1393
    %v1810 = vpack.c.b16 %v1398, %v1394
    %v1811 = vpack.c.b16 %v1399, %v1395
    %v1812 = vpack.c.b16 %v1404, %v1400
    %v1813 = vpack.c.b16 %v1405, %v1401
    %v1814 = vpack.c.b16 %v1406, %v1402
    %v1815 = vpack.c.b16 %v1407, %v1403
    %v1816 = vpack.c.b16 %v1412, %v1408
    %v1817 = vpack.c.b16 %v1413, %v1409
    %v1818 = vpack.c.b16 %v1414, %v1410
    %v1819 = vpack.c.b16 %v1415, %v1411
    %v1820 = vpack.c.b16 %v1420, %v1416
    %v1821 = vpack.c.b16 %v1421, %v1417
    %v1822 = vpack.c.b16 %v1422, %v1418
    %v1823 = vpack.c.b16 %v1423, %v1419
    %v1824 = vpack.c.b16 %v1428, %v1424
    %v1825 = vpack.c.b16 %v1429, %v1425
    %v1826 = vpack.c.b16 %v1430, %v1426
    %v1827 = vpack.c.b16 %v1431, %v1427
    %v1828 = vpack.c.b16 %v1436, %v1432
    %v1829 = vpack.c.b16 %v1437, %v1433
    %v1830 = vpack.c.b16 %v1438, %v1434
    %v1831 = vpack.c.b16 %v1439, %v1435
    %v1832 = vpack.c.b16 %v1444, %v1440
    %v1833 = vpack.c.b16 %v1445, %v1441
    %v1834 = vpack.c.b16 %v1446, %v1442
    %v1835 = vpack.c.b16 %v1447, %v1443
    %v1836 = vpack.c.b16 %v1452, %v1448
    %v1837 = vpack.c.b16 %v1453, %v1449
    %v1838 = vpack.c.b16 %v1454, %v1450
    %v1839 = vpack.c.b16 %v1455, %v1451
    %v1840 = vpack.c.b16 %v1460, %v1456
    %v1841 = vpack.c.b16 %v1461, %v1457
    %v1842 = vpack.c.b16 %v1462, %v1458
    %v1843 = vpack.c.b16 %v1463, %v1459
    %v1844 = vpack.c.b16 %v1468, %v1464
    %v1845 = vpack.c.b16 %v1469, %v1465
    %v1846 = vpack.c.b16 %v1470, %v1466
    %v1847 = vpack.c.b16 %v1471, %v1467
    %v1848 = vpack.c.b16 %v1476, %v1472
    %v1849 = vpack.c.b16 %v1477, %v1473
    %v1850 = vpack.c.b16 %v1478, %v1474
    %v1851 = vpack.c.b16 %v1479, %v1475
    %v1852 = vpack.c.b16 %v1484, %v1480
    %v1853 = vpack.c.b16 %v1485, %v1481
    %v1854 = vpack.c.b16 %v1486, %v1482
    %v1855 = vpack.c.b16 %v1487, %v1483
    %v1856 = vpack.c.b16 %v1492, %v1488
    %v1857 = vpack.c.b16 %v1493, %v1489
    %v1858 = vpack.c.b16 %v1494, %v1490
    %v1859 = vpack.c.b16 %v1495, %v1491
    %v1860 = vpack.c.b16 %v1500, %v1496
    %v1861 = vpack.c.b16 %v1501, %v1497
    %v1862 = vpack.c.b16 %v1502, %v1498
    %v1863 = vpack.c.b16 %v1503, %v1499
    %v1864 = vpack.c.b16 %v1508, %v1504
    %v1865 = vpack.c.b16 %v1509, %v1505
    %v1866 = vpack.c.b16 %v1510, %v1506
    %v1867 = vpack.c.b16 %v1511, %v1507
    %v1868 = vpack.c.b16 %v1516, %v1512
    %v1869 = vpack.c.b16 %v1517, %v1513
    %v1870 = vpack.c.b16 %v1518, %v1514
    %v1871 = vpack.c.b16 %v1519, %v1515
    %v1872 = vpack.c.b16 %v1524, %v1520
    %v1873 = vpack.c.b16 %v1525, %v1521
    %v1874 = vpack.c.b16 %v1526, %v1522
    %v1875 = vpack.c.b16 %v1527, %v1523
    %v1876 = vpack.c.b16 %v1532, %v1528
    %v1877 = vpack.c.b16 %v1533, %v1529
    %v1878 = vpack.c.b16 %v1534, %v1530
    %v1879 = vpack.c.b16 %v1535, %v1531
    %v1880 = vpack.c.b16 %v1540, %v1536
    %v1881 = vpack.c.b16 %v1541, %v1537
    %v1882 = vpack.c.b16 %v1542, %v1538
    %v1883 = vpack.c.b16 %v1543, %v1539
    %v1884 = vpack.c.b16 %v1548, %v1544
    %v1885 = vpack.c.b16 %v1549, %v1545
    %v1886 = vpack.c.b16 %v1550, %v1546
    %v1887 = vpack.c.b16 %v1551, %v1547
    %v1888 = vpack.c.b16 %v1556, %v1552
    %v1889 = vpack.c.b16 %v1557, %v1553
    %v1890 = vpack.c.b16 %v1558, %v1554
    %v1891 = vpack.c.b16 %v1559, %v1555
    %v1892 = vpack.c.b16 %v1564, %v1560
    %v1893 = vpack.c.b16 %v1565, %v1561
    %v1894 = vpack.c.b16 %v1566, %v1562
    %v1895 = vpack.c.b16 %v1567, %v1563
    %v1896 = vpack.c.b16 %v1572, %v1568
    %v1897 = vpack.c.b16 %v1573, %v1569
    %v1898 = vpack.c.b16 %v1574, %v1570
    %v1899 = vpack.c.b16 %v1575, %v1571
    %v1900 = vpack.c.b16 %v1580, %v1576
    %v1901 = vpack.c.b16 %v1581, %v1577
    %v1902 = vpack.c.b16 %v1582, %v1578
    %v1903 = vpack.c.b16 %v1583, %v1579
    %2224 = vmatpush.bf16.msra.mxu0 %v1612
    %2225 = vmatpush.bf16.msra.mxu0 %v1608
    %2226 = vmatpush.bf16.msra.mxu0 %v1604
    %2227 = vmatpush.bf16.msra.mxu0 %v1600
    %2228 = vmatpush.bf16.msra.mxu0 %v1596
    %2229 = vmatpush.bf16.msra.mxu0 %v1592
    %2230 = vmatpush.bf16.msra.mxu0 %v1588
    %2231 = vmatpush.bf16.msra.mxu0 %v1584
    %2232 = vmatmul.bf16.gmra.mxu0 %v588
    %v2233 = vpop.f32.mrf.mxu0
    %v2234 = vadd.f32 %v557, %v2233
    %v2235 = vpop.f32.mrf.mxu0
    %v2236 = vadd.f32 %v557, %v2235
    %2237 = vdwg.mxu0
    %2238 = vmatpush.bf16.msra.mxu0 %v1644
    %2239 = vmatpush.bf16.msra.mxu0 %v1640
    %2240 = vmatpush.bf16.msra.mxu0 %v1636
    %2241 = vmatpush.bf16.msra.mxu0 %v1632
    %2242 = vmatpush.bf16.msra.mxu0 %v1628
    %2243 = vmatpush.bf16.msra.mxu0 %v1624
    %2244 = vmatpush.bf16.msra.mxu0 %v1620
    %2245 = vmatpush.bf16.msra.mxu0 %v1616
    %2246 = vmatmul.bf16.gmra.mxu0 %v589
    %v2247 = vpop.f32.mrf.mxu0
    %v2248 = vadd.f32 %v2234, %v2247
    %v2249 = vpop.f32.mrf.mxu0
    %v2250 = vadd.f32 %v2236, %v2249
    %2251 = vdwg.mxu0
    %2252 = vmatpush.bf16.msra.mxu0 %v1676
    %2253 = vmatpush.bf16.msra.mxu0 %v1672
    %2254 = vmatpush.bf16.msra.mxu0 %v1668
    %2255 = vmatpush.bf16.msra.mxu0 %v1664
    %2256 = vmatpush.bf16.msra.mxu0 %v1660
    %2257 = vmatpush.bf16.msra.mxu0 %v1656
    %2258 = vmatpush.bf16.msra.mxu0 %v1652
    %2259 = vmatpush.bf16.msra.mxu0 %v1648
    %2260 = vmatmul.bf16.gmra.mxu0 %v590
    %v2261 = vpop.f32.mrf.mxu0
    %v2262 = vadd.f32 %v2248, %v2261
    %v2263 = vpop.f32.mrf.mxu0
    %v2264 = vadd.f32 %v2250, %v2263
    %2265 = vdwg.mxu0
    %2266 = vmatpush.bf16.msra.mxu0 %v1708
    %2267 = vmatpush.bf16.msra.mxu0 %v1704
    %2268 = vmatpush.bf16.msra.mxu0 %v1700
    %2269 = vmatpush.bf16.msra.mxu0 %v1696
    %2270 = vmatpush.bf16.msra.mxu0 %v1692
    %2271 = vmatpush.bf16.msra.mxu0 %v1688
    %2272 = vmatpush.bf16.msra.mxu0 %v1684
    %2273 = vmatpush.bf16.msra.mxu0 %v1680
    %2274 = vmatmul.bf16.gmra.mxu0 %v591
    %v2275 = vpop.f32.mrf.mxu0
    %v2276 = vadd.f32 %v2262, %v2275
    %v2277 = vpop.f32.mrf.mxu0
    %v2278 = vadd.f32 %v2264, %v2277
    %2279 = vdwg.mxu0
    %2280 = vmatpush.bf16.msra.mxu0 %v1740
    %2281 = vmatpush.bf16.msra.mxu0 %v1736
    %2282 = vmatpush.bf16.msra.mxu0 %v1732
    %2283 = vmatpush.bf16.msra.mxu0 %v1728
    %2284 = vmatpush.bf16.msra.mxu0 %v1724
    %2285 = vmatpush.bf16.msra.mxu0 %v1720
    %2286 = vmatpush.bf16.msra.mxu0 %v1716
    %2287 = vmatpush.bf16.msra.mxu0 %v1712
    %2288 = vmatmul.bf16.gmra.mxu0 %v592
    %v2289 = vpop.f32.mrf.mxu0
    %v2290 = vadd.f32 %v2276, %v2289
    %v2291 = vpop.f32.mrf.mxu0
    %v2292 = vadd.f32 %v2278, %v2291
    %2293 = vdwg.mxu0
    %2294 = vmatpush.bf16.msra.mxu0 %v1772
    %2295 = vmatpush.bf16.msra.mxu0 %v1768
    %2296 = vmatpush.bf16.msra.mxu0 %v1764
    %2297 = vmatpush.bf16.msra.mxu0 %v1760
    %2298 = vmatpush.bf16.msra.mxu0 %v1756
    %2299 = vmatpush.bf16.msra.mxu0 %v1752
    %2300 = vmatpush.bf16.msra.mxu0 %v1748
    %2301 = vmatpush.bf16.msra.mxu0 %v1744
    %2302 = vmatmul.bf16.gmra.mxu0 %v593
    %v2303 = vpop.f32.mrf.mxu0
    %v2304 = vadd.f32 %v2290, %v2303
    %v2305 = vpop.f32.mrf.mxu0
    %v2306 = vadd.f32 %v2292, %v2305
    %2307 = vdwg.mxu0
    %2308 = vmatpush.bf16.msra.mxu0 %v1804
    %2309 = vmatpush.bf16.msra.mxu0 %v1800
    %2310 = vmatpush.bf16.msra.mxu0 %v1796
    %2311 = vmatpush.bf16.msra.mxu0 %v1792
    %2312 = vmatpush.bf16.msra.mxu0 %v1788
    %2313 = vmatpush.bf16.msra.mxu0 %v1784
    %2314 = vmatpush.bf16.msra.mxu0 %v1780
    %2315 = vmatpush.bf16.msra.mxu0 %v1776
    %2316 = vmatmul.bf16.gmra.mxu0 %v594
    %v2317 = vpop.f32.mrf.mxu0
    %v2318 = vadd.f32 %v2304, %v2317
    %v2319 = vpop.f32.mrf.mxu0
    %v2320 = vadd.f32 %v2306, %v2319
    %2321 = vdwg.mxu0
    %2322 = vmatpush.bf16.msra.mxu0 %v1836
    %2323 = vmatpush.bf16.msra.mxu0 %v1832
    %2324 = vmatpush.bf16.msra.mxu0 %v1828
    %2325 = vmatpush.bf16.msra.mxu0 %v1824
    %2326 = vmatpush.bf16.msra.mxu0 %v1820
    %2327 = vmatpush.bf16.msra.mxu0 %v1816
    %2328 = vmatpush.bf16.msra.mxu0 %v1812
    %2329 = vmatpush.bf16.msra.mxu0 %v1808
    %2330 = vmatmul.bf16.gmra.mxu0 %v595
    %v2331 = vpop.f32.mrf.mxu0
    %v2332 = vadd.f32 %v2318, %v2331
    %v2333 = vpop.f32.mrf.mxu0
    %v2334 = vadd.f32 %v2320, %v2333
    %2335 = vdwg.mxu0
    %2336 = vmatpush.bf16.msra.mxu0 %v1868
    %2337 = vmatpush.bf16.msra.mxu0 %v1864
    %2338 = vmatpush.bf16.msra.mxu0 %v1860
    %2339 = vmatpush.bf16.msra.mxu0 %v1856
    %2340 = vmatpush.bf16.msra.mxu0 %v1852
    %2341 = vmatpush.bf16.msra.mxu0 %v1848
    %2342 = vmatpush.bf16.msra.mxu0 %v1844
    %2343 = vmatpush.bf16.msra.mxu0 %v1840
    %2344 = vmatmul.bf16.gmra.mxu0 %v612
    %v2345 = vpop.f32.mrf.mxu0
    %v2346 = vadd.f32 %v2332, %v2345
    %v2347 = vpop.f32.mrf.mxu0
    %v2348 = vadd.f32 %v2334, %v2347
    %2349 = vdwg.mxu0
    %2350 = vmatpush.bf16.msra.mxu0 %v1900
    %2351 = vmatpush.bf16.msra.mxu0 %v1896
    %2352 = vmatpush.bf16.msra.mxu0 %v1892
    %2353 = vmatpush.bf16.msra.mxu0 %v1888
    %2354 = vmatpush.bf16.msra.mxu0 %v1884
    %2355 = vmatpush.bf16.msra.mxu0 %v1880
    %2356 = vmatpush.bf16.msra.mxu0 %v1876
    %2357 = vmatpush.bf16.msra.mxu0 %v1872
    %2358 = vmatmul.bf16.gmra.mxu0 %v613
    %v2359 = vpop.f32.mrf.mxu0
    %v2360 = vadd.f32 %v2346, %v2359
    %v2361 = vpop.f32.mrf.mxu0
    %v2362 = vadd.f32 %v2348, %v2361
    %2363 = vdwg.mxu0
    %2364 = vmatpush.bf16.msra.mxu0 %v1613
    %2365 = vmatpush.bf16.msra.mxu0 %v1609
    %2366 = vmatpush.bf16.msra.mxu0 %v1605
    %2367 = vmatpush.bf16.msra.mxu0 %v1601
    %2368 = vmatpush.bf16.msra.mxu0 %v1597
    %2369 = vmatpush.bf16.msra.mxu0 %v1593
    %2370 = vmatpush.bf16.msra.mxu0 %v1589
    %2371 = vmatpush.bf16.msra.mxu0 %v1585
    %2372 = vmatmul.bf16.gmra.mxu0 %v588
    %v2373 = vpop.f32.mrf.mxu0
    %v2374 = vadd.f32 %v558, %v2373
    %v2375 = vpop.f32.mrf.mxu0
    %v2376 = vadd.f32 %v558, %v2375
    %2377 = vdwg.mxu0
    %2378 = vmatpush.bf16.msra.mxu0 %v1645
    %2379 = vmatpush.bf16.msra.mxu0 %v1641
    %2380 = vmatpush.bf16.msra.mxu0 %v1637
    %2381 = vmatpush.bf16.msra.mxu0 %v1633
    %2382 = vmatpush.bf16.msra.mxu0 %v1629
    %2383 = vmatpush.bf16.msra.mxu0 %v1625
    %2384 = vmatpush.bf16.msra.mxu0 %v1621
    %2385 = vmatpush.bf16.msra.mxu0 %v1617
    %2386 = vmatmul.bf16.gmra.mxu0 %v589
    %v2387 = vpop.f32.mrf.mxu0
    %v2388 = vadd.f32 %v2374, %v2387
    %v2389 = vpop.f32.mrf.mxu0
    %v2390 = vadd.f32 %v2376, %v2389
    %2391 = vdwg.mxu0
    %2392 = vmatpush.bf16.msra.mxu0 %v1677
    %2393 = vmatpush.bf16.msra.mxu0 %v1673
    %2394 = vmatpush.bf16.msra.mxu0 %v1669
    %2395 = vmatpush.bf16.msra.mxu0 %v1665
    %2396 = vmatpush.bf16.msra.mxu0 %v1661
    %2397 = vmatpush.bf16.msra.mxu0 %v1657
    %2398 = vmatpush.bf16.msra.mxu0 %v1653
    %2399 = vmatpush.bf16.msra.mxu0 %v1649
    %2400 = vmatmul.bf16.gmra.mxu0 %v590
    %v2401 = vpop.f32.mrf.mxu0
    %v2402 = vadd.f32 %v2388, %v2401
    %v2403 = vpop.f32.mrf.mxu0
    %v2404 = vadd.f32 %v2390, %v2403
    %2405 = vdwg.mxu0
    %2406 = vmatpush.bf16.msra.mxu0 %v1709
    %2407 = vmatpush.bf16.msra.mxu0 %v1705
    %2408 = vmatpush.bf16.msra.mxu0 %v1701
    %2409 = vmatpush.bf16.msra.mxu0 %v1697
    %2410 = vmatpush.bf16.msra.mxu0 %v1693
    %2411 = vmatpush.bf16.msra.mxu0 %v1689
    %2412 = vmatpush.bf16.msra.mxu0 %v1685
    %2413 = vmatpush.bf16.msra.mxu0 %v1681
    %2414 = vmatmul.bf16.gmra.mxu0 %v591
    %v2415 = vpop.f32.mrf.mxu0
    %v2416 = vadd.f32 %v2402, %v2415
    %v2417 = vpop.f32.mrf.mxu0
    %v2418 = vadd.f32 %v2404, %v2417
    %2419 = vdwg.mxu0
    %2420 = vmatpush.bf16.msra.mxu0 %v1741
    %2421 = vmatpush.bf16.msra.mxu0 %v1737
    %2422 = vmatpush.bf16.msra.mxu0 %v1733
    %2423 = vmatpush.bf16.msra.mxu0 %v1729
    %2424 = vmatpush.bf16.msra.mxu0 %v1725
    %2425 = vmatpush.bf16.msra.mxu0 %v1721
    %2426 = vmatpush.bf16.msra.mxu0 %v1717
    %2427 = vmatpush.bf16.msra.mxu0 %v1713
    %2428 = vmatmul.bf16.gmra.mxu0 %v592
    %v2429 = vpop.f32.mrf.mxu0
    %v2430 = vadd.f32 %v2416, %v2429
    %v2431 = vpop.f32.mrf.mxu0
    %v2432 = vadd.f32 %v2418, %v2431
    %2433 = vdwg.mxu0
    %2434 = vmatpush.bf16.msra.mxu0 %v1773
    %2435 = vmatpush.bf16.msra.mxu0 %v1769
    %2436 = vmatpush.bf16.msra.mxu0 %v1765
    %2437 = vmatpush.bf16.msra.mxu0 %v1761
    %2438 = vmatpush.bf16.msra.mxu0 %v1757
    %2439 = vmatpush.bf16.msra.mxu0 %v1753
    %2440 = vmatpush.bf16.msra.mxu0 %v1749
    %2441 = vmatpush.bf16.msra.mxu0 %v1745
    %2442 = vmatmul.bf16.gmra.mxu0 %v593
    %v2443 = vpop.f32.mrf.mxu0
    %v2444 = vadd.f32 %v2430, %v2443
    %v2445 = vpop.f32.mrf.mxu0
    %v2446 = vadd.f32 %v2432, %v2445
    %2447 = vdwg.mxu0
    %2448 = vmatpush.bf16.msra.mxu0 %v1805
    %2449 = vmatpush.bf16.msra.mxu0 %v1801
    %2450 = vmatpush.bf16.msra.mxu0 %v1797
    %2451 = vmatpush.bf16.msra.mxu0 %v1793
    %2452 = vmatpush.bf16.msra.mxu0 %v1789
    %2453 = vmatpush.bf16.msra.mxu0 %v1785
    %2454 = vmatpush.bf16.msra.mxu0 %v1781
    %2455 = vmatpush.bf16.msra.mxu0 %v1777
    %2456 = vmatmul.bf16.gmra.mxu0 %v594
    %v2457 = vpop.f32.mrf.mxu0
    %v2458 = vadd.f32 %v2444, %v2457
    %v2459 = vpop.f32.mrf.mxu0
    %v2460 = vadd.f32 %v2446, %v2459
    %2461 = vdwg.mxu0
    %2462 = vmatpush.bf16.msra.mxu0 %v1837
    %2463 = vmatpush.bf16.msra.mxu0 %v1833
    %2464 = vmatpush.bf16.msra.mxu0 %v1829
    %2465 = vmatpush.bf16.msra.mxu0 %v1825
    %2466 = vmatpush.bf16.msra.mxu0 %v1821
    %2467 = vmatpush.bf16.msra.mxu0 %v1817
    %2468 = vmatpush.bf16.msra.mxu0 %v1813
    %2469 = vmatpush.bf16.msra.mxu0 %v1809
    %2470 = vmatmul.bf16.gmra.mxu0 %v595
    %v2471 = vpop.f32.mrf.mxu0
    %v2472 = vadd.f32 %v2458, %v2471
    %v2473 = vpop.f32.mrf.mxu0
    %v2474 = vadd.f32 %v2460, %v2473
    %2475 = vdwg.mxu0
    %2476 = vmatpush.bf16.msra.mxu0 %v1869
    %2477 = vmatpush.bf16.msra.mxu0 %v1865
    %2478 = vmatpush.bf16.msra.mxu0 %v1861
    %2479 = vmatpush.bf16.msra.mxu0 %v1857
    %2480 = vmatpush.bf16.msra.mxu0 %v1853
    %2481 = vmatpush.bf16.msra.mxu0 %v1849
    %2482 = vmatpush.bf16.msra.mxu0 %v1845
    %2483 = vmatpush.bf16.msra.mxu0 %v1841
    %2484 = vmatmul.bf16.gmra.mxu0 %v612
    %v2485 = vpop.f32.mrf.mxu0
    %v2486 = vadd.f32 %v2472, %v2485
    %v2487 = vpop.f32.mrf.mxu0
    %v2488 = vadd.f32 %v2474, %v2487
    %2489 = vdwg.mxu0
    %2490 = vmatpush.bf16.msra.mxu0 %v1901
    %2491 = vmatpush.bf16.msra.mxu0 %v1897
    %2492 = vmatpush.bf16.msra.mxu0 %v1893
    %2493 = vmatpush.bf16.msra.mxu0 %v1889
    %2494 = vmatpush.bf16.msra.mxu0 %v1885
    %2495 = vmatpush.bf16.msra.mxu0 %v1881
    %2496 = vmatpush.bf16.msra.mxu0 %v1877
    %2497 = vmatpush.bf16.msra.mxu0 %v1873
    %2498 = vmatmul.bf16.gmra.mxu0 %v613
    %v2499 = vpop.f32.mrf.mxu0
    %v2500 = vadd.f32 %v2486, %v2499
    %v2501 = vpop.f32.mrf.mxu0
    %v2502 = vadd.f32 %v2488, %v2501
    %2503 = vdwg.mxu0
    %2504 = vmatpush.bf16.msra.mxu0 %v1614
    %2505 = vmatpush.bf16.msra.mxu0 %v1610
    %2506 = vmatpush.bf16.msra.mxu0 %v1606
    %2507 = vmatpush.bf16.msra.mxu0 %v1602
    %2508 = vmatpush.bf16.msra.mxu0 %v1598
    %2509 = vmatpush.bf16.msra.mxu0 %v1594
    %2510 = vmatpush.bf16.msra.mxu0 %v1590
    %2511 = vmatpush.bf16.msra.mxu0 %v1586
    %2512 = vmatmul.bf16.gmra.mxu0 %v588
    %v2513 = vpop.f32.mrf.mxu0
    %v2514 = vadd.f32 %v559, %v2513
    %v2515 = vpop.f32.mrf.mxu0
    %v2516 = vadd.f32 %v559, %v2515
    %2517 = vdwg.mxu0
    %2518 = vmatpush.bf16.msra.mxu0 %v1646
    %2519 = vmatpush.bf16.msra.mxu0 %v1642
    %2520 = vmatpush.bf16.msra.mxu0 %v1638
    %2521 = vmatpush.bf16.msra.mxu0 %v1634
    %2522 = vmatpush.bf16.msra.mxu0 %v1630
    %2523 = vmatpush.bf16.msra.mxu0 %v1626
    %2524 = vmatpush.bf16.msra.mxu0 %v1622
    %2525 = vmatpush.bf16.msra.mxu0 %v1618
    %2526 = vmatmul.bf16.gmra.mxu0 %v589
    %v2527 = vpop.f32.mrf.mxu0
    %v2528 = vadd.f32 %v2514, %v2527
    %v2529 = vpop.f32.mrf.mxu0
    %v2530 = vadd.f32 %v2516, %v2529
    %2531 = vdwg.mxu0
    %2532 = vmatpush.bf16.msra.mxu0 %v1678
    %2533 = vmatpush.bf16.msra.mxu0 %v1674
    %2534 = vmatpush.bf16.msra.mxu0 %v1670
    %2535 = vmatpush.bf16.msra.mxu0 %v1666
    %2536 = vmatpush.bf16.msra.mxu0 %v1662
    %2537 = vmatpush.bf16.msra.mxu0 %v1658
    %2538 = vmatpush.bf16.msra.mxu0 %v1654
    %2539 = vmatpush.bf16.msra.mxu0 %v1650
    %2540 = vmatmul.bf16.gmra.mxu0 %v590
    %v2541 = vpop.f32.mrf.mxu0
    %v2542 = vadd.f32 %v2528, %v2541
    %v2543 = vpop.f32.mrf.mxu0
    %v2544 = vadd.f32 %v2530, %v2543
    %2545 = vdwg.mxu0
    %2546 = vmatpush.bf16.msra.mxu0 %v1710
    %2547 = vmatpush.bf16.msra.mxu0 %v1706
    %2548 = vmatpush.bf16.msra.mxu0 %v1702
    %2549 = vmatpush.bf16.msra.mxu0 %v1698
    %2550 = vmatpush.bf16.msra.mxu0 %v1694
    %2551 = vmatpush.bf16.msra.mxu0 %v1690
    %2552 = vmatpush.bf16.msra.mxu0 %v1686
    %2553 = vmatpush.bf16.msra.mxu0 %v1682
    %2554 = vmatmul.bf16.gmra.mxu0 %v591
    %v2555 = vpop.f32.mrf.mxu0
    %v2556 = vadd.f32 %v2542, %v2555
    %v2557 = vpop.f32.mrf.mxu0
    %v2558 = vadd.f32 %v2544, %v2557
    %2559 = vdwg.mxu0
    %2560 = vmatpush.bf16.msra.mxu0 %v1742
    %2561 = vmatpush.bf16.msra.mxu0 %v1738
    %2562 = vmatpush.bf16.msra.mxu0 %v1734
    %2563 = vmatpush.bf16.msra.mxu0 %v1730
    %2564 = vmatpush.bf16.msra.mxu0 %v1726
    %2565 = vmatpush.bf16.msra.mxu0 %v1722
    %2566 = vmatpush.bf16.msra.mxu0 %v1718
    %2567 = vmatpush.bf16.msra.mxu0 %v1714
    %2568 = vmatmul.bf16.gmra.mxu0 %v592
    %v2569 = vpop.f32.mrf.mxu0
    %v2570 = vadd.f32 %v2556, %v2569
    %v2571 = vpop.f32.mrf.mxu0
    %v2572 = vadd.f32 %v2558, %v2571
    %2573 = vdwg.mxu0
    %2574 = vmatpush.bf16.msra.mxu0 %v1774
    %2575 = vmatpush.bf16.msra.mxu0 %v1770
    %2576 = vmatpush.bf16.msra.mxu0 %v1766
    %2577 = vmatpush.bf16.msra.mxu0 %v1762
    %2578 = vmatpush.bf16.msra.mxu0 %v1758
    %2579 = vmatpush.bf16.msra.mxu0 %v1754
    %2580 = vmatpush.bf16.msra.mxu0 %v1750
    %2581 = vmatpush.bf16.msra.mxu0 %v1746
    %2582 = vmatmul.bf16.gmra.mxu0 %v593
    %v2583 = vpop.f32.mrf.mxu0
    %v2584 = vadd.f32 %v2570, %v2583
    %v2585 = vpop.f32.mrf.mxu0
    %v2586 = vadd.f32 %v2572, %v2585
    %2587 = vdwg.mxu0
    %2588 = vmatpush.bf16.msra.mxu0 %v1806
    %2589 = vmatpush.bf16.msra.mxu0 %v1802
    %2590 = vmatpush.bf16.msra.mxu0 %v1798
    %2591 = vmatpush.bf16.msra.mxu0 %v1794
    %2592 = vmatpush.bf16.msra.mxu0 %v1790
    %2593 = vmatpush.bf16.msra.mxu0 %v1786
    %2594 = vmatpush.bf16.msra.mxu0 %v1782
    %2595 = vmatpush.bf16.msra.mxu0 %v1778
    %2596 = vmatmul.bf16.gmra.mxu0 %v594
    %v2597 = vpop.f32.mrf.mxu0
    %v2598 = vadd.f32 %v2584, %v2597
    %v2599 = vpop.f32.mrf.mxu0
    %v2600 = vadd.f32 %v2586, %v2599
    %2601 = vdwg.mxu0
    %2602 = vmatpush.bf16.msra.mxu0 %v1838
    %2603 = vmatpush.bf16.msra.mxu0 %v1834
    %2604 = vmatpush.bf16.msra.mxu0 %v1830
    %2605 = vmatpush.bf16.msra.mxu0 %v1826
    %2606 = vmatpush.bf16.msra.mxu0 %v1822
    %2607 = vmatpush.bf16.msra.mxu0 %v1818
    %2608 = vmatpush.bf16.msra.mxu0 %v1814
    %2609 = vmatpush.bf16.msra.mxu0 %v1810
    %2610 = vmatmul.bf16.gmra.mxu0 %v595
    %v2611 = vpop.f32.mrf.mxu0
    %v2612 = vadd.f32 %v2598, %v2611
    %v2613 = vpop.f32.mrf.mxu0
    %v2614 = vadd.f32 %v2600, %v2613
    %2615 = vdwg.mxu0
    %2616 = vmatpush.bf16.msra.mxu0 %v1870
    %2617 = vmatpush.bf16.msra.mxu0 %v1866
    %2618 = vmatpush.bf16.msra.mxu0 %v1862
    %2619 = vmatpush.bf16.msra.mxu0 %v1858
    %2620 = vmatpush.bf16.msra.mxu0 %v1854
    %2621 = vmatpush.bf16.msra.mxu0 %v1850
    %2622 = vmatpush.bf16.msra.mxu0 %v1846
    %2623 = vmatpush.bf16.msra.mxu0 %v1842
    %2624 = vmatmul.bf16.gmra.mxu0 %v612
    %v2625 = vpop.f32.mrf.mxu0
    %v2626 = vadd.f32 %v2612, %v2625
    %v2627 = vpop.f32.mrf.mxu0
    %v2628 = vadd.f32 %v2614, %v2627
    %2629 = vdwg.mxu0
    %2630 = vmatpush.bf16.msra.mxu0 %v1902
    %2631 = vmatpush.bf16.msra.mxu0 %v1898
    %2632 = vmatpush.bf16.msra.mxu0 %v1894
    %2633 = vmatpush.bf16.msra.mxu0 %v1890
    %2634 = vmatpush.bf16.msra.mxu0 %v1886
    %2635 = vmatpush.bf16.msra.mxu0 %v1882
    %2636 = vmatpush.bf16.msra.mxu0 %v1878
    %2637 = vmatpush.bf16.msra.mxu0 %v1874
    %2638 = vmatmul.bf16.gmra.mxu0 %v613
    %v2639 = vpop.f32.mrf.mxu0
    %v2640 = vadd.f32 %v2626, %v2639
    %v2641 = vpop.f32.mrf.mxu0
    %v2642 = vadd.f32 %v2628, %v2641
    %2643 = vdwg.mxu0
    %2644 = vmatpush.bf16.msra.mxu0 %v1615
    %2645 = vmatpush.bf16.msra.mxu0 %v1611
    %2646 = vmatpush.bf16.msra.mxu0 %v1607
    %2647 = vmatpush.bf16.msra.mxu0 %v1603
    %2648 = vmatpush.bf16.msra.mxu0 %v1599
    %2649 = vmatpush.bf16.msra.mxu0 %v1595
    %2650 = vmatpush.bf16.msra.mxu0 %v1591
    %2651 = vmatpush.bf16.msra.mxu0 %v1587
    %2652 = vmatmul.bf16.gmra.mxu0 %v588
    %v2653 = vpop.f32.mrf.mxu0
    %v2654 = vadd.f32 %v560, %v2653
    %v2655 = vpop.f32.mrf.mxu0
    %v2656 = vadd.f32 %v560, %v2655
    %2657 = vdwg.mxu0
    %2658 = vmatpush.bf16.msra.mxu0 %v1647
    %2659 = vmatpush.bf16.msra.mxu0 %v1643
    %2660 = vmatpush.bf16.msra.mxu0 %v1639
    %2661 = vmatpush.bf16.msra.mxu0 %v1635
    %2662 = vmatpush.bf16.msra.mxu0 %v1631
    %2663 = vmatpush.bf16.msra.mxu0 %v1627
    %2664 = vmatpush.bf16.msra.mxu0 %v1623
    %2665 = vmatpush.bf16.msra.mxu0 %v1619
    %2666 = vmatmul.bf16.gmra.mxu0 %v589
    %v2667 = vpop.f32.mrf.mxu0
    %v2668 = vadd.f32 %v2654, %v2667
    %v2669 = vpop.f32.mrf.mxu0
    %v2670 = vadd.f32 %v2656, %v2669
    %2671 = vdwg.mxu0
    %2672 = vmatpush.bf16.msra.mxu0 %v1679
    %2673 = vmatpush.bf16.msra.mxu0 %v1675
    %2674 = vmatpush.bf16.msra.mxu0 %v1671
    %2675 = vmatpush.bf16.msra.mxu0 %v1667
    %2676 = vmatpush.bf16.msra.mxu0 %v1663
    %2677 = vmatpush.bf16.msra.mxu0 %v1659
    %2678 = vmatpush.bf16.msra.mxu0 %v1655
    %2679 = vmatpush.bf16.msra.mxu0 %v1651
    %2680 = vmatmul.bf16.gmra.mxu0 %v590
    %v2681 = vpop.f32.mrf.mxu0
    %v2682 = vadd.f32 %v2668, %v2681
    %v2683 = vpop.f32.mrf.mxu0
    %v2684 = vadd.f32 %v2670, %v2683
    %2685 = vdwg.mxu0
    %2686 = vmatpush.bf16.msra.mxu0 %v1711
    %2687 = vmatpush.bf16.msra.mxu0 %v1707
    %2688 = vmatpush.bf16.msra.mxu0 %v1703
    %2689 = vmatpush.bf16.msra.mxu0 %v1699
    %2690 = vmatpush.bf16.msra.mxu0 %v1695
    %2691 = vmatpush.bf16.msra.mxu0 %v1691
    %2692 = vmatpush.bf16.msra.mxu0 %v1687
    %2693 = vmatpush.bf16.msra.mxu0 %v1683
    %2694 = vmatmul.bf16.gmra.mxu0 %v591
    %v2695 = vpop.f32.mrf.mxu0
    %v2696 = vadd.f32 %v2682, %v2695
    %v2697 = vpop.f32.mrf.mxu0
    %v2698 = vadd.f32 %v2684, %v2697
    %2699 = vdwg.mxu0
    %2700 = vmatpush.bf16.msra.mxu0 %v1743
    %2701 = vmatpush.bf16.msra.mxu0 %v1739
    %2702 = vmatpush.bf16.msra.mxu0 %v1735
    %2703 = vmatpush.bf16.msra.mxu0 %v1731
    %2704 = vmatpush.bf16.msra.mxu0 %v1727
    %2705 = vmatpush.bf16.msra.mxu0 %v1723
    %2706 = vmatpush.bf16.msra.mxu0 %v1719
    %2707 = vmatpush.bf16.msra.mxu0 %v1715
    %2708 = vmatmul.bf16.gmra.mxu0 %v592
    %v2709 = vpop.f32.mrf.mxu0
    %v2710 = vadd.f32 %v2696, %v2709
    %v2711 = vpop.f32.mrf.mxu0
    %v2712 = vadd.f32 %v2698, %v2711
    %2713 = vdwg.mxu0
    %2714 = vmatpush.bf16.msra.mxu0 %v1775
    %2715 = vmatpush.bf16.msra.mxu0 %v1771
    %2716 = vmatpush.bf16.msra.mxu0 %v1767
    %2717 = vmatpush.bf16.msra.mxu0 %v1763
    %2718 = vmatpush.bf16.msra.mxu0 %v1759
    %2719 = vmatpush.bf16.msra.mxu0 %v1755
    %2720 = vmatpush.bf16.msra.mxu0 %v1751
    %2721 = vmatpush.bf16.msra.mxu0 %v1747
    %2722 = vmatmul.bf16.gmra.mxu0 %v593
    %v2723 = vpop.f32.mrf.mxu0
    %v2724 = vadd.f32 %v2710, %v2723
    %v2725 = vpop.f32.mrf.mxu0
    %v2726 = vadd.f32 %v2712, %v2725
    %2727 = vdwg.mxu0
    %2728 = vmatpush.bf16.msra.mxu0 %v1807
    %2729 = vmatpush.bf16.msra.mxu0 %v1803
    %2730 = vmatpush.bf16.msra.mxu0 %v1799
    %2731 = vmatpush.bf16.msra.mxu0 %v1795
    %2732 = vmatpush.bf16.msra.mxu0 %v1791
    %2733 = vmatpush.bf16.msra.mxu0 %v1787
    %2734 = vmatpush.bf16.msra.mxu0 %v1783
    %2735 = vmatpush.bf16.msra.mxu0 %v1779
    %2736 = vmatmul.bf16.gmra.mxu0 %v594
    %v2737 = vpop.f32.mrf.mxu0
    %v2738 = vadd.f32 %v2724, %v2737
    %v2739 = vpop.f32.mrf.mxu0
    %v2740 = vadd.f32 %v2726, %v2739
    %2741 = vdwg.mxu0
    %2742 = vmatpush.bf16.msra.mxu0 %v1839
    %2743 = vmatpush.bf16.msra.mxu0 %v1835
    %2744 = vmatpush.bf16.msra.mxu0 %v1831
    %2745 = vmatpush.bf16.msra.mxu0 %v1827
    %2746 = vmatpush.bf16.msra.mxu0 %v1823
    %2747 = vmatpush.bf16.msra.mxu0 %v1819
    %2748 = vmatpush.bf16.msra.mxu0 %v1815
    %2749 = vmatpush.bf16.msra.mxu0 %v1811
    %2750 = vmatmul.bf16.gmra.mxu0 %v595
    %v2751 = vpop.f32.mrf.mxu0
    %v2752 = vadd.f32 %v2738, %v2751
    %v2753 = vpop.f32.mrf.mxu0
    %v2754 = vadd.f32 %v2740, %v2753
    %2755 = vdwg.mxu0
    %2756 = vmatpush.bf16.msra.mxu0 %v1871
    %2757 = vmatpush.bf16.msra.mxu0 %v1867
    %2758 = vmatpush.bf16.msra.mxu0 %v1863
    %2759 = vmatpush.bf16.msra.mxu0 %v1859
    %2760 = vmatpush.bf16.msra.mxu0 %v1855
    %2761 = vmatpush.bf16.msra.mxu0 %v1851
    %2762 = vmatpush.bf16.msra.mxu0 %v1847
    %2763 = vmatpush.bf16.msra.mxu0 %v1843
    %2764 = vmatmul.bf16.gmra.mxu0 %v612
    %v2765 = vpop.f32.mrf.mxu0
    %v2766 = vadd.f32 %v2752, %v2765
    %v2767 = vpop.f32.mrf.mxu0
    %v2768 = vadd.f32 %v2754, %v2767
    %2769 = vdwg.mxu0
    %2770 = vmatpush.bf16.msra.mxu0 %v1903
    %2771 = vmatpush.bf16.msra.mxu0 %v1899
    %2772 = vmatpush.bf16.msra.mxu0 %v1895
    %2773 = vmatpush.bf16.msra.mxu0 %v1891
    %2774 = vmatpush.bf16.msra.mxu0 %v1887
    %2775 = vmatpush.bf16.msra.mxu0 %v1883
    %2776 = vmatpush.bf16.msra.mxu0 %v1879
    %2777 = vmatpush.bf16.msra.mxu0 %v1875
    %2778 = vmatmul.bf16.gmra.mxu0 %v613
    %v2779 = vpop.f32.mrf.mxu0
    %v2780 = vadd.f32 %v2766, %v2779
    %v2781 = vpop.f32.mrf.mxu0
    %v2782 = vadd.f32 %v2768, %v2781
    %2783 = vdwg.mxu0
    %v2784 = vmax.f32 %v2360, 0.0
    %v2785 = vmax.f32 %v2500, 0.0
    %v2786 = vmax.f32 %v2640, 0.0
    %v2787 = vmax.f32 %v2780, 0.0
    %v2788 = vmax.f32 %v2362, 0.0
    %v2789 = vmax.f32 %v2502, 0.0
    %v2790 = vmax.f32 %v2642, 0.0
    %v2791 = vmax.f32 %v2782, 0.0
    %v2792 = vpack.c.bf16 %v2788, %v2784
    %v2793 = vpack.c.bf16 %v2789, %v2785
    %v2794 = vpack.c.bf16 %v2790, %v2786
    %v2795 = vpack.c.bf16 %v2791, %v2787
    %v2796 = vld [vmem:[#allocation10] sm:$0xff]
    %v2797 = vld [vmem:[#allocation10 + $0x8] sm:$0xff]
    %v2798 = vld [vmem:[#allocation10 + $0x10] sm:$0xff]
    %v2799 = vld [vmem:[#allocation10 + $0x18] sm:$0xff]
    %v2800 = vld [vmem:[#allocation10 + $0x20] sm:$0xff]
    %v2801 = vld [vmem:[#allocation10 + $0x28] sm:$0xff]
    %v2802 = vld [vmem:[#allocation10 + $0x30] sm:$0xff]
    %v2803 = vld [vmem:[#allocation10 + $0x38] sm:$0xff]
    %v2804 = vld [vmem:[#allocation10 + $0x40] sm:$0xff]
    %v2805 = vld [vmem:[#allocation10 + $0x48] sm:$0xff]
    %v2806 = vld [vmem:[#allocation10 + $0x50] sm:$0xff]
    %v2807 = vld [vmem:[#allocation10 + $0x58] sm:$0xff]
    %v2808 = vld [vmem:[#allocation10 + $0x60] sm:$0xff]
    %v2809 = vld [vmem:[#allocation10 + $0x68] sm:$0xff]
    %v2810 = vld [vmem:[#allocation10 + $0x70] sm:$0xff]
    %v2811 = vld [vmem:[#allocation10 + $0x78] sm:$0xff]
    %v2812 = vld [vmem:[#allocation10 + $0x80] sm:$0xff]
    %v2813 = vld [vmem:[#allocation10 + $0x88] sm:$0xff]
    %v2814 = vld [vmem:[#allocation10 + $0x90] sm:$0xff]
    %v2815 = vld [vmem:[#allocation10 + $0x98] sm:$0xff]
    %v2816 = vld [vmem:[#allocation10 + $0xa0] sm:$0xff]
    %v2817 = vld [vmem:[#allocation10 + $0xa8] sm:$0xff]
    %v2818 = vld [vmem:[#allocation10 + $0xb0] sm:$0xff]
    %v2819 = vld [vmem:[#allocation10 + $0xb8] sm:$0xff]
    %v2820 = vld [vmem:[#allocation10 + $0xc0] sm:$0xff]
    %v2821 = vld [vmem:[#allocation10 + $0xc8] sm:$0xff]
    %v2822 = vld [vmem:[#allocation10 + $0xd0] sm:$0xff]
    %v2823 = vld [vmem:[#allocation10 + $0xd8] sm:$0xff]
    %v2824 = vld [vmem:[#allocation10 + $0xe0] sm:$0xff]
    %v2825 = vld [vmem:[#allocation10 + $0xe8] sm:$0xff]
    %v2826 = vld [vmem:[#allocation10 + $0xf0] sm:$0xff]
    %v2827 = vld [vmem:[#allocation10 + $0xf8] sm:$0xff]
    %v2828 = vld [vmem:[#allocation10 + $0x100] sm:$0xff]
    %v2829 = vld [vmem:[#allocation10 + $0x108] sm:$0xff]
    %v2830 = vld [vmem:[#allocation10 + $0x110] sm:$0xff]
    %v2831 = vld [vmem:[#allocation10 + $0x118] sm:$0xff]
    %v2832 = vld [vmem:[#allocation10 + $0x120] sm:$0xff]
    %v2833 = vld [vmem:[#allocation10 + $0x128] sm:$0xff]
    %v2834 = vld [vmem:[#allocation10 + $0x130] sm:$0xff]
    %v2835 = vld [vmem:[#allocation10 + $0x138] sm:$0xff]
    %v2836 = vld [vmem:[#allocation10 + $0x140] sm:$0xff]
    %v2837 = vld [vmem:[#allocation10 + $0x148] sm:$0xff]
    %v2838 = vld [vmem:[#allocation10 + $0x150] sm:$0xff]
    %v2839 = vld [vmem:[#allocation10 + $0x158] sm:$0xff]
    %v2840 = vld [vmem:[#allocation10 + $0x160] sm:$0xff]
    %v2841 = vld [vmem:[#allocation10 + $0x168] sm:$0xff]
    %v2842 = vld [vmem:[#allocation10 + $0x170] sm:$0xff]
    %v2843 = vld [vmem:[#allocation10 + $0x178] sm:$0xff]
    %v2844 = vld [vmem:[#allocation10 + $0x180] sm:$0xff]
    %v2845 = vld [vmem:[#allocation10 + $0x188] sm:$0xff]
    %v2846 = vld [vmem:[#allocation10 + $0x190] sm:$0xff]
    %v2847 = vld [vmem:[#allocation10 + $0x198] sm:$0xff]
    %v2848 = vld [vmem:[#allocation10 + $0x1a0] sm:$0xff]
    %v2849 = vld [vmem:[#allocation10 + $0x1a8] sm:$0xff]
    %v2850 = vld [vmem:[#allocation10 + $0x1b0] sm:$0xff]
    %v2851 = vld [vmem:[#allocation10 + $0x1b8] sm:$0xff]
    %v2852 = vld [vmem:[#allocation10 + $0x1c0] sm:$0xff]
    %v2853 = vld [vmem:[#allocation10 + $0x1c8] sm:$0xff]
    %v2854 = vld [vmem:[#allocation10 + $0x1d0] sm:$0xff]
    %v2855 = vld [vmem:[#allocation10 + $0x1d8] sm:$0xff]
    %v2856 = vld [vmem:[#allocation10 + $0x1e0] sm:$0xff]
    %v2857 = vld [vmem:[#allocation10 + $0x1e8] sm:$0xff]
    %v2858 = vld [vmem:[#allocation10 + $0x1f0] sm:$0xff]
    %v2859 = vld [vmem:[#allocation10 + $0x1f8] sm:$0xff]
    %v2860 = vld [vmem:[#allocation10 + $0x200] sm:$0xff]
    %v2861 = vld [vmem:[#allocation10 + $0x208] sm:$0xff]
    %v2862 = vld [vmem:[#allocation10 + $0x210] sm:$0xff]
    %v2863 = vld [vmem:[#allocation10 + $0x218] sm:$0xff]
    %v2864 = vld [vmem:[#allocation10 + $0x220] sm:$0xff]
    %v2865 = vld [vmem:[#allocation10 + $0x228] sm:$0xff]
    %v2866 = vld [vmem:[#allocation10 + $0x230] sm:$0xff]
    %v2867 = vld [vmem:[#allocation10 + $0x238] sm:$0xff]
    %v2868 = vld [vmem:[#allocation10 + $0x240] sm:$0xff]
    %v2869 = vld [vmem:[#allocation10 + $0x248] sm:$0xff]
    %v2870 = vld [vmem:[#allocation10 + $0x250] sm:$0xff]
    %v2871 = vld [vmem:[#allocation10 + $0x258] sm:$0xff]
    %v2872 = vld [vmem:[#allocation10 + $0x260] sm:$0xff]
    %v2873 = vld [vmem:[#allocation10 + $0x268] sm:$0xff]
    %v2874 = vld [vmem:[#allocation10 + $0x270] sm:$0xff]
    %v2875 = vld [vmem:[#allocation10 + $0x278] sm:$0xff]
    %v2876 = vld [vmem:[#allocation10 + $0x280] sm:$0xff]
    %v2877 = vld [vmem:[#allocation10 + $0x288] sm:$0xff]
    %v2878 = vld [vmem:[#allocation10 + $0x290] sm:$0xff]
    %v2879 = vld [vmem:[#allocation10 + $0x298] sm:$0xff]
    %v2880 = vld [vmem:[#allocation10 + $0x2a0] sm:$0xff]
    %v2881 = vld [vmem:[#allocation10 + $0x2a8] sm:$0xff]
    %v2882 = vld [vmem:[#allocation10 + $0x2b0] sm:$0xff]
    %v2883 = vld [vmem:[#allocation10 + $0x2b8] sm:$0xff]
    %v2884 = vld [vmem:[#allocation10 + $0x2c0] sm:$0xff]
    %v2885 = vld [vmem:[#allocation10 + $0x2c8] sm:$0xff]
    %v2886 = vld [vmem:[#allocation10 + $0x2d0] sm:$0xff]
    %v2887 = vld [vmem:[#allocation10 + $0x2d8] sm:$0xff]
    %v2888 = vld [vmem:[#allocation10 + $0x2e0] sm:$0xff]
    %v2889 = vld [vmem:[#allocation10 + $0x2e8] sm:$0xff]
    %v2890 = vld [vmem:[#allocation10 + $0x2f0] sm:$0xff]
    %v2891 = vld [vmem:[#allocation10 + $0x2f8] sm:$0xff]
    %v2892 = vld [vmem:[#allocation10 + $0x300] sm:$0xff]
    %v2893 = vld [vmem:[#allocation10 + $0x308] sm:$0xff]
    %v2894 = vld [vmem:[#allocation10 + $0x310] sm:$0xff]
    %v2895 = vld [vmem:[#allocation10 + $0x318] sm:$0xff]
    %v2896 = vld [vmem:[#allocation10 + $0x320] sm:$0xff]
    %v2897 = vld [vmem:[#allocation10 + $0x328] sm:$0xff]
    %v2898 = vld [vmem:[#allocation10 + $0x330] sm:$0xff]
    %v2899 = vld [vmem:[#allocation10 + $0x338] sm:$0xff]
    %v2900 = vld [vmem:[#allocation10 + $0x340] sm:$0xff]
    %v2901 = vld [vmem:[#allocation10 + $0x348] sm:$0xff]
    %v2902 = vld [vmem:[#allocation10 + $0x350] sm:$0xff]
    %v2903 = vld [vmem:[#allocation10 + $0x358] sm:$0xff]
    %v2904 = vld [vmem:[#allocation10 + $0x360] sm:$0xff]
    %v2905 = vld [vmem:[#allocation10 + $0x368] sm:$0xff]
    %v2906 = vld [vmem:[#allocation10 + $0x370] sm:$0xff]
    %v2907 = vld [vmem:[#allocation10 + $0x378] sm:$0xff]
    %v2908 = vld [vmem:[#allocation10 + $0x380] sm:$0xff]
    %v2909 = vld [vmem:[#allocation10 + $0x388] sm:$0xff]
    %v2910 = vld [vmem:[#allocation10 + $0x390] sm:$0xff]
    %v2911 = vld [vmem:[#allocation10 + $0x398] sm:$0xff]
    %v2912 = vld [vmem:[#allocation10 + $0x3a0] sm:$0xff]
    %v2913 = vld [vmem:[#allocation10 + $0x3a8] sm:$0xff]
    %v2914 = vld [vmem:[#allocation10 + $0x3b0] sm:$0xff]
    %v2915 = vld [vmem:[#allocation10 + $0x3b8] sm:$0xff]
    %v2916 = vld [vmem:[#allocation10 + $0x3c0] sm:$0xff]
    %v2917 = vld [vmem:[#allocation10 + $0x3c8] sm:$0xff]
    %v2918 = vld [vmem:[#allocation10 + $0x3d0] sm:$0xff]
    %v2919 = vld [vmem:[#allocation10 + $0x3d8] sm:$0xff]
    %v2920 = vld [vmem:[#allocation10 + $0x3e0] sm:$0xff]
    %v2921 = vld [vmem:[#allocation10 + $0x3e8] sm:$0xff]
    %v2922 = vld [vmem:[#allocation10 + $0x3f0] sm:$0xff]
    %v2923 = vld [vmem:[#allocation10 + $0x3f8] sm:$0xff]
    %v2924 = vld [vmem:[#allocation11] sm:$0xf]
    %v2926 = vperm.slane %v2924, 0
    %v2927 = vperm.slane %v2924, 1
    %v2928 = vperm.slane %v2924, 2
    %v2929 = vperm.slane %v2924, 3
    %v3062 = vunpack.c.l.b16 %v2796
    %v3063 = vunpack.c.h.b16 %v2796
    %v3064 = vunpack.c.l.b16 %v2797
    %v3065 = vunpack.c.h.b16 %v2797
    %v3066 = vunpack.c.l.b16 %v2798
    %v3067 = vunpack.c.h.b16 %v2798
    %v3068 = vunpack.c.l.b16 %v2799
    %v3069 = vunpack.c.h.b16 %v2799
    %v3070 = vunpack.c.l.b16 %v2800
    %v3071 = vunpack.c.h.b16 %v2800
    %v3072 = vunpack.c.l.b16 %v2801
    %v3073 = vunpack.c.h.b16 %v2801
    %v3074 = vunpack.c.l.b16 %v2802
    %v3075 = vunpack.c.h.b16 %v2802
    %v3076 = vunpack.c.l.b16 %v2803
    %v3077 = vunpack.c.h.b16 %v2803
    %v3078 = vunpack.c.l.b16 %v2804
    %v3079 = vunpack.c.h.b16 %v2804
    %v3080 = vunpack.c.l.b16 %v2805
    %v3081 = vunpack.c.h.b16 %v2805
    %v3082 = vunpack.c.l.b16 %v2806
    %v3083 = vunpack.c.h.b16 %v2806
    %v3084 = vunpack.c.l.b16 %v2807
    %v3085 = vunpack.c.h.b16 %v2807
    %v3086 = vunpack.c.l.b16 %v2808
    %v3087 = vunpack.c.h.b16 %v2808
    %v3088 = vunpack.c.l.b16 %v2809
    %v3089 = vunpack.c.h.b16 %v2809
    %v3090 = vunpack.c.l.b16 %v2810
    %v3091 = vunpack.c.h.b16 %v2810
    %v3092 = vunpack.c.l.b16 %v2811
    %v3093 = vunpack.c.h.b16 %v2811
    %v3094 = vunpack.c.l.b16 %v2812
    %v3095 = vunpack.c.h.b16 %v2812
    %v3096 = vunpack.c.l.b16 %v2813
    %v3097 = vunpack.c.h.b16 %v2813
    %v3098 = vunpack.c.l.b16 %v2814
    %v3099 = vunpack.c.h.b16 %v2814
    %v3100 = vunpack.c.l.b16 %v2815
    %v3101 = vunpack.c.h.b16 %v2815
    %v3102 = vunpack.c.l.b16 %v2816
    %v3103 = vunpack.c.h.b16 %v2816
    %v3104 = vunpack.c.l.b16 %v2817
    %v3105 = vunpack.c.h.b16 %v2817
    %v3106 = vunpack.c.l.b16 %v2818
    %v3107 = vunpack.c.h.b16 %v2818
    %v3108 = vunpack.c.l.b16 %v2819
    %v3109 = vunpack.c.h.b16 %v2819
    %v3110 = vunpack.c.l.b16 %v2820
    %v3111 = vunpack.c.h.b16 %v2820
    %v3112 = vunpack.c.l.b16 %v2821
    %v3113 = vunpack.c.h.b16 %v2821
    %v3114 = vunpack.c.l.b16 %v2822
    %v3115 = vunpack.c.h.b16 %v2822
    %v3116 = vunpack.c.l.b16 %v2823
    %v3117 = vunpack.c.h.b16 %v2823
    %v3118 = vunpack.c.l.b16 %v2824
    %v3119 = vunpack.c.h.b16 %v2824
    %v3120 = vunpack.c.l.b16 %v2825
    %v3121 = vunpack.c.h.b16 %v2825
    %v3122 = vunpack.c.l.b16 %v2826
    %v3123 = vunpack.c.h.b16 %v2826
    %v3124 = vunpack.c.l.b16 %v2827
    %v3125 = vunpack.c.h.b16 %v2827
    %v3126 = vunpack.c.l.b16 %v2828
    %v3127 = vunpack.c.h.b16 %v2828
    %v3128 = vunpack.c.l.b16 %v2829
    %v3129 = vunpack.c.h.b16 %v2829
    %v3130 = vunpack.c.l.b16 %v2830
    %v3131 = vunpack.c.h.b16 %v2830
    %v3132 = vunpack.c.l.b16 %v2831
    %v3133 = vunpack.c.h.b16 %v2831
    %v3134 = vunpack.c.l.b16 %v2832
    %v3135 = vunpack.c.h.b16 %v2832
    %v3136 = vunpack.c.l.b16 %v2833
    %v3137 = vunpack.c.h.b16 %v2833
    %v3138 = vunpack.c.l.b16 %v2834
    %v3139 = vunpack.c.h.b16 %v2834
    %v3140 = vunpack.c.l.b16 %v2835
    %v3141 = vunpack.c.h.b16 %v2835
    %v3142 = vunpack.c.l.b16 %v2836
    %v3143 = vunpack.c.h.b16 %v2836
    %v3144 = vunpack.c.l.b16 %v2837
    %v3145 = vunpack.c.h.b16 %v2837
    %v3146 = vunpack.c.l.b16 %v2838
    %v3147 = vunpack.c.h.b16 %v2838
    %v3148 = vunpack.c.l.b16 %v2839
    %v3149 = vunpack.c.h.b16 %v2839
    %v3150 = vunpack.c.l.b16 %v2840
    %v3151 = vunpack.c.h.b16 %v2840
    %v3152 = vunpack.c.l.b16 %v2841
    %v3153 = vunpack.c.h.b16 %v2841
    %v3154 = vunpack.c.l.b16 %v2842
    %v3155 = vunpack.c.h.b16 %v2842
    %v3156 = vunpack.c.l.b16 %v2843
    %v3157 = vunpack.c.h.b16 %v2843
    %v3158 = vunpack.c.l.b16 %v2844
    %v3159 = vunpack.c.h.b16 %v2844
    %v3160 = vunpack.c.l.b16 %v2845
    %v3161 = vunpack.c.h.b16 %v2845
    %v3162 = vunpack.c.l.b16 %v2846
    %v3163 = vunpack.c.h.b16 %v2846
    %v3164 = vunpack.c.l.b16 %v2847
    %v3165 = vunpack.c.h.b16 %v2847
    %v3166 = vunpack.c.l.b16 %v2848
    %v3167 = vunpack.c.h.b16 %v2848
    %v3168 = vunpack.c.l.b16 %v2849
    %v3169 = vunpack.c.h.b16 %v2849
    %v3170 = vunpack.c.l.b16 %v2850
    %v3171 = vunpack.c.h.b16 %v2850
    %v3172 = vunpack.c.l.b16 %v2851
    %v3173 = vunpack.c.h.b16 %v2851
    %v3174 = vunpack.c.l.b16 %v2852
    %v3175 = vunpack.c.h.b16 %v2852
    %v3176 = vunpack.c.l.b16 %v2853
    %v3177 = vunpack.c.h.b16 %v2853
    %v3178 = vunpack.c.l.b16 %v2854
    %v3179 = vunpack.c.h.b16 %v2854
    %v3180 = vunpack.c.l.b16 %v2855
    %v3181 = vunpack.c.h.b16 %v2855
    %v3182 = vunpack.c.l.b16 %v2856
    %v3183 = vunpack.c.h.b16 %v2856
    %v3184 = vunpack.c.l.b16 %v2857
    %v3185 = vunpack.c.h.b16 %v2857
    %v3186 = vunpack.c.l.b16 %v2858
    %v3187 = vunpack.c.h.b16 %v2858
    %v3188 = vunpack.c.l.b16 %v2859
    %v3189 = vunpack.c.h.b16 %v2859
    %v3190 = vunpack.c.l.b16 %v2860
    %v3191 = vunpack.c.h.b16 %v2860
    %v3192 = vunpack.c.l.b16 %v2861
    %v3193 = vunpack.c.h.b16 %v2861
    %v3194 = vunpack.c.l.b16 %v2862
    %v3195 = vunpack.c.h.b16 %v2862
    %v3196 = vunpack.c.l.b16 %v2863
    %v3197 = vunpack.c.h.b16 %v2863
    %v3198 = vunpack.c.l.b16 %v2864
    %v3199 = vunpack.c.h.b16 %v2864
    %v3200 = vunpack.c.l.b16 %v2865
    %v3201 = vunpack.c.h.b16 %v2865
    %v3202 = vunpack.c.l.b16 %v2866
    %v3203 = vunpack.c.h.b16 %v2866
    %v3204 = vunpack.c.l.b16 %v2867
    %v3205 = vunpack.c.h.b16 %v2867
    %v3206 = vunpack.c.l.b16 %v2868
    %v3207 = vunpack.c.h.b16 %v2868
    %v3208 = vunpack.c.l.b16 %v2869
    %v3209 = vunpack.c.h.b16 %v2869
    %v3210 = vunpack.c.l.b16 %v2870
    %v3211 = vunpack.c.h.b16 %v2870
    %v3212 = vunpack.c.l.b16 %v2871
    %v3213 = vunpack.c.h.b16 %v2871
    %v3214 = vunpack.c.l.b16 %v2872
    %v3215 = vunpack.c.h.b16 %v2872
    %v3216 = vunpack.c.l.b16 %v2873
    %v3217 = vunpack.c.h.b16 %v2873
    %v3218 = vunpack.c.l.b16 %v2874
    %v3219 = vunpack.c.h.b16 %v2874
    %v3220 = vunpack.c.l.b16 %v2875
    %v3221 = vunpack.c.h.b16 %v2875
    %v3222 = vunpack.c.l.b16 %v2876
    %v3223 = vunpack.c.h.b16 %v2876
    %v3224 = vunpack.c.l.b16 %v2877
    %v3225 = vunpack.c.h.b16 %v2877
    %v3226 = vunpack.c.l.b16 %v2878
    %v3227 = vunpack.c.h.b16 %v2878
    %v3228 = vunpack.c.l.b16 %v2879
    %v3229 = vunpack.c.h.b16 %v2879
    %v3230 = vunpack.c.l.b16 %v2880
    %v3231 = vunpack.c.h.b16 %v2880
    %v3232 = vunpack.c.l.b16 %v2881
    %v3233 = vunpack.c.h.b16 %v2881
    %v3234 = vunpack.c.l.b16 %v2882
    %v3235 = vunpack.c.h.b16 %v2882
    %v3236 = vunpack.c.l.b16 %v2883
    %v3237 = vunpack.c.h.b16 %v2883
    %v3238 = vunpack.c.l.b16 %v2884
    %v3239 = vunpack.c.h.b16 %v2884
    %v3240 = vunpack.c.l.b16 %v2885
    %v3241 = vunpack.c.h.b16 %v2885
    %v3242 = vunpack.c.l.b16 %v2886
    %v3243 = vunpack.c.h.b16 %v2886
    %v3244 = vunpack.c.l.b16 %v2887
    %v3245 = vunpack.c.h.b16 %v2887
    %v3246 = vunpack.c.l.b16 %v2888
    %v3247 = vunpack.c.h.b16 %v2888
    %v3248 = vunpack.c.l.b16 %v2889
    %v3249 = vunpack.c.h.b16 %v2889
    %v3250 = vunpack.c.l.b16 %v2890
    %v3251 = vunpack.c.h.b16 %v2890
    %v3252 = vunpack.c.l.b16 %v2891
    %v3253 = vunpack.c.h.b16 %v2891
    %v3254 = vunpack.c.l.b16 %v2892
    %v3255 = vunpack.c.h.b16 %v2892
    %v3256 = vunpack.c.l.b16 %v2893
    %v3257 = vunpack.c.h.b16 %v2893
    %v3258 = vunpack.c.l.b16 %v2894
    %v3259 = vunpack.c.h.b16 %v2894
    %v3260 = vunpack.c.l.b16 %v2895
    %v3261 = vunpack.c.h.b16 %v2895
    %v3262 = vunpack.c.l.b16 %v2896
    %v3263 = vunpack.c.h.b16 %v2896
    %v3264 = vunpack.c.l.b16 %v2897
    %v3265 = vunpack.c.h.b16 %v2897
    %v3266 = vunpack.c.l.b16 %v2898
    %v3267 = vunpack.c.h.b16 %v2898
    %v3268 = vunpack.c.l.b16 %v2899
    %v3269 = vunpack.c.h.b16 %v2899
    %v3270 = vunpack.c.l.b16 %v2900
    %v3271 = vunpack.c.h.b16 %v2900
    %v3272 = vunpack.c.l.b16 %v2901
    %v3273 = vunpack.c.h.b16 %v2901
    %v3274 = vunpack.c.l.b16 %v2902
    %v3275 = vunpack.c.h.b16 %v2902
    %v3276 = vunpack.c.l.b16 %v2903
    %v3277 = vunpack.c.h.b16 %v2903
    %v3278 = vunpack.c.l.b16 %v2904
    %v3279 = vunpack.c.h.b16 %v2904
    %v3280 = vunpack.c.l.b16 %v2905
    %v3281 = vunpack.c.h.b16 %v2905
    %v3282 = vunpack.c.l.b16 %v2906
    %v3283 = vunpack.c.h.b16 %v2906
    %v3284 = vunpack.c.l.b16 %v2907
    %v3285 = vunpack.c.h.b16 %v2907
    %v3286 = vunpack.c.l.b16 %v2908
    %v3287 = vunpack.c.h.b16 %v2908
    %v3288 = vunpack.c.l.b16 %v2909
    %v3289 = vunpack.c.h.b16 %v2909
    %v3290 = vunpack.c.l.b16 %v2910
    %v3291 = vunpack.c.h.b16 %v2910
    %v3292 = vunpack.c.l.b16 %v2911
    %v3293 = vunpack.c.h.b16 %v2911
    %v3294 = vunpack.c.l.b16 %v2912
    %v3295 = vunpack.c.h.b16 %v2912
    %v3296 = vunpack.c.l.b16 %v2913
    %v3297 = vunpack.c.h.b16 %v2913
    %v3298 = vunpack.c.l.b16 %v2914
    %v3299 = vunpack.c.h.b16 %v2914
    %v3300 = vunpack.c.l.b16 %v2915
    %v3301 = vunpack.c.h.b16 %v2915
    %v3302 = vunpack.c.l.b16 %v2916
    %v3303 = vunpack.c.h.b16 %v2916
    %v3304 = vunpack.c.l.b16 %v2917
    %v3305 = vunpack.c.h.b16 %v2917
    %v3306 = vunpack.c.l.b16 %v2918
    %v3307 = vunpack.c.h.b16 %v2918
    %v3308 = vunpack.c.l.b16 %v2919
    %v3309 = vunpack.c.h.b16 %v2919
    %v3310 = vunpack.c.l.b16 %v2920
    %v3311 = vunpack.c.h.b16 %v2920
    %v3312 = vunpack.c.l.b16 %v2921
    %v3313 = vunpack.c.h.b16 %v2921
    %v3314 = vunpack.c.l.b16 %v2922
    %v3315 = vunpack.c.h.b16 %v2922
    %v3316 = vunpack.c.l.b16 %v2923
    %v3317 = vunpack.c.h.b16 %v2923
    %v3318 = vpack.c.b16 %v3066, %v3062
    %v3319 = vpack.c.b16 %v3067, %v3063
    %v3320 = vpack.c.b16 %v3068, %v3064
    %v3321 = vpack.c.b16 %v3069, %v3065
    %v3322 = vpack.c.b16 %v3074, %v3070
    %v3323 = vpack.c.b16 %v3075, %v3071
    %v3324 = vpack.c.b16 %v3076, %v3072
    %v3325 = vpack.c.b16 %v3077, %v3073
    %v3326 = vpack.c.b16 %v3082, %v3078
    %v3327 = vpack.c.b16 %v3083, %v3079
    %v3328 = vpack.c.b16 %v3084, %v3080
    %v3329 = vpack.c.b16 %v3085, %v3081
    %v3330 = vpack.c.b16 %v3090, %v3086
    %v3331 = vpack.c.b16 %v3091, %v3087
    %v3332 = vpack.c.b16 %v3092, %v3088
    %v3333 = vpack.c.b16 %v3093, %v3089
    %v3334 = vpack.c.b16 %v3098, %v3094
    %v3335 = vpack.c.b16 %v3099, %v3095
    %v3336 = vpack.c.b16 %v3100, %v3096
    %v3337 = vpack.c.b16 %v3101, %v3097
    %v3338 = vpack.c.b16 %v3106, %v3102
    %v3339 = vpack.c.b16 %v3107, %v3103
    %v3340 = vpack.c.b16 %v3108, %v3104
    %v3341 = vpack.c.b16 %v3109, %v3105
    %v3342 = vpack.c.b16 %v3114, %v3110
    %v3343 = vpack.c.b16 %v3115, %v3111
    %v3344 = vpack.c.b16 %v3116, %v3112
    %v3345 = vpack.c.b16 %v3117, %v3113
    %v3346 = vpack.c.b16 %v3122, %v3118
    %v3347 = vpack.c.b16 %v3123, %v3119
    %v3348 = vpack.c.b16 %v3124, %v3120
    %v3349 = vpack.c.b16 %v3125, %v3121
    %v3350 = vpack.c.b16 %v3130, %v3126
    %v3351 = vpack.c.b16 %v3131, %v3127
    %v3352 = vpack.c.b16 %v3132, %v3128
    %v3353 = vpack.c.b16 %v3133, %v3129
    %v3354 = vpack.c.b16 %v3138, %v3134
    %v3355 = vpack.c.b16 %v3139, %v3135
    %v3356 = vpack.c.b16 %v3140, %v3136
    %v3357 = vpack.c.b16 %v3141, %v3137
    %v3358 = vpack.c.b16 %v3146, %v3142
    %v3359 = vpack.c.b16 %v3147, %v3143
    %v3360 = vpack.c.b16 %v3148, %v3144
    %v3361 = vpack.c.b16 %v3149, %v3145
    %v3362 = vpack.c.b16 %v3154, %v3150
    %v3363 = vpack.c.b16 %v3155, %v3151
    %v3364 = vpack.c.b16 %v3156, %v3152
    %v3365 = vpack.c.b16 %v3157, %v3153
    %v3366 = vpack.c.b16 %v3162, %v3158
    %v3367 = vpack.c.b16 %v3163, %v3159
    %v3368 = vpack.c.b16 %v3164, %v3160
    %v3369 = vpack.c.b16 %v3165, %v3161
    %v3370 = vpack.c.b16 %v3170, %v3166
    %v3371 = vpack.c.b16 %v3171, %v3167
    %v3372 = vpack.c.b16 %v3172, %v3168
    %v3373 = vpack.c.b16 %v3173, %v3169
    %v3374 = vpack.c.b16 %v3178, %v3174
    %v3375 = vpack.c.b16 %v3179, %v3175
    %v3376 = vpack.c.b16 %v3180, %v3176
    %v3377 = vpack.c.b16 %v3181, %v3177
    %v3378 = vpack.c.b16 %v3186, %v3182
    %v3379 = vpack.c.b16 %v3187, %v3183
    %v3380 = vpack.c.b16 %v3188, %v3184
    %v3381 = vpack.c.b16 %v3189, %v3185
    %v3382 = vpack.c.b16 %v3194, %v3190
    %v3383 = vpack.c.b16 %v3195, %v3191
    %v3384 = vpack.c.b16 %v3196, %v3192
    %v3385 = vpack.c.b16 %v3197, %v3193
    %v3386 = vpack.c.b16 %v3202, %v3198
    %v3387 = vpack.c.b16 %v3203, %v3199
    %v3388 = vpack.c.b16 %v3204, %v3200
    %v3389 = vpack.c.b16 %v3205, %v3201
    %v3390 = vpack.c.b16 %v3210, %v3206
    %v3391 = vpack.c.b16 %v3211, %v3207
    %v3392 = vpack.c.b16 %v3212, %v3208
    %v3393 = vpack.c.b16 %v3213, %v3209
    %v3394 = vpack.c.b16 %v3218, %v3214
    %v3395 = vpack.c.b16 %v3219, %v3215
    %v3396 = vpack.c.b16 %v3220, %v3216
    %v3397 = vpack.c.b16 %v3221, %v3217
    %v3398 = vpack.c.b16 %v3226, %v3222
    %v3399 = vpack.c.b16 %v3227, %v3223
    %v3400 = vpack.c.b16 %v3228, %v3224
    %v3401 = vpack.c.b16 %v3229, %v3225
    %v3402 = vpack.c.b16 %v3234, %v3230
    %v3403 = vpack.c.b16 %v3235, %v3231
    %v3404 = vpack.c.b16 %v3236, %v3232
    %v3405 = vpack.c.b16 %v3237, %v3233
    %v3406 = vpack.c.b16 %v3242, %v3238
    %v3407 = vpack.c.b16 %v3243, %v3239
    %v3408 = vpack.c.b16 %v3244, %v3240
    %v3409 = vpack.c.b16 %v3245, %v3241
    %v3410 = vpack.c.b16 %v3250, %v3246
    %v3411 = vpack.c.b16 %v3251, %v3247
    %v3412 = vpack.c.b16 %v3252, %v3248
    %v3413 = vpack.c.b16 %v3253, %v3249
    %v3414 = vpack.c.b16 %v3258, %v3254
    %v3415 = vpack.c.b16 %v3259, %v3255
    %v3416 = vpack.c.b16 %v3260, %v3256
    %v3417 = vpack.c.b16 %v3261, %v3257
    %v3418 = vpack.c.b16 %v3266, %v3262
    %v3419 = vpack.c.b16 %v3267, %v3263
    %v3420 = vpack.c.b16 %v3268, %v3264
    %v3421 = vpack.c.b16 %v3269, %v3265
    %v3422 = vpack.c.b16 %v3274, %v3270
    %v3423 = vpack.c.b16 %v3275, %v3271
    %v3424 = vpack.c.b16 %v3276, %v3272
    %v3425 = vpack.c.b16 %v3277, %v3273
    %v3426 = vpack.c.b16 %v3282, %v3278
    %v3427 = vpack.c.b16 %v3283, %v3279
    %v3428 = vpack.c.b16 %v3284, %v3280
    %v3429 = vpack.c.b16 %v3285, %v3281
    %v3430 = vpack.c.b16 %v3290, %v3286
    %v3431 = vpack.c.b16 %v3291, %v3287
    %v3432 = vpack.c.b16 %v3292, %v3288
    %v3433 = vpack.c.b16 %v3293, %v3289
    %v3434 = vpack.c.b16 %v3298, %v3294
    %v3435 = vpack.c.b16 %v3299, %v3295
    %v3436 = vpack.c.b16 %v3300, %v3296
    %v3437 = vpack.c.b16 %v3301, %v3297
    %v3438 = vpack.c.b16 %v3306, %v3302
    %v3439 = vpack.c.b16 %v3307, %v3303
    %v3440 = vpack.c.b16 %v3308, %v3304
    %v3441 = vpack.c.b16 %v3309, %v3305
    %v3442 = vpack.c.b16 %v3314, %v3310
    %v3443 = vpack.c.b16 %v3315, %v3311
    %v3444 = vpack.c.b16 %v3316, %v3312
    %v3445 = vpack.c.b16 %v3317, %v3313
    %3574 = vmatpush.bf16.msra.mxu0 %v3346
    %3575 = vmatpush.bf16.msra.mxu0 %v3342
    %3576 = vmatpush.bf16.msra.mxu0 %v3338
    %3577 = vmatpush.bf16.msra.mxu0 %v3334
    %3578 = vmatpush.bf16.msra.mxu0 %v3330
    %3579 = vmatpush.bf16.msra.mxu0 %v3326
    %3580 = vmatpush.bf16.msra.mxu0 %v3322
    %3581 = vmatpush.bf16.msra.mxu0 %v3318
    %3582 = vmatmul.bf16.gmra.mxu0 %v2792
    %v3583 = vpop.f32.mrf.mxu0
    %v3584 = vadd.f32 %v2926, %v3583
    %v3585 = vpop.f32.mrf.mxu0
    %v3586 = vadd.f32 %v2926, %v3585
    %3587 = vdwg.mxu0
    %3588 = vmatpush.bf16.msra.mxu0 %v3378
    %3589 = vmatpush.bf16.msra.mxu0 %v3374
    %3590 = vmatpush.bf16.msra.mxu0 %v3370
    %3591 = vmatpush.bf16.msra.mxu0 %v3366
    %3592 = vmatpush.bf16.msra.mxu0 %v3362
    %3593 = vmatpush.bf16.msra.mxu0 %v3358
    %3594 = vmatpush.bf16.msra.mxu0 %v3354
    %3595 = vmatpush.bf16.msra.mxu0 %v3350
    %3596 = vmatmul.bf16.gmra.mxu0 %v2793
    %v3597 = vpop.f32.mrf.mxu0
    %v3598 = vadd.f32 %v3584, %v3597
    %v3599 = vpop.f32.mrf.mxu0
    %v3600 = vadd.f32 %v3586, %v3599
    %3601 = vdwg.mxu0
    %3602 = vmatpush.bf16.msra.mxu0 %v3410
    %3603 = vmatpush.bf16.msra.mxu0 %v3406
    %3604 = vmatpush.bf16.msra.mxu0 %v3402
    %3605 = vmatpush.bf16.msra.mxu0 %v3398
    %3606 = vmatpush.bf16.msra.mxu0 %v3394
    %3607 = vmatpush.bf16.msra.mxu0 %v3390
    %3608 = vmatpush.bf16.msra.mxu0 %v3386
    %3609 = vmatpush.bf16.msra.mxu0 %v3382
    %3610 = vmatmul.bf16.gmra.mxu0 %v2794
    %v3611 = vpop.f32.mrf.mxu0
    %v3612 = vadd.f32 %v3598, %v3611
    %v3613 = vpop.f32.mrf.mxu0
    %v3614 = vadd.f32 %v3600, %v3613
    %3615 = vdwg.mxu0
    %3616 = vmatpush.bf16.msra.mxu0 %v3442
    %3617 = vmatpush.bf16.msra.mxu0 %v3438
    %3618 = vmatpush.bf16.msra.mxu0 %v3434
    %3619 = vmatpush.bf16.msra.mxu0 %v3430
    %3620 = vmatpush.bf16.msra.mxu0 %v3426
    %3621 = vmatpush.bf16.msra.mxu0 %v3422
    %3622 = vmatpush.bf16.msra.mxu0 %v3418
    %3623 = vmatpush.bf16.msra.mxu0 %v3414
    %3624 = vmatmul.bf16.gmra.mxu0 %v2795
    %v3625 = vpop.f32.mrf.mxu0
    %v3626 = vadd.f32 %v3612, %v3625
    %v3627 = vpop.f32.mrf.mxu0
    %v3628 = vadd.f32 %v3614, %v3627
    %3629 = vdwg.mxu0
    %3630 = vmatpush.bf16.msra.mxu0 %v3347
    %3631 = vmatpush.bf16.msra.mxu0 %v3343
    %3632 = vmatpush.bf16.msra.mxu0 %v3339
    %3633 = vmatpush.bf16.msra.mxu0 %v3335
    %3634 = vmatpush.bf16.msra.mxu0 %v3331
    %3635 = vmatpush.bf16.msra.mxu0 %v3327
    %3636 = vmatpush.bf16.msra.mxu0 %v3323
    %3637 = vmatpush.bf16.msra.mxu0 %v3319
    %3638 = vmatmul.bf16.gmra.mxu0 %v2792
    %v3639 = vpop.f32.mrf.mxu0
    %v3640 = vadd.f32 %v2927, %v3639
    %v3641 = vpop.f32.mrf.mxu0
    %v3642 = vadd.f32 %v2927, %v3641
    %3643 = vdwg.mxu0
    %3644 = vmatpush.bf16.msra.mxu0 %v3379
    %3645 = vmatpush.bf16.msra.mxu0 %v3375
    %3646 = vmatpush.bf16.msra.mxu0 %v3371
    %3647 = vmatpush.bf16.msra.mxu0 %v3367
    %3648 = vmatpush.bf16.msra.mxu0 %v3363
    %3649 = vmatpush.bf16.msra.mxu0 %v3359
    %3650 = vmatpush.bf16.msra.mxu0 %v3355
    %3651 = vmatpush.bf16.msra.mxu0 %v3351
    %3652 = vmatmul.bf16.gmra.mxu0 %v2793
    %v3653 = vpop.f32.mrf.mxu0
    %v3654 = vadd.f32 %v3640, %v3653
    %v3655 = vpop.f32.mrf.mxu0
    %v3656 = vadd.f32 %v3642, %v3655
    %3657 = vdwg.mxu0
    %3658 = vmatpush.bf16.msra.mxu0 %v3411
    %3659 = vmatpush.bf16.msra.mxu0 %v3407
    %3660 = vmatpush.bf16.msra.mxu0 %v3403
    %3661 = vmatpush.bf16.msra.mxu0 %v3399
    %3662 = vmatpush.bf16.msra.mxu0 %v3395
    %3663 = vmatpush.bf16.msra.mxu0 %v3391
    %3664 = vmatpush.bf16.msra.mxu0 %v3387
    %3665 = vmatpush.bf16.msra.mxu0 %v3383
    %3666 = vmatmul.bf16.gmra.mxu0 %v2794
    %v3667 = vpop.f32.mrf.mxu0
    %v3668 = vadd.f32 %v3654, %v3667
    %v3669 = vpop.f32.mrf.mxu0
    %v3670 = vadd.f32 %v3656, %v3669
    %3671 = vdwg.mxu0
    %3672 = vmatpush.bf16.msra.mxu0 %v3443
    %3673 = vmatpush.bf16.msra.mxu0 %v3439
    %3674 = vmatpush.bf16.msra.mxu0 %v3435
    %3675 = vmatpush.bf16.msra.mxu0 %v3431
    %3676 = vmatpush.bf16.msra.mxu0 %v3427
    %3677 = vmatpush.bf16.msra.mxu0 %v3423
    %3678 = vmatpush.bf16.msra.mxu0 %v3419
    %3679 = vmatpush.bf16.msra.mxu0 %v3415
    %3680 = vmatmul.bf16.gmra.mxu0 %v2795
    %v3681 = vpop.f32.mrf.mxu0
    %v3682 = vadd.f32 %v3668, %v3681
    %v3683 = vpop.f32.mrf.mxu0
    %v3684 = vadd.f32 %v3670, %v3683
    %3685 = vdwg.mxu0
    %3686 = vmatpush.bf16.msra.mxu0 %v3348
    %3687 = vmatpush.bf16.msra.mxu0 %v3344
    %3688 = vmatpush.bf16.msra.mxu0 %v3340
    %3689 = vmatpush.bf16.msra.mxu0 %v3336
    %3690 = vmatpush.bf16.msra.mxu0 %v3332
    %3691 = vmatpush.bf16.msra.mxu0 %v3328
    %3692 = vmatpush.bf16.msra.mxu0 %v3324
    %3693 = vmatpush.bf16.msra.mxu0 %v3320
    %3694 = vmatmul.bf16.gmra.mxu0 %v2792
    %v3695 = vpop.f32.mrf.mxu0
    %v3696 = vadd.f32 %v2928, %v3695
    %v3697 = vpop.f32.mrf.mxu0
    %v3698 = vadd.f32 %v2928, %v3697
    %3699 = vdwg.mxu0
    %3700 = vmatpush.bf16.msra.mxu0 %v3380
    %3701 = vmatpush.bf16.msra.mxu0 %v3376
    %3702 = vmatpush.bf16.msra.mxu0 %v3372
    %3703 = vmatpush.bf16.msra.mxu0 %v3368
    %3704 = vmatpush.bf16.msra.mxu0 %v3364
    %3705 = vmatpush.bf16.msra.mxu0 %v3360
    %3706 = vmatpush.bf16.msra.mxu0 %v3356
    %3707 = vmatpush.bf16.msra.mxu0 %v3352
    %3708 = vmatmul.bf16.gmra.mxu0 %v2793
    %v3709 = vpop.f32.mrf.mxu0
    %v3710 = vadd.f32 %v3696, %v3709
    %v3711 = vpop.f32.mrf.mxu0
    %v3712 = vadd.f32 %v3698, %v3711
    %3713 = vdwg.mxu0
    %3714 = vmatpush.bf16.msra.mxu0 %v3412
    %3715 = vmatpush.bf16.msra.mxu0 %v3408
    %3716 = vmatpush.bf16.msra.mxu0 %v3404
    %3717 = vmatpush.bf16.msra.mxu0 %v3400
    %3718 = vmatpush.bf16.msra.mxu0 %v3396
    %3719 = vmatpush.bf16.msra.mxu0 %v3392
    %3720 = vmatpush.bf16.msra.mxu0 %v3388
    %3721 = vmatpush.bf16.msra.mxu0 %v3384
    %3722 = vmatmul.bf16.gmra.mxu0 %v2794
    %v3723 = vpop.f32.mrf.mxu0
    %v3724 = vadd.f32 %v3710, %v3723
    %v3725 = vpop.f32.mrf.mxu0
    %v3726 = vadd.f32 %v3712, %v3725
    %3727 = vdwg.mxu0
    %3728 = vmatpush.bf16.msra.mxu0 %v3444
    %3729 = vmatpush.bf16.msra.mxu0 %v3440
    %3730 = vmatpush.bf16.msra.mxu0 %v3436
    %3731 = vmatpush.bf16.msra.mxu0 %v3432
    %3732 = vmatpush.bf16.msra.mxu0 %v3428
    %3733 = vmatpush.bf16.msra.mxu0 %v3424
    %3734 = vmatpush.bf16.msra.mxu0 %v3420
    %3735 = vmatpush.bf16.msra.mxu0 %v3416
    %3736 = vmatmul.bf16.gmra.mxu0 %v2795
    %v3737 = vpop.f32.mrf.mxu0
    %v3738 = vadd.f32 %v3724, %v3737
    %v3739 = vpop.f32.mrf.mxu0
    %v3740 = vadd.f32 %v3726, %v3739
    %3741 = vdwg.mxu0
    %3742 = vmatpush.bf16.msra.mxu0 %v3349
    %3743 = vmatpush.bf16.msra.mxu0 %v3345
    %3744 = vmatpush.bf16.msra.mxu0 %v3341
    %3745 = vmatpush.bf16.msra.mxu0 %v3337
    %3746 = vmatpush.bf16.msra.mxu0 %v3333
    %3747 = vmatpush.bf16.msra.mxu0 %v3329
    %3748 = vmatpush.bf16.msra.mxu0 %v3325
    %3749 = vmatpush.bf16.msra.mxu0 %v3321
    %3750 = vmatmul.bf16.gmra.mxu0 %v2792
    %v3751 = vpop.f32.mrf.mxu0
    %v3752 = vadd.f32 %v2929, %v3751
    %v3753 = vpop.f32.mrf.mxu0
    %v3754 = vadd.f32 %v2929, %v3753
    %3755 = vdwg.mxu0
    %3756 = vmatpush.bf16.msra.mxu0 %v3381
    %3757 = vmatpush.bf16.msra.mxu0 %v3377
    %3758 = vmatpush.bf16.msra.mxu0 %v3373
    %3759 = vmatpush.bf16.msra.mxu0 %v3369
    %3760 = vmatpush.bf16.msra.mxu0 %v3365
    %3761 = vmatpush.bf16.msra.mxu0 %v3361
    %3762 = vmatpush.bf16.msra.mxu0 %v3357
    %3763 = vmatpush.bf16.msra.mxu0 %v3353
    %3764 = vmatmul.bf16.gmra.mxu0 %v2793
    %v3765 = vpop.f32.mrf.mxu0
    %v3766 = vadd.f32 %v3752, %v3765
    %v3767 = vpop.f32.mrf.mxu0
    %v3768 = vadd.f32 %v3754, %v3767
    %3769 = vdwg.mxu0
    %3770 = vmatpush.bf16.msra.mxu0 %v3413
    %3771 = vmatpush.bf16.msra.mxu0 %v3409
    %3772 = vmatpush.bf16.msra.mxu0 %v3405
    %3773 = vmatpush.bf16.msra.mxu0 %v3401
    %3774 = vmatpush.bf16.msra.mxu0 %v3397
    %3775 = vmatpush.bf16.msra.mxu0 %v3393
    %3776 = vmatpush.bf16.msra.mxu0 %v3389
    %3777 = vmatpush.bf16.msra.mxu0 %v3385
    %3778 = vmatmul.bf16.gmra.mxu0 %v2794
    %v3779 = vpop.f32.mrf.mxu0
    %v3780 = vadd.f32 %v3766, %v3779
    %v3781 = vpop.f32.mrf.mxu0
    %v3782 = vadd.f32 %v3768, %v3781
    %3783 = vdwg.mxu0
    %3784 = vmatpush.bf16.msra.mxu0 %v3445
    %3785 = vmatpush.bf16.msra.mxu0 %v3441
    %3786 = vmatpush.bf16.msra.mxu0 %v3437
    %3787 = vmatpush.bf16.msra.mxu0 %v3433
    %3788 = vmatpush.bf16.msra.mxu0 %v3429
    %3789 = vmatpush.bf16.msra.mxu0 %v3425
    %3790 = vmatpush.bf16.msra.mxu0 %v3421
    %3791 = vmatpush.bf16.msra.mxu0 %v3417
    %3792 = vmatmul.bf16.gmra.mxu0 %v2795
    %v3793 = vpop.f32.mrf.mxu0
    %v3794 = vadd.f32 %v3780, %v3793
    %v3795 = vpop.f32.mrf.mxu0
    %v3796 = vadd.f32 %v3782, %v3795
    %3797 = vdwg.mxu0
    %v3798 = vmax.f32 %v3626, 0.0
    %v3799 = vmax.f32 %v3682, 0.0
    %v3800 = vmax.f32 %v3738, 0.0
    %v3801 = vmax.f32 %v3794, 0.0
    %v3802 = vmax.f32 %v3628, 0.0
    %v3803 = vmax.f32 %v3684, 0.0
    %v3804 = vmax.f32 %v3740, 0.0
    %v3805 = vmax.f32 %v3796, 0.0
    %v3806 = vpack.c.bf16 %v3802, %v3798
    %v3807 = vpack.c.bf16 %v3803, %v3799
    %v3808 = vpack.c.bf16 %v3804, %v3800
    %v3809 = vpack.c.bf16 %v3805, %v3801
    %v3810 = vld [vmem:[#allocation13] sm:$0xff]
    %v3811 = vld [vmem:[#allocation13 + $0x8] sm:$0xff]
    %v3812 = vld [vmem:[#allocation13 + $0x10] sm:$0xff]
    %v3813 = vld [vmem:[#allocation13 + $0x18] sm:$0xff]
    %v3814 = vld [vmem:[#allocation13 + $0x20] sm:$0xff]
    %v3815 = vld [vmem:[#allocation13 + $0x28] sm:$0xff]
    %v3816 = vld [vmem:[#allocation13 + $0x30] sm:$0xff]
    %v3817 = vld [vmem:[#allocation13 + $0x38] sm:$0xff]
    %v3818 = vld [vmem:[#allocation13 + $0x40] sm:$0xff]
    %v3819 = vld [vmem:[#allocation13 + $0x48] sm:$0xff]
    %v3820 = vld [vmem:[#allocation13 + $0x50] sm:$0xff]
    %v3821 = vld [vmem:[#allocation13 + $0x58] sm:$0xff]
    %v3822 = vld [vmem:[#allocation13 + $0x60] sm:$0xff]
    %v3823 = vld [vmem:[#allocation13 + $0x68] sm:$0xff]
    %v3824 = vld [vmem:[#allocation13 + $0x70] sm:$0xff]
    %v3825 = vld [vmem:[#allocation13 + $0x78] sm:$0xff]
    %v3826 = vld [vmem:[#allocation13 + $0x80] sm:$0xff]
    %v3827 = vld [vmem:[#allocation13 + $0x88] sm:$0xff]
    %v3828 = vld [vmem:[#allocation13 + $0x90] sm:$0xff]
    %v3829 = vld [vmem:[#allocation13 + $0x98] sm:$0xff]
    %v3830 = vld [vmem:[#allocation13 + $0xa0] sm:$0xff]
    %v3831 = vld [vmem:[#allocation13 + $0xa8] sm:$0xff]
    %v3832 = vld [vmem:[#allocation13 + $0xb0] sm:$0xff]
    %v3833 = vld [vmem:[#allocation13 + $0xb8] sm:$0xff]
    %v3834 = vld [vmem:[#allocation13 + $0xc0] sm:$0xff]
    %v3835 = vld [vmem:[#allocation13 + $0xc8] sm:$0xff]
    %v3836 = vld [vmem:[#allocation13 + $0xd0] sm:$0xff]
    %v3837 = vld [vmem:[#allocation13 + $0xd8] sm:$0xff]
    %v3838 = vld [vmem:[#allocation13 + $0xe0] sm:$0xff]
    %v3839 = vld [vmem:[#allocation13 + $0xe8] sm:$0xff]
    %v3840 = vld [vmem:[#allocation13 + $0xf0] sm:$0xff]
    %v3841 = vld [vmem:[#allocation13 + $0xf8] sm:$0xff]
    %v3842 = vld [vmem:[#allocation13 + $0x100] sm:$0xff]
    %v3843 = vld [vmem:[#allocation13 + $0x108] sm:$0xff]
    %v3844 = vld [vmem:[#allocation13 + $0x110] sm:$0xff]
    %v3845 = vld [vmem:[#allocation13 + $0x118] sm:$0xff]
    %v3846 = vld [vmem:[#allocation13 + $0x120] sm:$0xff]
    %v3847 = vld [vmem:[#allocation13 + $0x128] sm:$0xff]
    %v3848 = vld [vmem:[#allocation13 + $0x130] sm:$0xff]
    %v3849 = vld [vmem:[#allocation13 + $0x138] sm:$0xff]
    %v3850 = vld [vmem:[#allocation13 + $0x140] sm:$0xff]
    %v3851 = vld [vmem:[#allocation13 + $0x148] sm:$0xff]
    %v3852 = vld [vmem:[#allocation13 + $0x150] sm:$0xff]
    %v3853 = vld [vmem:[#allocation13 + $0x158] sm:$0xff]
    %v3854 = vld [vmem:[#allocation13 + $0x160] sm:$0xff]
    %v3855 = vld [vmem:[#allocation13 + $0x168] sm:$0xff]
    %v3856 = vld [vmem:[#allocation13 + $0x170] sm:$0xff]
    %v3857 = vld [vmem:[#allocation13 + $0x178] sm:$0xff]
    %v3858 = vld [vmem:[#allocation13 + $0x180] sm:$0xff]
    %v3859 = vld [vmem:[#allocation13 + $0x188] sm:$0xff]
    %v3860 = vld [vmem:[#allocation13 + $0x190] sm:$0xff]
    %v3861 = vld [vmem:[#allocation13 + $0x198] sm:$0xff]
    %v3862 = vld [vmem:[#allocation13 + $0x1a0] sm:$0xff]
    %v3863 = vld [vmem:[#allocation13 + $0x1a8] sm:$0xff]
    %v3864 = vld [vmem:[#allocation13 + $0x1b0] sm:$0xff]
    %v3865 = vld [vmem:[#allocation13 + $0x1b8] sm:$0xff]
    %v3866 = vld [vmem:[#allocation13 + $0x1c0] sm:$0xff]
    %v3867 = vld [vmem:[#allocation13 + $0x1c8] sm:$0xff]
    %v3868 = vld [vmem:[#allocation13 + $0x1d0] sm:$0xff]
    %v3869 = vld [vmem:[#allocation13 + $0x1d8] sm:$0xff]
    %v3870 = vld [vmem:[#allocation13 + $0x1e0] sm:$0xff]
    %v3871 = vld [vmem:[#allocation13 + $0x1e8] sm:$0xff]
    %v3872 = vld [vmem:[#allocation13 + $0x1f0] sm:$0xff]
    %v3873 = vld [vmem:[#allocation13 + $0x1f8] sm:$0xff]
    %v3874 = vld [vmem:[#allocation13 + $0x200] sm:$0xff]
    %v3875 = vld [vmem:[#allocation13 + $0x208] sm:$0xff]
    %v3876 = vld [vmem:[#allocation13 + $0x210] sm:$0xff]
    %v3877 = vld [vmem:[#allocation13 + $0x218] sm:$0xff]
    %v3878 = vld [vmem:[#allocation13 + $0x220] sm:$0xff]
    %v3879 = vld [vmem:[#allocation13 + $0x228] sm:$0xff]
    %v3880 = vld [vmem:[#allocation13 + $0x230] sm:$0xff]
    %v3881 = vld [vmem:[#allocation13 + $0x238] sm:$0xff]
    %v3882 = vld [vmem:[#allocation13 + $0x240] sm:$0xff]
    %v3883 = vld [vmem:[#allocation13 + $0x248] sm:$0xff]
    %v3884 = vld [vmem:[#allocation13 + $0x250] sm:$0xff]
    %v3885 = vld [vmem:[#allocation13 + $0x258] sm:$0xff]
    %v3886 = vld [vmem:[#allocation13 + $0x260] sm:$0xff]
    %v3887 = vld [vmem:[#allocation13 + $0x268] sm:$0xff]
    %v3888 = vld [vmem:[#allocation13 + $0x270] sm:$0xff]
    %v3889 = vld [vmem:[#allocation13 + $0x278] sm:$0xff]
    %v3890 = vld [vmem:[#allocation13 + $0x280] sm:$0xff]
    %v3891 = vld [vmem:[#allocation13 + $0x288] sm:$0xff]
    %v3892 = vld [vmem:[#allocation13 + $0x290] sm:$0xff]
    %v3893 = vld [vmem:[#allocation13 + $0x298] sm:$0xff]
    %v3894 = vld [vmem:[#allocation13 + $0x2a0] sm:$0xff]
    %v3895 = vld [vmem:[#allocation13 + $0x2a8] sm:$0xff]
    %v3896 = vld [vmem:[#allocation13 + $0x2b0] sm:$0xff]
    %v3897 = vld [vmem:[#allocation13 + $0x2b8] sm:$0xff]
    %v3898 = vld [vmem:[#allocation13 + $0x2c0] sm:$0xff]
    %v3899 = vld [vmem:[#allocation13 + $0x2c8] sm:$0xff]
    %v3900 = vld [vmem:[#allocation13 + $0x2d0] sm:$0xff]
    %v3901 = vld [vmem:[#allocation13 + $0x2d8] sm:$0xff]
    %v3902 = vld [vmem:[#allocation13 + $0x2e0] sm:$0xff]
    %v3903 = vld [vmem:[#allocation13 + $0x2e8] sm:$0xff]
    %v3904 = vld [vmem:[#allocation13 + $0x2f0] sm:$0xff]
    %v3905 = vld [vmem:[#allocation13 + $0x2f8] sm:$0xff]
    %v3906 = vld [vmem:[#allocation13 + $0x300] sm:$0xff]
    %v3907 = vld [vmem:[#allocation13 + $0x308] sm:$0xff]
    %v3908 = vld [vmem:[#allocation13 + $0x310] sm:$0xff]
    %v3909 = vld [vmem:[#allocation13 + $0x318] sm:$0xff]
    %v3910 = vld [vmem:[#allocation13 + $0x320] sm:$0xff]
    %v3911 = vld [vmem:[#allocation13 + $0x328] sm:$0xff]
    %v3912 = vld [vmem:[#allocation13 + $0x330] sm:$0xff]
    %v3913 = vld [vmem:[#allocation13 + $0x338] sm:$0xff]
    %v3914 = vld [vmem:[#allocation13 + $0x340] sm:$0xff]
    %v3915 = vld [vmem:[#allocation13 + $0x348] sm:$0xff]
    %v3916 = vld [vmem:[#allocation13 + $0x350] sm:$0xff]
    %v3917 = vld [vmem:[#allocation13 + $0x358] sm:$0xff]
    %v3918 = vld [vmem:[#allocation13 + $0x360] sm:$0xff]
    %v3919 = vld [vmem:[#allocation13 + $0x368] sm:$0xff]
    %v3920 = vld [vmem:[#allocation13 + $0x370] sm:$0xff]
    %v3921 = vld [vmem:[#allocation13 + $0x378] sm:$0xff]
    %v3922 = vld [vmem:[#allocation13 + $0x380] sm:$0xff]
    %v3923 = vld [vmem:[#allocation13 + $0x388] sm:$0xff]
    %v3924 = vld [vmem:[#allocation13 + $0x390] sm:$0xff]
    %v3925 = vld [vmem:[#allocation13 + $0x398] sm:$0xff]
    %v3926 = vld [vmem:[#allocation13 + $0x3a0] sm:$0xff]
    %v3927 = vld [vmem:[#allocation13 + $0x3a8] sm:$0xff]
    %v3928 = vld [vmem:[#allocation13 + $0x3b0] sm:$0xff]
    %v3929 = vld [vmem:[#allocation13 + $0x3b8] sm:$0xff]
    %v3930 = vld [vmem:[#allocation13 + $0x3c0] sm:$0xff]
    %v3931 = vld [vmem:[#allocation13 + $0x3c8] sm:$0xff]
    %v3932 = vld [vmem:[#allocation13 + $0x3d0] sm:$0xff]
    %v3933 = vld [vmem:[#allocation13 + $0x3d8] sm:$0xff]
    %v3934 = vld [vmem:[#allocation13 + $0x3e0] sm:$0xff]
    %v3935 = vld [vmem:[#allocation13 + $0x3e8] sm:$0xff]
    %v3936 = vld [vmem:[#allocation13 + $0x3f0] sm:$0xff]
    %v3937 = vld [vmem:[#allocation13 + $0x3f8] sm:$0xff]
    %v3938 = vld [vmem:[#allocation14] sm:$0xf]
    %v3940 = vperm.slane %v3938, 0
    %v3941 = vperm.slane %v3938, 1
    %v3942 = vperm.slane %v3938, 2
    %v3943 = vperm.slane %v3938, 3
    %v4076 = vunpack.c.l.b16 %v3810
    %v4077 = vunpack.c.h.b16 %v3810
    %v4078 = vunpack.c.l.b16 %v3811
    %v4079 = vunpack.c.h.b16 %v3811
    %v4080 = vunpack.c.l.b16 %v3812
    %v4081 = vunpack.c.h.b16 %v3812
    %v4082 = vunpack.c.l.b16 %v3813
    %v4083 = vunpack.c.h.b16 %v3813
    %v4084 = vunpack.c.l.b16 %v3814
    %v4085 = vunpack.c.h.b16 %v3814
    %v4086 = vunpack.c.l.b16 %v3815
    %v4087 = vunpack.c.h.b16 %v3815
    %v4088 = vunpack.c.l.b16 %v3816
    %v4089 = vunpack.c.h.b16 %v3816
    %v4090 = vunpack.c.l.b16 %v3817
    %v4091 = vunpack.c.h.b16 %v3817
    %v4092 = vunpack.c.l.b16 %v3818
    %v4093 = vunpack.c.h.b16 %v3818
    %v4094 = vunpack.c.l.b16 %v3819
    %v4095 = vunpack.c.h.b16 %v3819
    %v4096 = vunpack.c.l.b16 %v3820
    %v4097 = vunpack.c.h.b16 %v3820
    %v4098 = vunpack.c.l.b16 %v3821
    %v4099 = vunpack.c.h.b16 %v3821
    %v4100 = vunpack.c.l.b16 %v3822
    %v4101 = vunpack.c.h.b16 %v3822
    %v4102 = vunpack.c.l.b16 %v3823
    %v4103 = vunpack.c.h.b16 %v3823
    %v4104 = vunpack.c.l.b16 %v3824
    %v4105 = vunpack.c.h.b16 %v3824
    %v4106 = vunpack.c.l.b16 %v3825
    %v4107 = vunpack.c.h.b16 %v3825
    %v4108 = vunpack.c.l.b16 %v3826
    %v4109 = vunpack.c.h.b16 %v3826
    %v4110 = vunpack.c.l.b16 %v3827
    %v4111 = vunpack.c.h.b16 %v3827
    %v4112 = vunpack.c.l.b16 %v3828
    %v4113 = vunpack.c.h.b16 %v3828
    %v4114 = vunpack.c.l.b16 %v3829
    %v4115 = vunpack.c.h.b16 %v3829
    %v4116 = vunpack.c.l.b16 %v3830
    %v4117 = vunpack.c.h.b16 %v3830
    %v4118 = vunpack.c.l.b16 %v3831
    %v4119 = vunpack.c.h.b16 %v3831
    %v4120 = vunpack.c.l.b16 %v3832
    %v4121 = vunpack.c.h.b16 %v3832
    %v4122 = vunpack.c.l.b16 %v3833
    %v4123 = vunpack.c.h.b16 %v3833
    %v4124 = vunpack.c.l.b16 %v3834
    %v4125 = vunpack.c.h.b16 %v3834
    %v4126 = vunpack.c.l.b16 %v3835
    %v4127 = vunpack.c.h.b16 %v3835
    %v4128 = vunpack.c.l.b16 %v3836
    %v4129 = vunpack.c.h.b16 %v3836
    %v4130 = vunpack.c.l.b16 %v3837
    %v4131 = vunpack.c.h.b16 %v3837
    %v4132 = vunpack.c.l.b16 %v3838
    %v4133 = vunpack.c.h.b16 %v3838
    %v4134 = vunpack.c.l.b16 %v3839
    %v4135 = vunpack.c.h.b16 %v3839
    %v4136 = vunpack.c.l.b16 %v3840
    %v4137 = vunpack.c.h.b16 %v3840
    %v4138 = vunpack.c.l.b16 %v3841
    %v4139 = vunpack.c.h.b16 %v3841
    %v4140 = vunpack.c.l.b16 %v3842
    %v4141 = vunpack.c.h.b16 %v3842
    %v4142 = vunpack.c.l.b16 %v3843
    %v4143 = vunpack.c.h.b16 %v3843
    %v4144 = vunpack.c.l.b16 %v3844
    %v4145 = vunpack.c.h.b16 %v3844
    %v4146 = vunpack.c.l.b16 %v3845
    %v4147 = vunpack.c.h.b16 %v3845
    %v4148 = vunpack.c.l.b16 %v3846
    %v4149 = vunpack.c.h.b16 %v3846
    %v4150 = vunpack.c.l.b16 %v3847
    %v4151 = vunpack.c.h.b16 %v3847
    %v4152 = vunpack.c.l.b16 %v3848
    %v4153 = vunpack.c.h.b16 %v3848
    %v4154 = vunpack.c.l.b16 %v3849
    %v4155 = vunpack.c.h.b16 %v3849
    %v4156 = vunpack.c.l.b16 %v3850
    %v4157 = vunpack.c.h.b16 %v3850
    %v4158 = vunpack.c.l.b16 %v3851
    %v4159 = vunpack.c.h.b16 %v3851
    %v4160 = vunpack.c.l.b16 %v3852
    %v4161 = vunpack.c.h.b16 %v3852
    %v4162 = vunpack.c.l.b16 %v3853
    %v4163 = vunpack.c.h.b16 %v3853
    %v4164 = vunpack.c.l.b16 %v3854
    %v4165 = vunpack.c.h.b16 %v3854
    %v4166 = vunpack.c.l.b16 %v3855
    %v4167 = vunpack.c.h.b16 %v3855
    %v4168 = vunpack.c.l.b16 %v3856
    %v4169 = vunpack.c.h.b16 %v3856
    %v4170 = vunpack.c.l.b16 %v3857
    %v4171 = vunpack.c.h.b16 %v3857
    %v4172 = vunpack.c.l.b16 %v3858
    %v4173 = vunpack.c.h.b16 %v3858
    %v4174 = vunpack.c.l.b16 %v3859
    %v4175 = vunpack.c.h.b16 %v3859
    %v4176 = vunpack.c.l.b16 %v3860
    %v4177 = vunpack.c.h.b16 %v3860
    %v4178 = vunpack.c.l.b16 %v3861
    %v4179 = vunpack.c.h.b16 %v3861
    %v4180 = vunpack.c.l.b16 %v3862
    %v4181 = vunpack.c.h.b16 %v3862
    %v4182 = vunpack.c.l.b16 %v3863
    %v4183 = vunpack.c.h.b16 %v3863
    %v4184 = vunpack.c.l.b16 %v3864
    %v4185 = vunpack.c.h.b16 %v3864
    %v4186 = vunpack.c.l.b16 %v3865
    %v4187 = vunpack.c.h.b16 %v3865
    %v4188 = vunpack.c.l.b16 %v3866
    %v4189 = vunpack.c.h.b16 %v3866
    %v4190 = vunpack.c.l.b16 %v3867
    %v4191 = vunpack.c.h.b16 %v3867
    %v4192 = vunpack.c.l.b16 %v3868
    %v4193 = vunpack.c.h.b16 %v3868
    %v4194 = vunpack.c.l.b16 %v3869
    %v4195 = vunpack.c.h.b16 %v3869
    %v4196 = vunpack.c.l.b16 %v3870
    %v4197 = vunpack.c.h.b16 %v3870
    %v4198 = vunpack.c.l.b16 %v3871
    %v4199 = vunpack.c.h.b16 %v3871
    %v4200 = vunpack.c.l.b16 %v3872
    %v4201 = vunpack.c.h.b16 %v3872
    %v4202 = vunpack.c.l.b16 %v3873
    %v4203 = vunpack.c.h.b16 %v3873
    %v4204 = vunpack.c.l.b16 %v3874
    %v4205 = vunpack.c.h.b16 %v3874
    %v4206 = vunpack.c.l.b16 %v3875
    %v4207 = vunpack.c.h.b16 %v3875
    %v4208 = vunpack.c.l.b16 %v3876
    %v4209 = vunpack.c.h.b16 %v3876
    %v4210 = vunpack.c.l.b16 %v3877
    %v4211 = vunpack.c.h.b16 %v3877
    %v4212 = vunpack.c.l.b16 %v3878
    %v4213 = vunpack.c.h.b16 %v3878
    %v4214 = vunpack.c.l.b16 %v3879
    %v4215 = vunpack.c.h.b16 %v3879
    %v4216 = vunpack.c.l.b16 %v3880
    %v4217 = vunpack.c.h.b16 %v3880
    %v4218 = vunpack.c.l.b16 %v3881
    %v4219 = vunpack.c.h.b16 %v3881
    %v4220 = vunpack.c.l.b16 %v3882
    %v4221 = vunpack.c.h.b16 %v3882
    %v4222 = vunpack.c.l.b16 %v3883
    %v4223 = vunpack.c.h.b16 %v3883
    %v4224 = vunpack.c.l.b16 %v3884
    %v4225 = vunpack.c.h.b16 %v3884
    %v4226 = vunpack.c.l.b16 %v3885
    %v4227 = vunpack.c.h.b16 %v3885
    %v4228 = vunpack.c.l.b16 %v3886
    %v4229 = vunpack.c.h.b16 %v3886
    %v4230 = vunpack.c.l.b16 %v3887
    %v4231 = vunpack.c.h.b16 %v3887
    %v4232 = vunpack.c.l.b16 %v3888
    %v4233 = vunpack.c.h.b16 %v3888
    %v4234 = vunpack.c.l.b16 %v3889
    %v4235 = vunpack.c.h.b16 %v3889
    %v4236 = vunpack.c.l.b16 %v3890
    %v4237 = vunpack.c.h.b16 %v3890
    %v4238 = vunpack.c.l.b16 %v3891
    %v4239 = vunpack.c.h.b16 %v3891
    %v4240 = vunpack.c.l.b16 %v3892
    %v4241 = vunpack.c.h.b16 %v3892
    %v4242 = vunpack.c.l.b16 %v3893
    %v4243 = vunpack.c.h.b16 %v3893
    %v4244 = vunpack.c.l.b16 %v3894
    %v4245 = vunpack.c.h.b16 %v3894
    %v4246 = vunpack.c.l.b16 %v3895
    %v4247 = vunpack.c.h.b16 %v3895
    %v4248 = vunpack.c.l.b16 %v3896
    %v4249 = vunpack.c.h.b16 %v3896
    %v4250 = vunpack.c.l.b16 %v3897
    %v4251 = vunpack.c.h.b16 %v3897
    %v4252 = vunpack.c.l.b16 %v3898
    %v4253 = vunpack.c.h.b16 %v3898
    %v4254 = vunpack.c.l.b16 %v3899
    %v4255 = vunpack.c.h.b16 %v3899
    %v4256 = vunpack.c.l.b16 %v3900
    %v4257 = vunpack.c.h.b16 %v3900
    %v4258 = vunpack.c.l.b16 %v3901
    %v4259 = vunpack.c.h.b16 %v3901
    %v4260 = vunpack.c.l.b16 %v3902
    %v4261 = vunpack.c.h.b16 %v3902
    %v4262 = vunpack.c.l.b16 %v3903
    %v4263 = vunpack.c.h.b16 %v3903
    %v4264 = vunpack.c.l.b16 %v3904
    %v4265 = vunpack.c.h.b16 %v3904
    %v4266 = vunpack.c.l.b16 %v3905
    %v4267 = vunpack.c.h.b16 %v3905
    %v4268 = vunpack.c.l.b16 %v3906
    %v4269 = vunpack.c.h.b16 %v3906
    %v4270 = vunpack.c.l.b16 %v3907
    %v4271 = vunpack.c.h.b16 %v3907
    %v4272 = vunpack.c.l.b16 %v3908
    %v4273 = vunpack.c.h.b16 %v3908
    %v4274 = vunpack.c.l.b16 %v3909
    %v4275 = vunpack.c.h.b16 %v3909
    %v4276 = vunpack.c.l.b16 %v3910
    %v4277 = vunpack.c.h.b16 %v3910
    %v4278 = vunpack.c.l.b16 %v3911
    %v4279 = vunpack.c.h.b16 %v3911
    %v4280 = vunpack.c.l.b16 %v3912
    %v4281 = vunpack.c.h.b16 %v3912
    %v4282 = vunpack.c.l.b16 %v3913
    %v4283 = vunpack.c.h.b16 %v3913
    %v4284 = vunpack.c.l.b16 %v3914
    %v4285 = vunpack.c.h.b16 %v3914
    %v4286 = vunpack.c.l.b16 %v3915
    %v4287 = vunpack.c.h.b16 %v3915
    %v4288 = vunpack.c.l.b16 %v3916
    %v4289 = vunpack.c.h.b16 %v3916
    %v4290 = vunpack.c.l.b16 %v3917
    %v4291 = vunpack.c.h.b16 %v3917
    %v4292 = vunpack.c.l.b16 %v3918
    %v4293 = vunpack.c.h.b16 %v3918
    %v4294 = vunpack.c.l.b16 %v3919
    %v4295 = vunpack.c.h.b16 %v3919
    %v4296 = vunpack.c.l.b16 %v3920
    %v4297 = vunpack.c.h.b16 %v3920
    %v4298 = vunpack.c.l.b16 %v3921
    %v4299 = vunpack.c.h.b16 %v3921
    %v4300 = vunpack.c.l.b16 %v3922
    %v4301 = vunpack.c.h.b16 %v3922
    %v4302 = vunpack.c.l.b16 %v3923
    %v4303 = vunpack.c.h.b16 %v3923
    %v4304 = vunpack.c.l.b16 %v3924
    %v4305 = vunpack.c.h.b16 %v3924
    %v4306 = vunpack.c.l.b16 %v3925
    %v4307 = vunpack.c.h.b16 %v3925
    %v4308 = vunpack.c.l.b16 %v3926
    %v4309 = vunpack.c.h.b16 %v3926
    %v4310 = vunpack.c.l.b16 %v3927
    %v4311 = vunpack.c.h.b16 %v3927
    %v4312 = vunpack.c.l.b16 %v3928
    %v4313 = vunpack.c.h.b16 %v3928
    %v4314 = vunpack.c.l.b16 %v3929
    %v4315 = vunpack.c.h.b16 %v3929
    %v4316 = vunpack.c.l.b16 %v3930
    %v4317 = vunpack.c.h.b16 %v3930
    %v4318 = vunpack.c.l.b16 %v3931
    %v4319 = vunpack.c.h.b16 %v3931
    %v4320 = vunpack.c.l.b16 %v3932
    %v4321 = vunpack.c.h.b16 %v3932
    %v4322 = vunpack.c.l.b16 %v3933
    %v4323 = vunpack.c.h.b16 %v3933
    %v4324 = vunpack.c.l.b16 %v3934
    %v4325 = vunpack.c.h.b16 %v3934
    %v4326 = vunpack.c.l.b16 %v3935
    %v4327 = vunpack.c.h.b16 %v3935
    %v4328 = vunpack.c.l.b16 %v3936
    %v4329 = vunpack.c.h.b16 %v3936
    %v4330 = vunpack.c.l.b16 %v3937
    %v4331 = vunpack.c.h.b16 %v3937
    %v4332 = vpack.c.b16 %v4080, %v4076
    %v4333 = vpack.c.b16 %v4081, %v4077
    %v4334 = vpack.c.b16 %v4082, %v4078
    %v4335 = vpack.c.b16 %v4083, %v4079
    %v4336 = vpack.c.b16 %v4088, %v4084
    %v4337 = vpack.c.b16 %v4089, %v4085
    %v4338 = vpack.c.b16 %v4090, %v4086
    %v4339 = vpack.c.b16 %v4091, %v4087
    %v4340 = vpack.c.b16 %v4096, %v4092
    %v4341 = vpack.c.b16 %v4097, %v4093
    %v4342 = vpack.c.b16 %v4098, %v4094
    %v4343 = vpack.c.b16 %v4099, %v4095
    %v4344 = vpack.c.b16 %v4104, %v4100
    %v4345 = vpack.c.b16 %v4105, %v4101
    %v4346 = vpack.c.b16 %v4106, %v4102
    %v4347 = vpack.c.b16 %v4107, %v4103
    %v4348 = vpack.c.b16 %v4112, %v4108
    %v4349 = vpack.c.b16 %v4113, %v4109
    %v4350 = vpack.c.b16 %v4114, %v4110
    %v4351 = vpack.c.b16 %v4115, %v4111
    %v4352 = vpack.c.b16 %v4120, %v4116
    %v4353 = vpack.c.b16 %v4121, %v4117
    %v4354 = vpack.c.b16 %v4122, %v4118
    %v4355 = vpack.c.b16 %v4123, %v4119
    %v4356 = vpack.c.b16 %v4128, %v4124
    %v4357 = vpack.c.b16 %v4129, %v4125
    %v4358 = vpack.c.b16 %v4130, %v4126
    %v4359 = vpack.c.b16 %v4131, %v4127
    %v4360 = vpack.c.b16 %v4136, %v4132
    %v4361 = vpack.c.b16 %v4137, %v4133
    %v4362 = vpack.c.b16 %v4138, %v4134
    %v4363 = vpack.c.b16 %v4139, %v4135
    %v4364 = vpack.c.b16 %v4144, %v4140
    %v4365 = vpack.c.b16 %v4145, %v4141
    %v4366 = vpack.c.b16 %v4146, %v4142
    %v4367 = vpack.c.b16 %v4147, %v4143
    %v4368 = vpack.c.b16 %v4152, %v4148
    %v4369 = vpack.c.b16 %v4153, %v4149
    %v4370 = vpack.c.b16 %v4154, %v4150
    %v4371 = vpack.c.b16 %v4155, %v4151
    %v4372 = vpack.c.b16 %v4160, %v4156
    %v4373 = vpack.c.b16 %v4161, %v4157
    %v4374 = vpack.c.b16 %v4162, %v4158
    %v4375 = vpack.c.b16 %v4163, %v4159
    %v4376 = vpack.c.b16 %v4168, %v4164
    %v4377 = vpack.c.b16 %v4169, %v4165
    %v4378 = vpack.c.b16 %v4170, %v4166
    %v4379 = vpack.c.b16 %v4171, %v4167
    %v4380 = vpack.c.b16 %v4176, %v4172
    %v4381 = vpack.c.b16 %v4177, %v4173
    %v4382 = vpack.c.b16 %v4178, %v4174
    %v4383 = vpack.c.b16 %v4179, %v4175
    %v4384 = vpack.c.b16 %v4184, %v4180
    %v4385 = vpack.c.b16 %v4185, %v4181
    %v4386 = vpack.c.b16 %v4186, %v4182
    %v4387 = vpack.c.b16 %v4187, %v4183
    %v4388 = vpack.c.b16 %v4192, %v4188
    %v4389 = vpack.c.b16 %v4193, %v4189
    %v4390 = vpack.c.b16 %v4194, %v4190
    %v4391 = vpack.c.b16 %v4195, %v4191
    %v4392 = vpack.c.b16 %v4200, %v4196
    %v4393 = vpack.c.b16 %v4201, %v4197
    %v4394 = vpack.c.b16 %v4202, %v4198
    %v4395 = vpack.c.b16 %v4203, %v4199
    %v4396 = vpack.c.b16 %v4208, %v4204
    %v4397 = vpack.c.b16 %v4209, %v4205
    %v4398 = vpack.c.b16 %v4210, %v4206
    %v4399 = vpack.c.b16 %v4211, %v4207
    %v4400 = vpack.c.b16 %v4216, %v4212
    %v4401 = vpack.c.b16 %v4217, %v4213
    %v4402 = vpack.c.b16 %v4218, %v4214
    %v4403 = vpack.c.b16 %v4219, %v4215
    %v4404 = vpack.c.b16 %v4224, %v4220
    %v4405 = vpack.c.b16 %v4225, %v4221
    %v4406 = vpack.c.b16 %v4226, %v4222
    %v4407 = vpack.c.b16 %v4227, %v4223
    %v4408 = vpack.c.b16 %v4232, %v4228
    %v4409 = vpack.c.b16 %v4233, %v4229
    %v4410 = vpack.c.b16 %v4234, %v4230
    %v4411 = vpack.c.b16 %v4235, %v4231
    %v4412 = vpack.c.b16 %v4240, %v4236
    %v4413 = vpack.c.b16 %v4241, %v4237
    %v4414 = vpack.c.b16 %v4242, %v4238
    %v4415 = vpack.c.b16 %v4243, %v4239
    %v4416 = vpack.c.b16 %v4248, %v4244
    %v4417 = vpack.c.b16 %v4249, %v4245
    %v4418 = vpack.c.b16 %v4250, %v4246
    %v4419 = vpack.c.b16 %v4251, %v4247
    %v4420 = vpack.c.b16 %v4256, %v4252
    %v4421 = vpack.c.b16 %v4257, %v4253
    %v4422 = vpack.c.b16 %v4258, %v4254
    %v4423 = vpack.c.b16 %v4259, %v4255
    %v4424 = vpack.c.b16 %v4264, %v4260
    %v4425 = vpack.c.b16 %v4265, %v4261
    %v4426 = vpack.c.b16 %v4266, %v4262
    %v4427 = vpack.c.b16 %v4267, %v4263
    %v4428 = vpack.c.b16 %v4272, %v4268
    %v4429 = vpack.c.b16 %v4273, %v4269
    %v4430 = vpack.c.b16 %v4274, %v4270
    %v4431 = vpack.c.b16 %v4275, %v4271
    %v4432 = vpack.c.b16 %v4280, %v4276
    %v4433 = vpack.c.b16 %v4281, %v4277
    %v4434 = vpack.c.b16 %v4282, %v4278
    %v4435 = vpack.c.b16 %v4283, %v4279
    %v4436 = vpack.c.b16 %v4288, %v4284
    %v4437 = vpack.c.b16 %v4289, %v4285
    %v4438 = vpack.c.b16 %v4290, %v4286
    %v4439 = vpack.c.b16 %v4291, %v4287
    %v4440 = vpack.c.b16 %v4296, %v4292
    %v4441 = vpack.c.b16 %v4297, %v4293
    %v4442 = vpack.c.b16 %v4298, %v4294
    %v4443 = vpack.c.b16 %v4299, %v4295
    %v4444 = vpack.c.b16 %v4304, %v4300
    %v4445 = vpack.c.b16 %v4305, %v4301
    %v4446 = vpack.c.b16 %v4306, %v4302
    %v4447 = vpack.c.b16 %v4307, %v4303
    %v4448 = vpack.c.b16 %v4312, %v4308
    %v4449 = vpack.c.b16 %v4313, %v4309
    %v4450 = vpack.c.b16 %v4314, %v4310
    %v4451 = vpack.c.b16 %v4315, %v4311
    %v4452 = vpack.c.b16 %v4320, %v4316
    %v4453 = vpack.c.b16 %v4321, %v4317
    %v4454 = vpack.c.b16 %v4322, %v4318
    %v4455 = vpack.c.b16 %v4323, %v4319
    %v4456 = vpack.c.b16 %v4328, %v4324
    %v4457 = vpack.c.b16 %v4329, %v4325
    %v4458 = vpack.c.b16 %v4330, %v4326
    %v4459 = vpack.c.b16 %v4331, %v4327
    %4588 = vmatpush.bf16.msra.mxu0 %v4360
    %4589 = vmatpush.bf16.msra.mxu0 %v4356
    %4590 = vmatpush.bf16.msra.mxu0 %v4352
    %4591 = vmatpush.bf16.msra.mxu0 %v4348
    %4592 = vmatpush.bf16.msra.mxu0 %v4344
    %4593 = vmatpush.bf16.msra.mxu0 %v4340
    %4594 = vmatpush.bf16.msra.mxu0 %v4336
    %4595 = vmatpush.bf16.msra.mxu0 %v4332
    %4596 = vmatmul.bf16.gmra.mxu0 %v3806
    %v4597 = vpop.f32.mrf.mxu0
    %v4598 = vadd.f32 %v3940, %v4597
    %v4599 = vpop.f32.mrf.mxu0
    %v4600 = vadd.f32 %v3940, %v4599
    %4601 = vdwg.mxu0
    %4602 = vmatpush.bf16.msra.mxu0 %v4392
    %4603 = vmatpush.bf16.msra.mxu0 %v4388
    %4604 = vmatpush.bf16.msra.mxu0 %v4384
    %4605 = vmatpush.bf16.msra.mxu0 %v4380
    %4606 = vmatpush.bf16.msra.mxu0 %v4376
    %4607 = vmatpush.bf16.msra.mxu0 %v4372
    %4608 = vmatpush.bf16.msra.mxu0 %v4368
    %4609 = vmatpush.bf16.msra.mxu0 %v4364
    %4610 = vmatmul.bf16.gmra.mxu0 %v3807
    %v4611 = vpop.f32.mrf.mxu0
    %v4612 = vadd.f32 %v4598, %v4611
    %v4613 = vpop.f32.mrf.mxu0
    %v4614 = vadd.f32 %v4600, %v4613
    %4615 = vdwg.mxu0
    %4616 = vmatpush.bf16.msra.mxu0 %v4424
    %4617 = vmatpush.bf16.msra.mxu0 %v4420
    %4618 = vmatpush.bf16.msra.mxu0 %v4416
    %4619 = vmatpush.bf16.msra.mxu0 %v4412
    %4620 = vmatpush.bf16.msra.mxu0 %v4408
    %4621 = vmatpush.bf16.msra.mxu0 %v4404
    %4622 = vmatpush.bf16.msra.mxu0 %v4400
    %4623 = vmatpush.bf16.msra.mxu0 %v4396
    %4624 = vmatmul.bf16.gmra.mxu0 %v3808
    %v4625 = vpop.f32.mrf.mxu0
    %v4626 = vadd.f32 %v4612, %v4625
    %v4627 = vpop.f32.mrf.mxu0
    %v4628 = vadd.f32 %v4614, %v4627
    %4629 = vdwg.mxu0
    %4630 = vmatpush.bf16.msra.mxu0 %v4456
    %4631 = vmatpush.bf16.msra.mxu0 %v4452
    %4632 = vmatpush.bf16.msra.mxu0 %v4448
    %4633 = vmatpush.bf16.msra.mxu0 %v4444
    %4634 = vmatpush.bf16.msra.mxu0 %v4440
    %4635 = vmatpush.bf16.msra.mxu0 %v4436
    %4636 = vmatpush.bf16.msra.mxu0 %v4432
    %4637 = vmatpush.bf16.msra.mxu0 %v4428
    %4638 = vmatmul.bf16.gmra.mxu0 %v3809
    %v4639 = vpop.f32.mrf.mxu0
    %v4640 = vadd.f32 %v4626, %v4639
    %v4641 = vpop.f32.mrf.mxu0
    %v4642 = vadd.f32 %v4628, %v4641
    %4643 = vdwg.mxu0
    %4644 = vmatpush.bf16.msra.mxu0 %v4361
    %4645 = vmatpush.bf16.msra.mxu0 %v4357
    %4646 = vmatpush.bf16.msra.mxu0 %v4353
    %4647 = vmatpush.bf16.msra.mxu0 %v4349
    %4648 = vmatpush.bf16.msra.mxu0 %v4345
    %4649 = vmatpush.bf16.msra.mxu0 %v4341
    %4650 = vmatpush.bf16.msra.mxu0 %v4337
    %4651 = vmatpush.bf16.msra.mxu0 %v4333
    %4652 = vmatmul.bf16.gmra.mxu0 %v3806
    %v4653 = vpop.f32.mrf.mxu0
    %v4654 = vadd.f32 %v3941, %v4653
    %v4655 = vpop.f32.mrf.mxu0
    %v4656 = vadd.f32 %v3941, %v4655
    %4657 = vdwg.mxu0
    %4658 = vmatpush.bf16.msra.mxu0 %v4393
    %4659 = vmatpush.bf16.msra.mxu0 %v4389
    %4660 = vmatpush.bf16.msra.mxu0 %v4385
    %4661 = vmatpush.bf16.msra.mxu0 %v4381
    %4662 = vmatpush.bf16.msra.mxu0 %v4377
    %4663 = vmatpush.bf16.msra.mxu0 %v4373
    %4664 = vmatpush.bf16.msra.mxu0 %v4369
    %4665 = vmatpush.bf16.msra.mxu0 %v4365
    %4666 = vmatmul.bf16.gmra.mxu0 %v3807
    %v4667 = vpop.f32.mrf.mxu0
    %v4668 = vadd.f32 %v4654, %v4667
    %v4669 = vpop.f32.mrf.mxu0
    %v4670 = vadd.f32 %v4656, %v4669
    %4671 = vdwg.mxu0
    %4672 = vmatpush.bf16.msra.mxu0 %v4425
    %4673 = vmatpush.bf16.msra.mxu0 %v4421
    %4674 = vmatpush.bf16.msra.mxu0 %v4417
    %4675 = vmatpush.bf16.msra.mxu0 %v4413
    %4676 = vmatpush.bf16.msra.mxu0 %v4409
    %4677 = vmatpush.bf16.msra.mxu0 %v4405
    %4678 = vmatpush.bf16.msra.mxu0 %v4401
    %4679 = vmatpush.bf16.msra.mxu0 %v4397
    %4680 = vmatmul.bf16.gmra.mxu0 %v3808
    %v4681 = vpop.f32.mrf.mxu0
    %v4682 = vadd.f32 %v4668, %v4681
    %v4683 = vpop.f32.mrf.mxu0
    %v4684 = vadd.f32 %v4670, %v4683
    %4685 = vdwg.mxu0
    %4686 = vmatpush.bf16.msra.mxu0 %v4457
    %4687 = vmatpush.bf16.msra.mxu0 %v4453
    %4688 = vmatpush.bf16.msra.mxu0 %v4449
    %4689 = vmatpush.bf16.msra.mxu0 %v4445
    %4690 = vmatpush.bf16.msra.mxu0 %v4441
    %4691 = vmatpush.bf16.msra.mxu0 %v4437
    %4692 = vmatpush.bf16.msra.mxu0 %v4433
    %4693 = vmatpush.bf16.msra.mxu0 %v4429
    %4694 = vmatmul.bf16.gmra.mxu0 %v3809
    %v4695 = vpop.f32.mrf.mxu0
    %v4696 = vadd.f32 %v4682, %v4695
    %v4697 = vpop.f32.mrf.mxu0
    %v4698 = vadd.f32 %v4684, %v4697
    %4699 = vdwg.mxu0
    %4700 = vmatpush.bf16.msra.mxu0 %v4362
    %4701 = vmatpush.bf16.msra.mxu0 %v4358
    %4702 = vmatpush.bf16.msra.mxu0 %v4354
    %4703 = vmatpush.bf16.msra.mxu0 %v4350
    %4704 = vmatpush.bf16.msra.mxu0 %v4346
    %4705 = vmatpush.bf16.msra.mxu0 %v4342
    %4706 = vmatpush.bf16.msra.mxu0 %v4338
    %4707 = vmatpush.bf16.msra.mxu0 %v4334
    %4708 = vmatmul.bf16.gmra.mxu0 %v3806
    %v4709 = vpop.f32.mrf.mxu0
    %v4710 = vadd.f32 %v3942, %v4709
    %v4711 = vpop.f32.mrf.mxu0
    %v4712 = vadd.f32 %v3942, %v4711
    %4713 = vdwg.mxu0
    %4714 = vmatpush.bf16.msra.mxu0 %v4394
    %4715 = vmatpush.bf16.msra.mxu0 %v4390
    %4716 = vmatpush.bf16.msra.mxu0 %v4386
    %4717 = vmatpush.bf16.msra.mxu0 %v4382
    %4718 = vmatpush.bf16.msra.mxu0 %v4378
    %4719 = vmatpush.bf16.msra.mxu0 %v4374
    %4720 = vmatpush.bf16.msra.mxu0 %v4370
    %4721 = vmatpush.bf16.msra.mxu0 %v4366
    %4722 = vmatmul.bf16.gmra.mxu0 %v3807
    %v4723 = vpop.f32.mrf.mxu0
    %v4724 = vadd.f32 %v4710, %v4723
    %v4725 = vpop.f32.mrf.mxu0
    %v4726 = vadd.f32 %v4712, %v4725
    %4727 = vdwg.mxu0
    %4728 = vmatpush.bf16.msra.mxu0 %v4426
    %4729 = vmatpush.bf16.msra.mxu0 %v4422
    %4730 = vmatpush.bf16.msra.mxu0 %v4418
    %4731 = vmatpush.bf16.msra.mxu0 %v4414
    %4732 = vmatpush.bf16.msra.mxu0 %v4410
    %4733 = vmatpush.bf16.msra.mxu0 %v4406
    %4734 = vmatpush.bf16.msra.mxu0 %v4402
    %4735 = vmatpush.bf16.msra.mxu0 %v4398
    %4736 = vmatmul.bf16.gmra.mxu0 %v3808
    %v4737 = vpop.f32.mrf.mxu0
    %v4738 = vadd.f32 %v4724, %v4737
    %v4739 = vpop.f32.mrf.mxu0
    %v4740 = vadd.f32 %v4726, %v4739
    %4741 = vdwg.mxu0
    %4742 = vmatpush.bf16.msra.mxu0 %v4458
    %4743 = vmatpush.bf16.msra.mxu0 %v4454
    %4744 = vmatpush.bf16.msra.mxu0 %v4450
    %4745 = vmatpush.bf16.msra.mxu0 %v4446
    %4746 = vmatpush.bf16.msra.mxu0 %v4442
    %4747 = vmatpush.bf16.msra.mxu0 %v4438
    %4748 = vmatpush.bf16.msra.mxu0 %v4434
    %4749 = vmatpush.bf16.msra.mxu0 %v4430
    %4750 = vmatmul.bf16.gmra.mxu0 %v3809
    %v4751 = vpop.f32.mrf.mxu0
    %v4752 = vadd.f32 %v4738, %v4751
    %v4753 = vpop.f32.mrf.mxu0
    %v4754 = vadd.f32 %v4740, %v4753
    %4755 = vdwg.mxu0
    %4756 = vmatpush.bf16.msra.mxu0 %v4363
    %4757 = vmatpush.bf16.msra.mxu0 %v4359
    %4758 = vmatpush.bf16.msra.mxu0 %v4355
    %4759 = vmatpush.bf16.msra.mxu0 %v4351
    %4760 = vmatpush.bf16.msra.mxu0 %v4347
    %4761 = vmatpush.bf16.msra.mxu0 %v4343
    %4762 = vmatpush.bf16.msra.mxu0 %v4339
    %4763 = vmatpush.bf16.msra.mxu0 %v4335
    %4764 = vmatmul.bf16.gmra.mxu0 %v3806
    %v4765 = vpop.f32.mrf.mxu0
    %v4766 = vadd.f32 %v3943, %v4765
    %v4767 = vpop.f32.mrf.mxu0
    %v4768 = vadd.f32 %v3943, %v4767
    %4769 = vdwg.mxu0
    %4770 = vmatpush.bf16.msra.mxu0 %v4395
    %4771 = vmatpush.bf16.msra.mxu0 %v4391
    %4772 = vmatpush.bf16.msra.mxu0 %v4387
    %4773 = vmatpush.bf16.msra.mxu0 %v4383
    %4774 = vmatpush.bf16.msra.mxu0 %v4379
    %4775 = vmatpush.bf16.msra.mxu0 %v4375
    %4776 = vmatpush.bf16.msra.mxu0 %v4371
    %4777 = vmatpush.bf16.msra.mxu0 %v4367
    %4778 = vmatmul.bf16.gmra.mxu0 %v3807
    %v4779 = vpop.f32.mrf.mxu0
    %v4780 = vadd.f32 %v4766, %v4779
    %v4781 = vpop.f32.mrf.mxu0
    %v4782 = vadd.f32 %v4768, %v4781
    %4783 = vdwg.mxu0
    %4784 = vmatpush.bf16.msra.mxu0 %v4427
    %4785 = vmatpush.bf16.msra.mxu0 %v4423
    %4786 = vmatpush.bf16.msra.mxu0 %v4419
    %4787 = vmatpush.bf16.msra.mxu0 %v4415
    %4788 = vmatpush.bf16.msra.mxu0 %v4411
    %4789 = vmatpush.bf16.msra.mxu0 %v4407
    %4790 = vmatpush.bf16.msra.mxu0 %v4403
    %4791 = vmatpush.bf16.msra.mxu0 %v4399
    %4792 = vmatmul.bf16.gmra.mxu0 %v3808
    %v4793 = vpop.f32.mrf.mxu0
    %v4794 = vadd.f32 %v4780, %v4793
    %v4795 = vpop.f32.mrf.mxu0
    %v4796 = vadd.f32 %v4782, %v4795
    %4797 = vdwg.mxu0
    %4798 = vmatpush.bf16.msra.mxu0 %v4459
    %4799 = vmatpush.bf16.msra.mxu0 %v4455
    %4800 = vmatpush.bf16.msra.mxu0 %v4451
    %4801 = vmatpush.bf16.msra.mxu0 %v4447
    %4802 = vmatpush.bf16.msra.mxu0 %v4443
    %4803 = vmatpush.bf16.msra.mxu0 %v4439
    %4804 = vmatpush.bf16.msra.mxu0 %v4435
    %4805 = vmatpush.bf16.msra.mxu0 %v4431
    %4806 = vmatmul.bf16.gmra.mxu0 %v3809
    %v4807 = vpop.f32.mrf.mxu0
    %v4808 = vadd.f32 %v4794, %v4807
    %v4809 = vpop.f32.mrf.mxu0
    %v4810 = vadd.f32 %v4796, %v4809
    %4811 = vdwg.mxu0
    %v4812 = vmax.f32 %v4640, 0.0
    %v4813 = vmax.f32 %v4696, 0.0
    %v4814 = vmax.f32 %v4752, 0.0
    %v4815 = vmax.f32 %v4808, 0.0
    %v4816 = vmax.f32 %v4642, 0.0
    %v4817 = vmax.f32 %v4698, 0.0
    %v4818 = vmax.f32 %v4754, 0.0
    %v4819 = vmax.f32 %v4810, 0.0
    %v4820 = vpack.c.bf16 %v4816, %v4812
    %v4821 = vpack.c.bf16 %v4817, %v4813
    %v4822 = vpack.c.bf16 %v4818, %v4814
    %v4823 = vpack.c.bf16 %v4819, %v4815
    %v4824 = vld [vmem:[#allocation16] sm:$0xff]
    %v4825 = vld [vmem:[#allocation16 + $0x8] sm:$0xff]
    %v4826 = vld [vmem:[#allocation16 + $0x10] sm:$0xff]
    %v4827 = vld [vmem:[#allocation16 + $0x18] sm:$0xff]
    %v4828 = vld [vmem:[#allocation16 + $0x20] sm:$0xff]
    %v4829 = vld [vmem:[#allocation16 + $0x28] sm:$0xff]
    %v4830 = vld [vmem:[#allocation16 + $0x30] sm:$0xff]
    %v4831 = vld [vmem:[#allocation16 + $0x38] sm:$0xff]
    %v4832 = vld [vmem:[#allocation16 + $0x40] sm:$0xff]
    %v4833 = vld [vmem:[#allocation16 + $0x48] sm:$0xff]
    %v4834 = vld [vmem:[#allocation16 + $0x50] sm:$0xff]
    %v4835 = vld [vmem:[#allocation16 + $0x58] sm:$0xff]
    %v4836 = vld [vmem:[#allocation16 + $0x60] sm:$0xff]
    %v4837 = vld [vmem:[#allocation16 + $0x68] sm:$0xff]
    %v4838 = vld [vmem:[#allocation16 + $0x70] sm:$0xff]
    %v4839 = vld [vmem:[#allocation16 + $0x78] sm:$0xff]
    %v4840 = vld [vmem:[#allocation16 + $0x80] sm:$0xff]
    %v4841 = vld [vmem:[#allocation16 + $0x88] sm:$0xff]
    %v4842 = vld [vmem:[#allocation16 + $0x90] sm:$0xff]
    %v4843 = vld [vmem:[#allocation16 + $0x98] sm:$0xff]
    %v4844 = vld [vmem:[#allocation16 + $0xa0] sm:$0xff]
    %v4845 = vld [vmem:[#allocation16 + $0xa8] sm:$0xff]
    %v4846 = vld [vmem:[#allocation16 + $0xb0] sm:$0xff]
    %v4847 = vld [vmem:[#allocation16 + $0xb8] sm:$0xff]
    %v4848 = vld [vmem:[#allocation16 + $0xc0] sm:$0xff]
    %v4849 = vld [vmem:[#allocation16 + $0xc8] sm:$0xff]
    %v4850 = vld [vmem:[#allocation16 + $0xd0] sm:$0xff]
    %v4851 = vld [vmem:[#allocation16 + $0xd8] sm:$0xff]
    %v4852 = vld [vmem:[#allocation16 + $0xe0] sm:$0xff]
    %v4853 = vld [vmem:[#allocation16 + $0xe8] sm:$0xff]
    %v4854 = vld [vmem:[#allocation16 + $0xf0] sm:$0xff]
    %v4855 = vld [vmem:[#allocation16 + $0xf8] sm:$0xff]
    %v4856 = vld [vmem:[#allocation16 + $0x100] sm:$0xff]
    %v4857 = vld [vmem:[#allocation16 + $0x108] sm:$0xff]
    %v4858 = vld [vmem:[#allocation16 + $0x110] sm:$0xff]
    %v4859 = vld [vmem:[#allocation16 + $0x118] sm:$0xff]
    %v4860 = vld [vmem:[#allocation16 + $0x120] sm:$0xff]
    %v4861 = vld [vmem:[#allocation16 + $0x128] sm:$0xff]
    %v4862 = vld [vmem:[#allocation16 + $0x130] sm:$0xff]
    %v4863 = vld [vmem:[#allocation16 + $0x138] sm:$0xff]
    %v4864 = vld [vmem:[#allocation16 + $0x140] sm:$0xff]
    %v4865 = vld [vmem:[#allocation16 + $0x148] sm:$0xff]
    %v4866 = vld [vmem:[#allocation16 + $0x150] sm:$0xff]
    %v4867 = vld [vmem:[#allocation16 + $0x158] sm:$0xff]
    %v4868 = vld [vmem:[#allocation16 + $0x160] sm:$0xff]
    %v4869 = vld [vmem:[#allocation16 + $0x168] sm:$0xff]
    %v4870 = vld [vmem:[#allocation16 + $0x170] sm:$0xff]
    %v4871 = vld [vmem:[#allocation16 + $0x178] sm:$0xff]
    %v4872 = vld [vmem:[#allocation16 + $0x180] sm:$0xff]
    %v4873 = vld [vmem:[#allocation16 + $0x188] sm:$0xff]
    %v4874 = vld [vmem:[#allocation16 + $0x190] sm:$0xff]
    %v4875 = vld [vmem:[#allocation16 + $0x198] sm:$0xff]
    %v4876 = vld [vmem:[#allocation16 + $0x1a0] sm:$0xff]
    %v4877 = vld [vmem:[#allocation16 + $0x1a8] sm:$0xff]
    %v4878 = vld [vmem:[#allocation16 + $0x1b0] sm:$0xff]
    %v4879 = vld [vmem:[#allocation16 + $0x1b8] sm:$0xff]
    %v4880 = vld [vmem:[#allocation16 + $0x1c0] sm:$0xff]
    %v4881 = vld [vmem:[#allocation16 + $0x1c8] sm:$0xff]
    %v4882 = vld [vmem:[#allocation16 + $0x1d0] sm:$0xff]
    %v4883 = vld [vmem:[#allocation16 + $0x1d8] sm:$0xff]
    %v4884 = vld [vmem:[#allocation16 + $0x1e0] sm:$0xff]
    %v4885 = vld [vmem:[#allocation16 + $0x1e8] sm:$0xff]
    %v4886 = vld [vmem:[#allocation16 + $0x1f0] sm:$0xff]
    %v4887 = vld [vmem:[#allocation16 + $0x1f8] sm:$0xff]
    %v4888 = vld [vmem:[#allocation16 + $0x200] sm:$0xff]
    %v4889 = vld [vmem:[#allocation16 + $0x208] sm:$0xff]
    %v4890 = vld [vmem:[#allocation16 + $0x210] sm:$0xff]
    %v4891 = vld [vmem:[#allocation16 + $0x218] sm:$0xff]
    %v4892 = vld [vmem:[#allocation16 + $0x220] sm:$0xff]
    %v4893 = vld [vmem:[#allocation16 + $0x228] sm:$0xff]
    %v4894 = vld [vmem:[#allocation16 + $0x230] sm:$0xff]
    %v4895 = vld [vmem:[#allocation16 + $0x238] sm:$0xff]
    %v4896 = vld [vmem:[#allocation16 + $0x240] sm:$0xff]
    %v4897 = vld [vmem:[#allocation16 + $0x248] sm:$0xff]
    %v4898 = vld [vmem:[#allocation16 + $0x250] sm:$0xff]
    %v4899 = vld [vmem:[#allocation16 + $0x258] sm:$0xff]
    %v4900 = vld [vmem:[#allocation16 + $0x260] sm:$0xff]
    %v4901 = vld [vmem:[#allocation16 + $0x268] sm:$0xff]
    %v4902 = vld [vmem:[#allocation16 + $0x270] sm:$0xff]
    %v4903 = vld [vmem:[#allocation16 + $0x278] sm:$0xff]
    %v4904 = vld [vmem:[#allocation16 + $0x280] sm:$0xff]
    %v4905 = vld [vmem:[#allocation16 + $0x288] sm:$0xff]
    %v4906 = vld [vmem:[#allocation16 + $0x290] sm:$0xff]
    %v4907 = vld [vmem:[#allocation16 + $0x298] sm:$0xff]
    %v4908 = vld [vmem:[#allocation16 + $0x2a0] sm:$0xff]
    %v4909 = vld [vmem:[#allocation16 + $0x2a8] sm:$0xff]
    %v4910 = vld [vmem:[#allocation16 + $0x2b0] sm:$0xff]
    %v4911 = vld [vmem:[#allocation16 + $0x2b8] sm:$0xff]
    %v4912 = vld [vmem:[#allocation16 + $0x2c0] sm:$0xff]
    %v4913 = vld [vmem:[#allocation16 + $0x2c8] sm:$0xff]
    %v4914 = vld [vmem:[#allocation16 + $0x2d0] sm:$0xff]
    %v4915 = vld [vmem:[#allocation16 + $0x2d8] sm:$0xff]
    %v4916 = vld [vmem:[#allocation16 + $0x2e0] sm:$0xff]
    %v4917 = vld [vmem:[#allocation16 + $0x2e8] sm:$0xff]
    %v4918 = vld [vmem:[#allocation16 + $0x2f0] sm:$0xff]
    %v4919 = vld [vmem:[#allocation16 + $0x2f8] sm:$0xff]
    %v4920 = vld [vmem:[#allocation16 + $0x300] sm:$0xff]
    %v4921 = vld [vmem:[#allocation16 + $0x308] sm:$0xff]
    %v4922 = vld [vmem:[#allocation16 + $0x310] sm:$0xff]
    %v4923 = vld [vmem:[#allocation16 + $0x318] sm:$0xff]
    %v4924 = vld [vmem:[#allocation16 + $0x320] sm:$0xff]
    %v4925 = vld [vmem:[#allocation16 + $0x328] sm:$0xff]
    %v4926 = vld [vmem:[#allocation16 + $0x330] sm:$0xff]
    %v4927 = vld [vmem:[#allocation16 + $0x338] sm:$0xff]
    %v4928 = vld [vmem:[#allocation16 + $0x340] sm:$0xff]
    %v4929 = vld [vmem:[#allocation16 + $0x348] sm:$0xff]
    %v4930 = vld [vmem:[#allocation16 + $0x350] sm:$0xff]
    %v4931 = vld [vmem:[#allocation16 + $0x358] sm:$0xff]
    %v4932 = vld [vmem:[#allocation16 + $0x360] sm:$0xff]
    %v4933 = vld [vmem:[#allocation16 + $0x368] sm:$0xff]
    %v4934 = vld [vmem:[#allocation16 + $0x370] sm:$0xff]
    %v4935 = vld [vmem:[#allocation16 + $0x378] sm:$0xff]
    %v4936 = vld [vmem:[#allocation16 + $0x380] sm:$0xff]
    %v4937 = vld [vmem:[#allocation16 + $0x388] sm:$0xff]
    %v4938 = vld [vmem:[#allocation16 + $0x390] sm:$0xff]
    %v4939 = vld [vmem:[#allocation16 + $0x398] sm:$0xff]
    %v4940 = vld [vmem:[#allocation16 + $0x3a0] sm:$0xff]
    %v4941 = vld [vmem:[#allocation16 + $0x3a8] sm:$0xff]
    %v4942 = vld [vmem:[#allocation16 + $0x3b0] sm:$0xff]
    %v4943 = vld [vmem:[#allocation16 + $0x3b8] sm:$0xff]
    %v4944 = vld [vmem:[#allocation16 + $0x3c0] sm:$0xff]
    %v4945 = vld [vmem:[#allocation16 + $0x3c8] sm:$0xff]
    %v4946 = vld [vmem:[#allocation16 + $0x3d0] sm:$0xff]
    %v4947 = vld [vmem:[#allocation16 + $0x3d8] sm:$0xff]
    %v4948 = vld [vmem:[#allocation16 + $0x3e0] sm:$0xff]
    %v4949 = vld [vmem:[#allocation16 + $0x3e8] sm:$0xff]
    %v4950 = vld [vmem:[#allocation16 + $0x3f0] sm:$0xff]
    %v4951 = vld [vmem:[#allocation16 + $0x3f8] sm:$0xff]
    %v4952 = vld [vmem:[#allocation17] sm:$0xf]
    %v4954 = vperm.slane %v4952, 0
    %v4955 = vperm.slane %v4952, 1
    %v4956 = vperm.slane %v4952, 2
    %v4957 = vperm.slane %v4952, 3
    %v5090 = vunpack.c.l.b16 %v4824
    %v5091 = vunpack.c.h.b16 %v4824
    %v5092 = vunpack.c.l.b16 %v4825
    %v5093 = vunpack.c.h.b16 %v4825
    %v5094 = vunpack.c.l.b16 %v4826
    %v5095 = vunpack.c.h.b16 %v4826
    %v5096 = vunpack.c.l.b16 %v4827
    %v5097 = vunpack.c.h.b16 %v4827
    %v5098 = vunpack.c.l.b16 %v4828
    %v5099 = vunpack.c.h.b16 %v4828
    %v5100 = vunpack.c.l.b16 %v4829
    %v5101 = vunpack.c.h.b16 %v4829
    %v5102 = vunpack.c.l.b16 %v4830
    %v5103 = vunpack.c.h.b16 %v4830
    %v5104 = vunpack.c.l.b16 %v4831
    %v5105 = vunpack.c.h.b16 %v4831
    %v5106 = vunpack.c.l.b16 %v4832
    %v5107 = vunpack.c.h.b16 %v4832
    %v5108 = vunpack.c.l.b16 %v4833
    %v5109 = vunpack.c.h.b16 %v4833
    %v5110 = vunpack.c.l.b16 %v4834
    %v5111 = vunpack.c.h.b16 %v4834
    %v5112 = vunpack.c.l.b16 %v4835
    %v5113 = vunpack.c.h.b16 %v4835
    %v5114 = vunpack.c.l.b16 %v4836
    %v5115 = vunpack.c.h.b16 %v4836
    %v5116 = vunpack.c.l.b16 %v4837
    %v5117 = vunpack.c.h.b16 %v4837
    %v5118 = vunpack.c.l.b16 %v4838
    %v5119 = vunpack.c.h.b16 %v4838
    %v5120 = vunpack.c.l.b16 %v4839
    %v5121 = vunpack.c.h.b16 %v4839
    %v5122 = vunpack.c.l.b16 %v4840
    %v5123 = vunpack.c.h.b16 %v4840
    %v5124 = vunpack.c.l.b16 %v4841
    %v5125 = vunpack.c.h.b16 %v4841
    %v5126 = vunpack.c.l.b16 %v4842
    %v5127 = vunpack.c.h.b16 %v4842
    %v5128 = vunpack.c.l.b16 %v4843
    %v5129 = vunpack.c.h.b16 %v4843
    %v5130 = vunpack.c.l.b16 %v4844
    %v5131 = vunpack.c.h.b16 %v4844
    %v5132 = vunpack.c.l.b16 %v4845
    %v5133 = vunpack.c.h.b16 %v4845
    %v5134 = vunpack.c.l.b16 %v4846
    %v5135 = vunpack.c.h.b16 %v4846
    %v5136 = vunpack.c.l.b16 %v4847
    %v5137 = vunpack.c.h.b16 %v4847
    %v5138 = vunpack.c.l.b16 %v4848
    %v5139 = vunpack.c.h.b16 %v4848
    %v5140 = vunpack.c.l.b16 %v4849
    %v5141 = vunpack.c.h.b16 %v4849
    %v5142 = vunpack.c.l.b16 %v4850
    %v5143 = vunpack.c.h.b16 %v4850
    %v5144 = vunpack.c.l.b16 %v4851
    %v5145 = vunpack.c.h.b16 %v4851
    %v5146 = vunpack.c.l.b16 %v4852
    %v5147 = vunpack.c.h.b16 %v4852
    %v5148 = vunpack.c.l.b16 %v4853
    %v5149 = vunpack.c.h.b16 %v4853
    %v5150 = vunpack.c.l.b16 %v4854
    %v5151 = vunpack.c.h.b16 %v4854
    %v5152 = vunpack.c.l.b16 %v4855
    %v5153 = vunpack.c.h.b16 %v4855
    %v5154 = vunpack.c.l.b16 %v4856
    %v5155 = vunpack.c.h.b16 %v4856
    %v5156 = vunpack.c.l.b16 %v4857
    %v5157 = vunpack.c.h.b16 %v4857
    %v5158 = vunpack.c.l.b16 %v4858
    %v5159 = vunpack.c.h.b16 %v4858
    %v5160 = vunpack.c.l.b16 %v4859
    %v5161 = vunpack.c.h.b16 %v4859
    %v5162 = vunpack.c.l.b16 %v4860
    %v5163 = vunpack.c.h.b16 %v4860
    %v5164 = vunpack.c.l.b16 %v4861
    %v5165 = vunpack.c.h.b16 %v4861
    %v5166 = vunpack.c.l.b16 %v4862
    %v5167 = vunpack.c.h.b16 %v4862
    %v5168 = vunpack.c.l.b16 %v4863
    %v5169 = vunpack.c.h.b16 %v4863
    %v5170 = vunpack.c.l.b16 %v4864
    %v5171 = vunpack.c.h.b16 %v4864
    %v5172 = vunpack.c.l.b16 %v4865
    %v5173 = vunpack.c.h.b16 %v4865
    %v5174 = vunpack.c.l.b16 %v4866
    %v5175 = vunpack.c.h.b16 %v4866
    %v5176 = vunpack.c.l.b16 %v4867
    %v5177 = vunpack.c.h.b16 %v4867
    %v5178 = vunpack.c.l.b16 %v4868
    %v5179 = vunpack.c.h.b16 %v4868
    %v5180 = vunpack.c.l.b16 %v4869
    %v5181 = vunpack.c.h.b16 %v4869
    %v5182 = vunpack.c.l.b16 %v4870
    %v5183 = vunpack.c.h.b16 %v4870
    %v5184 = vunpack.c.l.b16 %v4871
    %v5185 = vunpack.c.h.b16 %v4871
    %v5186 = vunpack.c.l.b16 %v4872
    %v5187 = vunpack.c.h.b16 %v4872
    %v5188 = vunpack.c.l.b16 %v4873
    %v5189 = vunpack.c.h.b16 %v4873
    %v5190 = vunpack.c.l.b16 %v4874
    %v5191 = vunpack.c.h.b16 %v4874
    %v5192 = vunpack.c.l.b16 %v4875
    %v5193 = vunpack.c.h.b16 %v4875
    %v5194 = vunpack.c.l.b16 %v4876
    %v5195 = vunpack.c.h.b16 %v4876
    %v5196 = vunpack.c.l.b16 %v4877
    %v5197 = vunpack.c.h.b16 %v4877
    %v5198 = vunpack.c.l.b16 %v4878
    %v5199 = vunpack.c.h.b16 %v4878
    %v5200 = vunpack.c.l.b16 %v4879
    %v5201 = vunpack.c.h.b16 %v4879
    %v5202 = vunpack.c.l.b16 %v4880
    %v5203 = vunpack.c.h.b16 %v4880
    %v5204 = vunpack.c.l.b16 %v4881
    %v5205 = vunpack.c.h.b16 %v4881
    %v5206 = vunpack.c.l.b16 %v4882
    %v5207 = vunpack.c.h.b16 %v4882
    %v5208 = vunpack.c.l.b16 %v4883
    %v5209 = vunpack.c.h.b16 %v4883
    %v5210 = vunpack.c.l.b16 %v4884
    %v5211 = vunpack.c.h.b16 %v4884
    %v5212 = vunpack.c.l.b16 %v4885
    %v5213 = vunpack.c.h.b16 %v4885
    %v5214 = vunpack.c.l.b16 %v4886
    %v5215 = vunpack.c.h.b16 %v4886
    %v5216 = vunpack.c.l.b16 %v4887
    %v5217 = vunpack.c.h.b16 %v4887
    %v5218 = vunpack.c.l.b16 %v4888
    %v5219 = vunpack.c.h.b16 %v4888
    %v5220 = vunpack.c.l.b16 %v4889
    %v5221 = vunpack.c.h.b16 %v4889
    %v5222 = vunpack.c.l.b16 %v4890
    %v5223 = vunpack.c.h.b16 %v4890
    %v5224 = vunpack.c.l.b16 %v4891
    %v5225 = vunpack.c.h.b16 %v4891
    %v5226 = vunpack.c.l.b16 %v4892
    %v5227 = vunpack.c.h.b16 %v4892
    %v5228 = vunpack.c.l.b16 %v4893
    %v5229 = vunpack.c.h.b16 %v4893
    %v5230 = vunpack.c.l.b16 %v4894
    %v5231 = vunpack.c.h.b16 %v4894
    %v5232 = vunpack.c.l.b16 %v4895
    %v5233 = vunpack.c.h.b16 %v4895
    %v5234 = vunpack.c.l.b16 %v4896
    %v5235 = vunpack.c.h.b16 %v4896
    %v5236 = vunpack.c.l.b16 %v4897
    %v5237 = vunpack.c.h.b16 %v4897
    %v5238 = vunpack.c.l.b16 %v4898
    %v5239 = vunpack.c.h.b16 %v4898
    %v5240 = vunpack.c.l.b16 %v4899
    %v5241 = vunpack.c.h.b16 %v4899
    %v5242 = vunpack.c.l.b16 %v4900
    %v5243 = vunpack.c.h.b16 %v4900
    %v5244 = vunpack.c.l.b16 %v4901
    %v5245 = vunpack.c.h.b16 %v4901
    %v5246 = vunpack.c.l.b16 %v4902
    %v5247 = vunpack.c.h.b16 %v4902
    %v5248 = vunpack.c.l.b16 %v4903
    %v5249 = vunpack.c.h.b16 %v4903
    %v5250 = vunpack.c.l.b16 %v4904
    %v5251 = vunpack.c.h.b16 %v4904
    %v5252 = vunpack.c.l.b16 %v4905
    %v5253 = vunpack.c.h.b16 %v4905
    %v5254 = vunpack.c.l.b16 %v4906
    %v5255 = vunpack.c.h.b16 %v4906
    %v5256 = vunpack.c.l.b16 %v4907
    %v5257 = vunpack.c.h.b16 %v4907
    %v5258 = vunpack.c.l.b16 %v4908
    %v5259 = vunpack.c.h.b16 %v4908
    %v5260 = vunpack.c.l.b16 %v4909
    %v5261 = vunpack.c.h.b16 %v4909
    %v5262 = vunpack.c.l.b16 %v4910
    %v5263 = vunpack.c.h.b16 %v4910
    %v5264 = vunpack.c.l.b16 %v4911
    %v5265 = vunpack.c.h.b16 %v4911
    %v5266 = vunpack.c.l.b16 %v4912
    %v5267 = vunpack.c.h.b16 %v4912
    %v5268 = vunpack.c.l.b16 %v4913
    %v5269 = vunpack.c.h.b16 %v4913
    %v5270 = vunpack.c.l.b16 %v4914
    %v5271 = vunpack.c.h.b16 %v4914
    %v5272 = vunpack.c.l.b16 %v4915
    %v5273 = vunpack.c.h.b16 %v4915
    %v5274 = vunpack.c.l.b16 %v4916
    %v5275 = vunpack.c.h.b16 %v4916
    %v5276 = vunpack.c.l.b16 %v4917
    %v5277 = vunpack.c.h.b16 %v4917
    %v5278 = vunpack.c.l.b16 %v4918
    %v5279 = vunpack.c.h.b16 %v4918
    %v5280 = vunpack.c.l.b16 %v4919
    %v5281 = vunpack.c.h.b16 %v4919
    %v5282 = vunpack.c.l.b16 %v4920
    %v5283 = vunpack.c.h.b16 %v4920
    %v5284 = vunpack.c.l.b16 %v4921
    %v5285 = vunpack.c.h.b16 %v4921
    %v5286 = vunpack.c.l.b16 %v4922
    %v5287 = vunpack.c.h.b16 %v4922
    %v5288 = vunpack.c.l.b16 %v4923
    %v5289 = vunpack.c.h.b16 %v4923
    %v5290 = vunpack.c.l.b16 %v4924
    %v5291 = vunpack.c.h.b16 %v4924
    %v5292 = vunpack.c.l.b16 %v4925
    %v5293 = vunpack.c.h.b16 %v4925
    %v5294 = vunpack.c.l.b16 %v4926
    %v5295 = vunpack.c.h.b16 %v4926
    %v5296 = vunpack.c.l.b16 %v4927
    %v5297 = vunpack.c.h.b16 %v4927
    %v5298 = vunpack.c.l.b16 %v4928
    %v5299 = vunpack.c.h.b16 %v4928
    %v5300 = vunpack.c.l.b16 %v4929
    %v5301 = vunpack.c.h.b16 %v4929
    %v5302 = vunpack.c.l.b16 %v4930
    %v5303 = vunpack.c.h.b16 %v4930
    %v5304 = vunpack.c.l.b16 %v4931
    %v5305 = vunpack.c.h.b16 %v4931
    %v5306 = vunpack.c.l.b16 %v4932
    %v5307 = vunpack.c.h.b16 %v4932
    %v5308 = vunpack.c.l.b16 %v4933
    %v5309 = vunpack.c.h.b16 %v4933
    %v5310 = vunpack.c.l.b16 %v4934
    %v5311 = vunpack.c.h.b16 %v4934
    %v5312 = vunpack.c.l.b16 %v4935
    %v5313 = vunpack.c.h.b16 %v4935
    %v5314 = vunpack.c.l.b16 %v4936
    %v5315 = vunpack.c.h.b16 %v4936
    %v5316 = vunpack.c.l.b16 %v4937
    %v5317 = vunpack.c.h.b16 %v4937
    %v5318 = vunpack.c.l.b16 %v4938
    %v5319 = vunpack.c.h.b16 %v4938
    %v5320 = vunpack.c.l.b16 %v4939
    %v5321 = vunpack.c.h.b16 %v4939
    %v5322 = vunpack.c.l.b16 %v4940
    %v5323 = vunpack.c.h.b16 %v4940
    %v5324 = vunpack.c.l.b16 %v4941
    %v5325 = vunpack.c.h.b16 %v4941
    %v5326 = vunpack.c.l.b16 %v4942
    %v5327 = vunpack.c.h.b16 %v4942
    %v5328 = vunpack.c.l.b16 %v4943
    %v5329 = vunpack.c.h.b16 %v4943
    %v5330 = vunpack.c.l.b16 %v4944
    %v5331 = vunpack.c.h.b16 %v4944
    %v5332 = vunpack.c.l.b16 %v4945
    %v5333 = vunpack.c.h.b16 %v4945
    %v5334 = vunpack.c.l.b16 %v4946
    %v5335 = vunpack.c.h.b16 %v4946
    %v5336 = vunpack.c.l.b16 %v4947
    %v5337 = vunpack.c.h.b16 %v4947
    %v5338 = vunpack.c.l.b16 %v4948
    %v5339 = vunpack.c.h.b16 %v4948
    %v5340 = vunpack.c.l.b16 %v4949
    %v5341 = vunpack.c.h.b16 %v4949
    %v5342 = vunpack.c.l.b16 %v4950
    %v5343 = vunpack.c.h.b16 %v4950
    %v5344 = vunpack.c.l.b16 %v4951
    %v5345 = vunpack.c.h.b16 %v4951
    %v5346 = vpack.c.b16 %v5094, %v5090
    %v5347 = vpack.c.b16 %v5095, %v5091
    %v5348 = vpack.c.b16 %v5096, %v5092
    %v5349 = vpack.c.b16 %v5097, %v5093
    %v5350 = vpack.c.b16 %v5102, %v5098
    %v5351 = vpack.c.b16 %v5103, %v5099
    %v5352 = vpack.c.b16 %v5104, %v5100
    %v5353 = vpack.c.b16 %v5105, %v5101
    %v5354 = vpack.c.b16 %v5110, %v5106
    %v5355 = vpack.c.b16 %v5111, %v5107
    %v5356 = vpack.c.b16 %v5112, %v5108
    %v5357 = vpack.c.b16 %v5113, %v5109
    %v5358 = vpack.c.b16 %v5118, %v5114
    %v5359 = vpack.c.b16 %v5119, %v5115
    %v5360 = vpack.c.b16 %v5120, %v5116
    %v5361 = vpack.c.b16 %v5121, %v5117
    %v5362 = vpack.c.b16 %v5126, %v5122
    %v5363 = vpack.c.b16 %v5127, %v5123
    %v5364 = vpack.c.b16 %v5128, %v5124
    %v5365 = vpack.c.b16 %v5129, %v5125
    %v5366 = vpack.c.b16 %v5134, %v5130
    %v5367 = vpack.c.b16 %v5135, %v5131
    %v5368 = vpack.c.b16 %v5136, %v5132
    %v5369 = vpack.c.b16 %v5137, %v5133
    %v5370 = vpack.c.b16 %v5142, %v5138
    %v5371 = vpack.c.b16 %v5143, %v5139
    %v5372 = vpack.c.b16 %v5144, %v5140
    %v5373 = vpack.c.b16 %v5145, %v5141
    %v5374 = vpack.c.b16 %v5150, %v5146
    %v5375 = vpack.c.b16 %v5151, %v5147
    %v5376 = vpack.c.b16 %v5152, %v5148
    %v5377 = vpack.c.b16 %v5153, %v5149
    %v5378 = vpack.c.b16 %v5158, %v5154
    %v5379 = vpack.c.b16 %v5159, %v5155
    %v5380 = vpack.c.b16 %v5160, %v5156
    %v5381 = vpack.c.b16 %v5161, %v5157
    %v5382 = vpack.c.b16 %v5166, %v5162
    %v5383 = vpack.c.b16 %v5167, %v5163
    %v5384 = vpack.c.b16 %v5168, %v5164
    %v5385 = vpack.c.b16 %v5169, %v5165
    %v5386 = vpack.c.b16 %v5174, %v5170
    %v5387 = vpack.c.b16 %v5175, %v5171
    %v5388 = vpack.c.b16 %v5176, %v5172
    %v5389 = vpack.c.b16 %v5177, %v5173
    %v5390 = vpack.c.b16 %v5182, %v5178
    %v5391 = vpack.c.b16 %v5183, %v5179
    %v5392 = vpack.c.b16 %v5184, %v5180
    %v5393 = vpack.c.b16 %v5185, %v5181
    %v5394 = vpack.c.b16 %v5190, %v5186
    %v5395 = vpack.c.b16 %v5191, %v5187
    %v5396 = vpack.c.b16 %v5192, %v5188
    %v5397 = vpack.c.b16 %v5193, %v5189
    %v5398 = vpack.c.b16 %v5198, %v5194
    %v5399 = vpack.c.b16 %v5199, %v5195
    %v5400 = vpack.c.b16 %v5200, %v5196
    %v5401 = vpack.c.b16 %v5201, %v5197
    %v5402 = vpack.c.b16 %v5206, %v5202
    %v5403 = vpack.c.b16 %v5207, %v5203
    %v5404 = vpack.c.b16 %v5208, %v5204
    %v5405 = vpack.c.b16 %v5209, %v5205
    %v5406 = vpack.c.b16 %v5214, %v5210
    %v5407 = vpack.c.b16 %v5215, %v5211
    %v5408 = vpack.c.b16 %v5216, %v5212
    %v5409 = vpack.c.b16 %v5217, %v5213
    %v5410 = vpack.c.b16 %v5222, %v5218
    %v5411 = vpack.c.b16 %v5223, %v5219
    %v5412 = vpack.c.b16 %v5224, %v5220
    %v5413 = vpack.c.b16 %v5225, %v5221
    %v5414 = vpack.c.b16 %v5230, %v5226
    %v5415 = vpack.c.b16 %v5231, %v5227
    %v5416 = vpack.c.b16 %v5232, %v5228
    %v5417 = vpack.c.b16 %v5233, %v5229
    %v5418 = vpack.c.b16 %v5238, %v5234
    %v5419 = vpack.c.b16 %v5239, %v5235
    %v5420 = vpack.c.b16 %v5240, %v5236
    %v5421 = vpack.c.b16 %v5241, %v5237
    %v5422 = vpack.c.b16 %v5246, %v5242
    %v5423 = vpack.c.b16 %v5247, %v5243
    %v5424 = vpack.c.b16 %v5248, %v5244
    %v5425 = vpack.c.b16 %v5249, %v5245
    %v5426 = vpack.c.b16 %v5254, %v5250
    %v5427 = vpack.c.b16 %v5255, %v5251
    %v5428 = vpack.c.b16 %v5256, %v5252
    %v5429 = vpack.c.b16 %v5257, %v5253
    %v5430 = vpack.c.b16 %v5262, %v5258
    %v5431 = vpack.c.b16 %v5263, %v5259
    %v5432 = vpack.c.b16 %v5264, %v5260
    %v5433 = vpack.c.b16 %v5265, %v5261
    %v5434 = vpack.c.b16 %v5270, %v5266
    %v5435 = vpack.c.b16 %v5271, %v5267
    %v5436 = vpack.c.b16 %v5272, %v5268
    %v5437 = vpack.c.b16 %v5273, %v5269
    %v5438 = vpack.c.b16 %v5278, %v5274
    %v5439 = vpack.c.b16 %v5279, %v5275
    %v5440 = vpack.c.b16 %v5280, %v5276
    %v5441 = vpack.c.b16 %v5281, %v5277
    %v5442 = vpack.c.b16 %v5286, %v5282
    %v5443 = vpack.c.b16 %v5287, %v5283
    %v5444 = vpack.c.b16 %v5288, %v5284
    %v5445 = vpack.c.b16 %v5289, %v5285
    %v5446 = vpack.c.b16 %v5294, %v5290
    %v5447 = vpack.c.b16 %v5295, %v5291
    %v5448 = vpack.c.b16 %v5296, %v5292
    %v5449 = vpack.c.b16 %v5297, %v5293
    %v5450 = vpack.c.b16 %v5302, %v5298
    %v5451 = vpack.c.b16 %v5303, %v5299
    %v5452 = vpack.c.b16 %v5304, %v5300
    %v5453 = vpack.c.b16 %v5305, %v5301
    %v5454 = vpack.c.b16 %v5310, %v5306
    %v5455 = vpack.c.b16 %v5311, %v5307
    %v5456 = vpack.c.b16 %v5312, %v5308
    %v5457 = vpack.c.b16 %v5313, %v5309
    %v5458 = vpack.c.b16 %v5318, %v5314
    %v5459 = vpack.c.b16 %v5319, %v5315
    %v5460 = vpack.c.b16 %v5320, %v5316
    %v5461 = vpack.c.b16 %v5321, %v5317
    %v5462 = vpack.c.b16 %v5326, %v5322
    %v5463 = vpack.c.b16 %v5327, %v5323
    %v5464 = vpack.c.b16 %v5328, %v5324
    %v5465 = vpack.c.b16 %v5329, %v5325
    %v5466 = vpack.c.b16 %v5334, %v5330
    %v5467 = vpack.c.b16 %v5335, %v5331
    %v5468 = vpack.c.b16 %v5336, %v5332
    %v5469 = vpack.c.b16 %v5337, %v5333
    %v5470 = vpack.c.b16 %v5342, %v5338
    %v5471 = vpack.c.b16 %v5343, %v5339
    %v5472 = vpack.c.b16 %v5344, %v5340
    %v5473 = vpack.c.b16 %v5345, %v5341
    %5602 = vmatpush.bf16.msra.mxu0 %v5374
    %5603 = vmatpush.bf16.msra.mxu0 %v5370
    %5604 = vmatpush.bf16.msra.mxu0 %v5366
    %5605 = vmatpush.bf16.msra.mxu0 %v5362
    %5606 = vmatpush.bf16.msra.mxu0 %v5358
    %5607 = vmatpush.bf16.msra.mxu0 %v5354
    %5608 = vmatpush.bf16.msra.mxu0 %v5350
    %5609 = vmatpush.bf16.msra.mxu0 %v5346
    %5610 = vmatmul.bf16.gmra.mxu0 %v4820
    %v5611 = vpop.f32.mrf.mxu0
    %v5612 = vadd.f32 %v4954, %v5611
    %v5613 = vpop.f32.mrf.mxu0
    %v5614 = vadd.f32 %v4954, %v5613
    %5615 = vdwg.mxu0
    %5616 = vmatpush.bf16.msra.mxu0 %v5406
    %5617 = vmatpush.bf16.msra.mxu0 %v5402
    %5618 = vmatpush.bf16.msra.mxu0 %v5398
    %5619 = vmatpush.bf16.msra.mxu0 %v5394
    %5620 = vmatpush.bf16.msra.mxu0 %v5390
    %5621 = vmatpush.bf16.msra.mxu0 %v5386
    %5622 = vmatpush.bf16.msra.mxu0 %v5382
    %5623 = vmatpush.bf16.msra.mxu0 %v5378
    %5624 = vmatmul.bf16.gmra.mxu0 %v4821
    %v5625 = vpop.f32.mrf.mxu0
    %v5626 = vadd.f32 %v5612, %v5625
    %v5627 = vpop.f32.mrf.mxu0
    %v5628 = vadd.f32 %v5614, %v5627
    %5629 = vdwg.mxu0
    %5630 = vmatpush.bf16.msra.mxu0 %v5438
    %5631 = vmatpush.bf16.msra.mxu0 %v5434
    %5632 = vmatpush.bf16.msra.mxu0 %v5430
    %5633 = vmatpush.bf16.msra.mxu0 %v5426
    %5634 = vmatpush.bf16.msra.mxu0 %v5422
    %5635 = vmatpush.bf16.msra.mxu0 %v5418
    %5636 = vmatpush.bf16.msra.mxu0 %v5414
    %5637 = vmatpush.bf16.msra.mxu0 %v5410
    %5638 = vmatmul.bf16.gmra.mxu0 %v4822
    %v5639 = vpop.f32.mrf.mxu0
    %v5640 = vadd.f32 %v5626, %v5639
    %v5641 = vpop.f32.mrf.mxu0
    %v5642 = vadd.f32 %v5628, %v5641
    %5643 = vdwg.mxu0
    %5644 = vmatpush.bf16.msra.mxu0 %v5470
    %5645 = vmatpush.bf16.msra.mxu0 %v5466
    %5646 = vmatpush.bf16.msra.mxu0 %v5462
    %5647 = vmatpush.bf16.msra.mxu0 %v5458
    %5648 = vmatpush.bf16.msra.mxu0 %v5454
    %5649 = vmatpush.bf16.msra.mxu0 %v5450
    %5650 = vmatpush.bf16.msra.mxu0 %v5446
    %5651 = vmatpush.bf16.msra.mxu0 %v5442
    %5652 = vmatmul.bf16.gmra.mxu0 %v4823
    %v5653 = vpop.f32.mrf.mxu0
    %v5654 = vadd.f32 %v5640, %v5653
    %v5655 = vpop.f32.mrf.mxu0
    %v5656 = vadd.f32 %v5642, %v5655
    %5657 = vdwg.mxu0
    %5658 = vmatpush.bf16.msra.mxu0 %v5375
    %5659 = vmatpush.bf16.msra.mxu0 %v5371
    %5660 = vmatpush.bf16.msra.mxu0 %v5367
    %5661 = vmatpush.bf16.msra.mxu0 %v5363
    %5662 = vmatpush.bf16.msra.mxu0 %v5359
    %5663 = vmatpush.bf16.msra.mxu0 %v5355
    %5664 = vmatpush.bf16.msra.mxu0 %v5351
    %5665 = vmatpush.bf16.msra.mxu0 %v5347
    %5666 = vmatmul.bf16.gmra.mxu0 %v4820
    %v5667 = vpop.f32.mrf.mxu0
    %v5668 = vadd.f32 %v4955, %v5667
    %v5669 = vpop.f32.mrf.mxu0
    %v5670 = vadd.f32 %v4955, %v5669
    %5671 = vdwg.mxu0
    %5672 = vmatpush.bf16.msra.mxu0 %v5407
    %5673 = vmatpush.bf16.msra.mxu0 %v5403
    %5674 = vmatpush.bf16.msra.mxu0 %v5399
    %5675 = vmatpush.bf16.msra.mxu0 %v5395
    %5676 = vmatpush.bf16.msra.mxu0 %v5391
    %5677 = vmatpush.bf16.msra.mxu0 %v5387
    %5678 = vmatpush.bf16.msra.mxu0 %v5383
    %5679 = vmatpush.bf16.msra.mxu0 %v5379
    %5680 = vmatmul.bf16.gmra.mxu0 %v4821
    %v5681 = vpop.f32.mrf.mxu0
    %v5682 = vadd.f32 %v5668, %v5681
    %v5683 = vpop.f32.mrf.mxu0
    %v5684 = vadd.f32 %v5670, %v5683
    %5685 = vdwg.mxu0
    %5686 = vmatpush.bf16.msra.mxu0 %v5439
    %5687 = vmatpush.bf16.msra.mxu0 %v5435
    %5688 = vmatpush.bf16.msra.mxu0 %v5431
    %5689 = vmatpush.bf16.msra.mxu0 %v5427
    %5690 = vmatpush.bf16.msra.mxu0 %v5423
    %5691 = vmatpush.bf16.msra.mxu0 %v5419
    %5692 = vmatpush.bf16.msra.mxu0 %v5415
    %5693 = vmatpush.bf16.msra.mxu0 %v5411
    %5694 = vmatmul.bf16.gmra.mxu0 %v4822
    %v5695 = vpop.f32.mrf.mxu0
    %v5696 = vadd.f32 %v5682, %v5695
    %v5697 = vpop.f32.mrf.mxu0
    %v5698 = vadd.f32 %v5684, %v5697
    %5699 = vdwg.mxu0
    %5700 = vmatpush.bf16.msra.mxu0 %v5471
    %5701 = vmatpush.bf16.msra.mxu0 %v5467
    %5702 = vmatpush.bf16.msra.mxu0 %v5463
    %5703 = vmatpush.bf16.msra.mxu0 %v5459
    %5704 = vmatpush.bf16.msra.mxu0 %v5455
    %5705 = vmatpush.bf16.msra.mxu0 %v5451
    %5706 = vmatpush.bf16.msra.mxu0 %v5447
    %5707 = vmatpush.bf16.msra.mxu0 %v5443
    %5708 = vmatmul.bf16.gmra.mxu0 %v4823
    %v5709 = vpop.f32.mrf.mxu0
    %v5710 = vadd.f32 %v5696, %v5709
    %v5711 = vpop.f32.mrf.mxu0
    %v5712 = vadd.f32 %v5698, %v5711
    %5713 = vdwg.mxu0
    %5714 = vmatpush.bf16.msra.mxu0 %v5376
    %5715 = vmatpush.bf16.msra.mxu0 %v5372
    %5716 = vmatpush.bf16.msra.mxu0 %v5368
    %5717 = vmatpush.bf16.msra.mxu0 %v5364
    %5718 = vmatpush.bf16.msra.mxu0 %v5360
    %5719 = vmatpush.bf16.msra.mxu0 %v5356
    %5720 = vmatpush.bf16.msra.mxu0 %v5352
    %5721 = vmatpush.bf16.msra.mxu0 %v5348
    %5722 = vmatmul.bf16.gmra.mxu0 %v4820
    %v5723 = vpop.f32.mrf.mxu0
    %v5724 = vadd.f32 %v4956, %v5723
    %v5725 = vpop.f32.mrf.mxu0
    %v5726 = vadd.f32 %v4956, %v5725
    %5727 = vdwg.mxu0
    %5728 = vmatpush.bf16.msra.mxu0 %v5408
    %5729 = vmatpush.bf16.msra.mxu0 %v5404
    %5730 = vmatpush.bf16.msra.mxu0 %v5400
    %5731 = vmatpush.bf16.msra.mxu0 %v5396
    %5732 = vmatpush.bf16.msra.mxu0 %v5392
    %5733 = vmatpush.bf16.msra.mxu0 %v5388
    %5734 = vmatpush.bf16.msra.mxu0 %v5384
    %5735 = vmatpush.bf16.msra.mxu0 %v5380
    %5736 = vmatmul.bf16.gmra.mxu0 %v4821
    %v5737 = vpop.f32.mrf.mxu0
    %v5738 = vadd.f32 %v5724, %v5737
    %v5739 = vpop.f32.mrf.mxu0
    %v5740 = vadd.f32 %v5726, %v5739
    %5741 = vdwg.mxu0
    %5742 = vmatpush.bf16.msra.mxu0 %v5440
    %5743 = vmatpush.bf16.msra.mxu0 %v5436
    %5744 = vmatpush.bf16.msra.mxu0 %v5432
    %5745 = vmatpush.bf16.msra.mxu0 %v5428
    %5746 = vmatpush.bf16.msra.mxu0 %v5424
    %5747 = vmatpush.bf16.msra.mxu0 %v5420
    %5748 = vmatpush.bf16.msra.mxu0 %v5416
    %5749 = vmatpush.bf16.msra.mxu0 %v5412
    %5750 = vmatmul.bf16.gmra.mxu0 %v4822
    %v5751 = vpop.f32.mrf.mxu0
    %v5752 = vadd.f32 %v5738, %v5751
    %v5753 = vpop.f32.mrf.mxu0
    %v5754 = vadd.f32 %v5740, %v5753
    %5755 = vdwg.mxu0
    %5756 = vmatpush.bf16.msra.mxu0 %v5472
    %5757 = vmatpush.bf16.msra.mxu0 %v5468
    %5758 = vmatpush.bf16.msra.mxu0 %v5464
    %5759 = vmatpush.bf16.msra.mxu0 %v5460
    %5760 = vmatpush.bf16.msra.mxu0 %v5456
    %5761 = vmatpush.bf16.msra.mxu0 %v5452
    %5762 = vmatpush.bf16.msra.mxu0 %v5448
    %5763 = vmatpush.bf16.msra.mxu0 %v5444
    %5764 = vmatmul.bf16.gmra.mxu0 %v4823
    %v5765 = vpop.f32.mrf.mxu0
    %v5766 = vadd.f32 %v5752, %v5765
    %v5767 = vpop.f32.mrf.mxu0
    %v5768 = vadd.f32 %v5754, %v5767
    %5769 = vdwg.mxu0
    %5770 = vmatpush.bf16.msra.mxu0 %v5377
    %5771 = vmatpush.bf16.msra.mxu0 %v5373
    %5772 = vmatpush.bf16.msra.mxu0 %v5369
    %5773 = vmatpush.bf16.msra.mxu0 %v5365
    %5774 = vmatpush.bf16.msra.mxu0 %v5361
    %5775 = vmatpush.bf16.msra.mxu0 %v5357
    %5776 = vmatpush.bf16.msra.mxu0 %v5353
    %5777 = vmatpush.bf16.msra.mxu0 %v5349
    %5778 = vmatmul.bf16.gmra.mxu0 %v4820
    %v5779 = vpop.f32.mrf.mxu0
    %v5780 = vadd.f32 %v4957, %v5779
    %v5781 = vpop.f32.mrf.mxu0
    %v5782 = vadd.f32 %v4957, %v5781
    %5783 = vdwg.mxu0
    %5784 = vmatpush.bf16.msra.mxu0 %v5409
    %5785 = vmatpush.bf16.msra.mxu0 %v5405
    %5786 = vmatpush.bf16.msra.mxu0 %v5401
    %5787 = vmatpush.bf16.msra.mxu0 %v5397
    %5788 = vmatpush.bf16.msra.mxu0 %v5393
    %5789 = vmatpush.bf16.msra.mxu0 %v5389
    %5790 = vmatpush.bf16.msra.mxu0 %v5385
    %5791 = vmatpush.bf16.msra.mxu0 %v5381
    %5792 = vmatmul.bf16.gmra.mxu0 %v4821
    %v5793 = vpop.f32.mrf.mxu0
    %v5794 = vadd.f32 %v5780, %v5793
    %v5795 = vpop.f32.mrf.mxu0
    %v5796 = vadd.f32 %v5782, %v5795
    %5797 = vdwg.mxu0
    %5798 = vmatpush.bf16.msra.mxu0 %v5441
    %5799 = vmatpush.bf16.msra.mxu0 %v5437
    %5800 = vmatpush.bf16.msra.mxu0 %v5433
    %5801 = vmatpush.bf16.msra.mxu0 %v5429
    %5802 = vmatpush.bf16.msra.mxu0 %v5425
    %5803 = vmatpush.bf16.msra.mxu0 %v5421
    %5804 = vmatpush.bf16.msra.mxu0 %v5417
    %5805 = vmatpush.bf16.msra.mxu0 %v5413
    %5806 = vmatmul.bf16.gmra.mxu0 %v4822
    %v5807 = vpop.f32.mrf.mxu0
    %v5808 = vadd.f32 %v5794, %v5807
    %v5809 = vpop.f32.mrf.mxu0
    %v5810 = vadd.f32 %v5796, %v5809
    %5811 = vdwg.mxu0
    %5812 = vmatpush.bf16.msra.mxu0 %v5473
    %5813 = vmatpush.bf16.msra.mxu0 %v5469
    %5814 = vmatpush.bf16.msra.mxu0 %v5465
    %5815 = vmatpush.bf16.msra.mxu0 %v5461
    %5816 = vmatpush.bf16.msra.mxu0 %v5457
    %5817 = vmatpush.bf16.msra.mxu0 %v5453
    %5818 = vmatpush.bf16.msra.mxu0 %v5449
    %5819 = vmatpush.bf16.msra.mxu0 %v5445
    %5820 = vmatmul.bf16.gmra.mxu0 %v4823
    %v5821 = vpop.f32.mrf.mxu0
    %v5822 = vadd.f32 %v5808, %v5821
    %v5823 = vpop.f32.mrf.mxu0
    %v5824 = vadd.f32 %v5810, %v5823
    %5825 = vdwg.mxu0
    %v5826 = vmax.f32 %v5654, 0.0
    %v5827 = vmax.f32 %v5710, 0.0
    %v5828 = vmax.f32 %v5766, 0.0
    %v5829 = vmax.f32 %v5822, 0.0
    %v5830 = vmax.f32 %v5656, 0.0
    %v5831 = vmax.f32 %v5712, 0.0
    %v5832 = vmax.f32 %v5768, 0.0
    %v5833 = vmax.f32 %v5824, 0.0
    %v5834 = vpack.c.bf16 %v5830, %v5826
    %v5835 = vpack.c.bf16 %v5831, %v5827
    %v5836 = vpack.c.bf16 %v5832, %v5828
    %v5837 = vpack.c.bf16 %v5833, %v5829
    %v5838 = vld [vmem:[#allocation19] sm:$0xf]
    %v5839 = vld [vmem:[#allocation19 + $0x4] sm:$0xf]
    %v5840 = vld [vmem:[#allocation19 + $0x8] sm:$0xf]
    %v5841 = vld [vmem:[#allocation19 + $0xc] sm:$0xf]
    %v5842 = vld [vmem:[#allocation19 + $0x10] sm:$0xf]
    %v5843 = vld [vmem:[#allocation19 + $0x14] sm:$0xf]
    %v5844 = vld [vmem:[#allocation19 + $0x18] sm:$0xf]
    %v5845 = vld [vmem:[#allocation19 + $0x1c] sm:$0xf]
    %v5846 = vld [vmem:[#allocation19 + $0x20] sm:$0xf]
    %v5847 = vld [vmem:[#allocation19 + $0x24] sm:$0xf]
    %v5848 = vld [vmem:[#allocation19 + $0x28] sm:$0xf]
    %v5849 = vld [vmem:[#allocation19 + $0x2c] sm:$0xf]
    %v5850 = vld [vmem:[#allocation19 + $0x30] sm:$0xf]
    %v5851 = vld [vmem:[#allocation19 + $0x34] sm:$0xf]
    %v5852 = vld [vmem:[#allocation19 + $0x38] sm:$0xf]
    %v5853 = vld [vmem:[#allocation19 + $0x3c] sm:$0xf]
    %v5854 = vld [vmem:[#allocation19 + $0x40] sm:$0xf]
    %v5855 = vld [vmem:[#allocation19 + $0x44] sm:$0xf]
    %v5856 = vld [vmem:[#allocation19 + $0x48] sm:$0xf]
    %v5857 = vld [vmem:[#allocation19 + $0x4c] sm:$0xf]
    %v5858 = vld [vmem:[#allocation19 + $0x50] sm:$0xf]
    %v5859 = vld [vmem:[#allocation19 + $0x54] sm:$0xf]
    %v5860 = vld [vmem:[#allocation19 + $0x58] sm:$0xf]
    %v5861 = vld [vmem:[#allocation19 + $0x5c] sm:$0xf]
    %v5862 = vld [vmem:[#allocation19 + $0x60] sm:$0xf]
    %v5863 = vld [vmem:[#allocation19 + $0x64] sm:$0xf]
    %v5864 = vld [vmem:[#allocation19 + $0x68] sm:$0xf]
    %v5865 = vld [vmem:[#allocation19 + $0x6c] sm:$0xf]
    %v5866 = vld [vmem:[#allocation19 + $0x70] sm:$0xf]
    %v5867 = vld [vmem:[#allocation19 + $0x74] sm:$0xf]
    %v5868 = vld [vmem:[#allocation19 + $0x78] sm:$0xf]
    %v5869 = vld [vmem:[#allocation19 + $0x7c] sm:$0xf]
    %v5870 = vld [vmem:[#allocation19 + $0x80] sm:$0xf]
    %v5871 = vld [vmem:[#allocation19 + $0x84] sm:$0xf]
    %v5872 = vld [vmem:[#allocation19 + $0x88] sm:$0xf]
    %v5873 = vld [vmem:[#allocation19 + $0x8c] sm:$0xf]
    %v5874 = vld [vmem:[#allocation19 + $0x90] sm:$0xf]
    %v5875 = vld [vmem:[#allocation19 + $0x94] sm:$0xf]
    %v5876 = vld [vmem:[#allocation19 + $0x98] sm:$0xf]
    %v5877 = vld [vmem:[#allocation19 + $0x9c] sm:$0xf]
    %v5878 = vld [vmem:[#allocation19 + $0xa0] sm:$0xf]
    %v5879 = vld [vmem:[#allocation19 + $0xa4] sm:$0xf]
    %v5880 = vld [vmem:[#allocation19 + $0xa8] sm:$0xf]
    %v5881 = vld [vmem:[#allocation19 + $0xac] sm:$0xf]
    %v5882 = vld [vmem:[#allocation19 + $0xb0] sm:$0xf]
    %v5883 = vld [vmem:[#allocation19 + $0xb4] sm:$0xf]
    %v5884 = vld [vmem:[#allocation19 + $0xb8] sm:$0xf]
    %v5885 = vld [vmem:[#allocation19 + $0xbc] sm:$0xf]
    %v5886 = vld [vmem:[#allocation19 + $0xc0] sm:$0xf]
    %v5887 = vld [vmem:[#allocation19 + $0xc4] sm:$0xf]
    %v5888 = vld [vmem:[#allocation19 + $0xc8] sm:$0xf]
    %v5889 = vld [vmem:[#allocation19 + $0xcc] sm:$0xf]
    %v5890 = vld [vmem:[#allocation19 + $0xd0] sm:$0xf]
    %v5891 = vld [vmem:[#allocation19 + $0xd4] sm:$0xf]
    %v5892 = vld [vmem:[#allocation19 + $0xd8] sm:$0xf]
    %v5893 = vld [vmem:[#allocation19 + $0xdc] sm:$0xf]
    %v5894 = vld [vmem:[#allocation19 + $0xe0] sm:$0xf]
    %v5895 = vld [vmem:[#allocation19 + $0xe4] sm:$0xf]
    %v5896 = vld [vmem:[#allocation19 + $0xe8] sm:$0xf]
    %v5897 = vld [vmem:[#allocation19 + $0xec] sm:$0xf]
    %v5898 = vld [vmem:[#allocation19 + $0xf0] sm:$0xf]
    %v5899 = vld [vmem:[#allocation19 + $0xf4] sm:$0xf]
    %v5900 = vld [vmem:[#allocation19 + $0xf8] sm:$0xf]
    %v5901 = vld [vmem:[#allocation19 + $0xfc] sm:$0xf]
    %v5902 = vld [vmem:[#allocation20] sm:$0x1]
    %v5904 = vperm.slane %v5902, 0
    %v5970 = vunpack.c.l.b16 %v5838
    %v5971 = vunpack.c.l.b16 %v5839
    %v5972 = vunpack.c.l.b16 %v5840
    %v5973 = vunpack.c.l.b16 %v5841
    %v5974 = vunpack.c.l.b16 %v5842
    %v5975 = vunpack.c.l.b16 %v5843
    %v5976 = vunpack.c.l.b16 %v5844
    %v5977 = vunpack.c.l.b16 %v5845
    %v5978 = vunpack.c.l.b16 %v5846
    %v5979 = vunpack.c.l.b16 %v5847
    %v5980 = vunpack.c.l.b16 %v5848
    %v5981 = vunpack.c.l.b16 %v5849
    %v5982 = vunpack.c.l.b16 %v5850
    %v5983 = vunpack.c.l.b16 %v5851
    %v5984 = vunpack.c.l.b16 %v5852
    %v5985 = vunpack.c.l.b16 %v5853
    %v5986 = vunpack.c.l.b16 %v5854
    %v5987 = vunpack.c.l.b16 %v5855
    %v5988 = vunpack.c.l.b16 %v5856
    %v5989 = vunpack.c.l.b16 %v5857
    %v5990 = vunpack.c.l.b16 %v5858
    %v5991 = vunpack.c.l.b16 %v5859
    %v5992 = vunpack.c.l.b16 %v5860
    %v5993 = vunpack.c.l.b16 %v5861
    %v5994 = vunpack.c.l.b16 %v5862
    %v5995 = vunpack.c.l.b16 %v5863
    %v5996 = vunpack.c.l.b16 %v5864
    %v5997 = vunpack.c.l.b16 %v5865
    %v5998 = vunpack.c.l.b16 %v5866
    %v5999 = vunpack.c.l.b16 %v5867
    %v6000 = vunpack.c.l.b16 %v5868
    %v6001 = vunpack.c.l.b16 %v5869
    %v6002 = vunpack.c.l.b16 %v5870
    %v6003 = vunpack.c.l.b16 %v5871
    %v6004 = vunpack.c.l.b16 %v5872
    %v6005 = vunpack.c.l.b16 %v5873
    %v6006 = vunpack.c.l.b16 %v5874
    %v6007 = vunpack.c.l.b16 %v5875
    %v6008 = vunpack.c.l.b16 %v5876
    %v6009 = vunpack.c.l.b16 %v5877
    %v6010 = vunpack.c.l.b16 %v5878
    %v6011 = vunpack.c.l.b16 %v5879
    %v6012 = vunpack.c.l.b16 %v5880
    %v6013 = vunpack.c.l.b16 %v5881
    %v6014 = vunpack.c.l.b16 %v5882
    %v6015 = vunpack.c.l.b16 %v5883
    %v6016 = vunpack.c.l.b16 %v5884
    %v6017 = vunpack.c.l.b16 %v5885
    %v6018 = vunpack.c.l.b16 %v5886
    %v6019 = vunpack.c.l.b16 %v5887
    %v6020 = vunpack.c.l.b16 %v5888
    %v6021 = vunpack.c.l.b16 %v5889
    %v6022 = vunpack.c.l.b16 %v5890
    %v6023 = vunpack.c.l.b16 %v5891
    %v6024 = vunpack.c.l.b16 %v5892
    %v6025 = vunpack.c.l.b16 %v5893
    %v6026 = vunpack.c.l.b16 %v5894
    %v6027 = vunpack.c.l.b16 %v5895
    %v6028 = vunpack.c.l.b16 %v5896
    %v6029 = vunpack.c.l.b16 %v5897
    %v6030 = vunpack.c.l.b16 %v5898
    %v6031 = vunpack.c.l.b16 %v5899
    %v6032 = vunpack.c.l.b16 %v5900
    %v6033 = vunpack.c.l.b16 %v5901
    %v6034 = vpack.c.b16 %v5971, %v5970
    %v6035 = vpack.c.b16 %v5973, %v5972
    %v6036 = vpack.c.b16 %v5975, %v5974
    %v6037 = vpack.c.b16 %v5977, %v5976
    %v6038 = vpack.c.b16 %v5979, %v5978
    %v6039 = vpack.c.b16 %v5981, %v5980
    %v6040 = vpack.c.b16 %v5983, %v5982
    %v6041 = vpack.c.b16 %v5985, %v5984
    %v6042 = vpack.c.b16 %v5987, %v5986
    %v6043 = vpack.c.b16 %v5989, %v5988
    %v6044 = vpack.c.b16 %v5991, %v5990
    %v6045 = vpack.c.b16 %v5993, %v5992
    %v6046 = vpack.c.b16 %v5995, %v5994
    %v6047 = vpack.c.b16 %v5997, %v5996
    %v6048 = vpack.c.b16 %v5999, %v5998
    %v6049 = vpack.c.b16 %v6001, %v6000
    %v6050 = vpack.c.b16 %v6003, %v6002
    %v6051 = vpack.c.b16 %v6005, %v6004
    %v6052 = vpack.c.b16 %v6007, %v6006
    %v6053 = vpack.c.b16 %v6009, %v6008
    %v6054 = vpack.c.b16 %v6011, %v6010
    %v6055 = vpack.c.b16 %v6013, %v6012
    %v6056 = vpack.c.b16 %v6015, %v6014
    %v6057 = vpack.c.b16 %v6017, %v6016
    %v6058 = vpack.c.b16 %v6019, %v6018
    %v6059 = vpack.c.b16 %v6021, %v6020
    %v6060 = vpack.c.b16 %v6023, %v6022
    %v6061 = vpack.c.b16 %v6025, %v6024
    %v6062 = vpack.c.b16 %v6027, %v6026
    %v6063 = vpack.c.b16 %v6029, %v6028
    %v6064 = vpack.c.b16 %v6031, %v6030
    %v6065 = vpack.c.b16 %v6033, %v6032
    %6098 = vmatpush.bf16.msra.mxu0 %v6041
    %6099 = vmatpush.bf16.msra.mxu0 %v6040
    %6100 = vmatpush.bf16.msra.mxu0 %v6039
    %6101 = vmatpush.bf16.msra.mxu0 %v6038
    %6102 = vmatpush.bf16.msra.mxu0 %v6037
    %6103 = vmatpush.bf16.msra.mxu0 %v6036
    %6104 = vmatpush.bf16.msra.mxu0 %v6035
    %6105 = vmatpush.bf16.msra.mxu0 %v6034
    %6106 = vmatmul.bf16.gmra.mxu0 %v5834
    %v6107 = vpop.f32.mrf.mxu0
    %v6108 = vadd.f32 %v5904, %v6107
    %v6109 = vpop.f32.mrf.mxu0
    %v6110 = vadd.f32 %v5904, %v6109
    %6111 = vdwg.mxu0
    %6112 = vmatpush.bf16.msra.mxu0 %v6049
    %6113 = vmatpush.bf16.msra.mxu0 %v6048
    %6114 = vmatpush.bf16.msra.mxu0 %v6047
    %6115 = vmatpush.bf16.msra.mxu0 %v6046
    %6116 = vmatpush.bf16.msra.mxu0 %v6045
    %6117 = vmatpush.bf16.msra.mxu0 %v6044
    %6118 = vmatpush.bf16.msra.mxu0 %v6043
    %6119 = vmatpush.bf16.msra.mxu0 %v6042
    %6120 = vmatmul.bf16.gmra.mxu0 %v5835
    %v6121 = vpop.f32.mrf.mxu0
    %v6122 = vadd.f32 %v6108, %v6121
    %v6123 = vpop.f32.mrf.mxu0
    %v6124 = vadd.f32 %v6110, %v6123
    %6125 = vdwg.mxu0
    %6126 = vmatpush.bf16.msra.mxu0 %v6057
    %6127 = vmatpush.bf16.msra.mxu0 %v6056
    %6128 = vmatpush.bf16.msra.mxu0 %v6055
    %6129 = vmatpush.bf16.msra.mxu0 %v6054
    %6130 = vmatpush.bf16.msra.mxu0 %v6053
    %6131 = vmatpush.bf16.msra.mxu0 %v6052
    %6132 = vmatpush.bf16.msra.mxu0 %v6051
    %6133 = vmatpush.bf16.msra.mxu0 %v6050
    %6134 = vmatmul.bf16.gmra.mxu0 %v5836
    %v6135 = vpop.f32.mrf.mxu0
    %v6136 = vadd.f32 %v6122, %v6135
    %v6137 = vpop.f32.mrf.mxu0
    %v6138 = vadd.f32 %v6124, %v6137
    %6139 = vdwg.mxu0
    %6140 = vmatpush.bf16.msra.mxu0 %v6065
    %6141 = vmatpush.bf16.msra.mxu0 %v6064
    %6142 = vmatpush.bf16.msra.mxu0 %v6063
    %6143 = vmatpush.bf16.msra.mxu0 %v6062
    %6144 = vmatpush.bf16.msra.mxu0 %v6061
    %6145 = vmatpush.bf16.msra.mxu0 %v6060
    %6146 = vmatpush.bf16.msra.mxu0 %v6059
    %6147 = vmatpush.bf16.msra.mxu0 %v6058
    %6148 = vmatmul.bf16.gmra.mxu0 %v5837
    %v6149 = vpop.f32.mrf.mxu0
    %v6150 = vadd.f32 %v6136, %v6149
    %v6151 = vpop.f32.mrf.mxu0
    %v6152 = vadd.f32 %v6138, %v6151
    %6153 = vdwg.mxu0
    %vm6154 = vcmp.gt.f32.partialorder %v6150, 20.0
    %vm6155 = vcmp.gt.f32.partialorder %v6152, 20.0
    %v6156 = vmin.f32 %v6150, 20.0
    %v6157 = vmin.f32 %v6152, 20.0
    %v6158 = vmul.f32 %v6156, 1.442695
    %v6159 = vpow.pop %v6158
    %v6160 = vmul.f32 %v6157, 1.442695
    %v6161 = vpow.pop %v6160
    %v6162 = vadd.f32 %v6159, 1.0
    %v6163 = vlog2.pop %v6162
    %v6164 = vmul.f32 %v6163, 0.6931472
    %v6165 = vmul.f32 -0.5, %v6159
    %v6166 = vadd.f32 %v6165, 1.0
    %v6167 = vmul.f32 %v6166, %v6159
    %v6168 = vand.u32 2147483647, %v6159
    %vm6169 = vcmp.lt.f32.partialorder %v6168, 0.0004427343
    %v6170 = vsel %vm6169, %v6167, %v6164
    %v6171 = vadd.f32 %v6161, 1.0
    %v6172 = vlog2.pop %v6171
    %v6173 = vmul.f32 %v6172, 0.6931472
    %v6174 = vmul.f32 -0.5, %v6161
    %v6175 = vadd.f32 %v6174, 1.0
    %v6176 = vmul.f32 %v6175, %v6161
    %v6177 = vand.u32 2147483647, %v6161
    %vm6178 = vcmp.lt.f32.partialorder %v6177, 0.0004427343
    %v6179 = vsel %vm6178, %v6176, %v6173
    %v6180 = vsel %vm6154, %v6150, %v6170
    %v6181 = vsel %vm6155, %v6152, %v6179
    %6182 = vmax.xlane.f32.xlu0 %v6180
    %v6183 = vpop.xlane.xlu0 %6182
    %6184 = vmax.xlane.f32.xlu0 %v6181
    %v6185 = vpop.xlane.xlu0 %6184
    %v6186 = vrcp.pop %v6183
    %v6187 = vrcp.pop %v6185
    %v6188 = vmul.f32 %v6180, %v6186
    %v6189 = vmul.f32 %v6181, %v6187
    %v6190 = vld [vmem:[#allocation5] sm:$0xff]
    %v6191 = vld [vmem:[#allocation5 + $0x8] sm:$0xff]
    %v6192 = vmul.f32 %v6188, %v6190
    %v6193 = vmul.f32 %v6189, %v6191
    %6194 = vst [vmem:[#allocation22] sm:$0xff] %v6192
    %6195 = vst [vmem:[#allocation22 + $0x8] sm:$0xff] %v6193
    // Predicated region
    $region98: #{tpu_custom_call.1} parent=1 // pred_check
      _
    $region99: #{tpu_custom_call.1} parent=1 // pred_check_branch
      %6197 = sbr.rel (0) target = $region101
    $region100: #{tpu_custom_call.1} parent=1 // pred_region
      %6199 = vsyncadd [#allocation4], 224
      %s6200 = sshll.u32 [#allocation22], 4
      %s6201 = int_to_ptr.vmem [resolvable:$true] %s6200
      %s6202 = sshll.u32 %s12, 4
      %s6203 = int_to_ptr.hbm [resolvable:$true] %s6202
      %6208 = dma.vmem_to_hbm [thread:$0]  %s6201, 32, %s6203, [#allocation4], 32, 32, 2
    $region101: #{tpu_custom_call.1} parent=1 // pred_fallthru
      _
    // Predicated region
    $region102: #{tpu_custom_call.1} parent=1 // pred_check
      _
    $region103: #{tpu_custom_call.1} parent=1 // pred_check_branch
      %6210 = sbr.rel (0) target = $region105
    $region104: #{tpu_custom_call.1} parent=1 // pred_region
      %6212 = dma.done [#allocation4], 256
    $region105: #{tpu_custom_call.1} parent=1 // pred_fallthru
      _
    %6213 = vsyncpa [#allocation3], 1
    %6214 = vsyncpa [#allocation6], 1
    %6215 = vsyncpa [#allocation9], 1
    %6216 = vsyncpa [#allocation12], 1
    %6217 = vsyncpa [#allocation15], 1
    %6218 = vsyncpa [#allocation18], 1
    %6219 = vsyncpa [#allocation21], 1
    %6220 = vsyncpa [#allocation4], 1

</llo_original>
